<compile_context>
chip_gen: v7x
topology: tpu7x:2x2x1
jax: 0.10.0
libtpu: 0.0.40
codegen_flags: <defaults>
</compile_context>

<pallas_src>
import jax
import jax.numpy as jnp
from jax import lax
from jax.experimental import pallas as pl
from jax.experimental.pallas import tpu as pltpu


def lstm_kernel(pre0_ref,   # (T, B, 4H) f32 : x@Wih0 + b0 for every timestep
                whh0_ref,   # (H, 4H)  bf16
                w1_ref,     # (2H, 4H) bf16 : [Wih1; Whh1] stacked along K
                b1_ref,     # (1, 4H)  f32
                fcw_ref,    # (H, Cp)  bf16 (lane-padded classes)
                fcb_ref,    # (1, Cp)  f32
                out_ref):   # (B, Cp)  f32
    T, B, G = pre0_ref.shape
    H = whh0_ref.shape[0]

    whh0 = whh0_ref[...]
    w1 = w1_ref[...]
    # Hoist bias broadcast out of the recurrent loop (JAX does not CSE it).
    b1 = jnp.broadcast_to(b1_ref[...], (B, G))

    def gates_to_hc(gates, c):
        # Gate columns are pre-permuted to [i, f, o, g]: one wide contiguous
        # sigmoid over (B, 3H), tanh on the trailing (B, H) slice.
        sig = jax.nn.sigmoid(gates[:, :3 * H])
        g = jnp.tanh(gates[:, 3 * H:])
        i_g = sig[:, 0 * H:1 * H]
        f_g = sig[:, 1 * H:2 * H]
        o_g = sig[:, 2 * H:3 * H]
        c_new = f_g * c + i_g * g
        h_new = o_g * jnp.tanh(c_new)
        return h_new, c_new

    def cell0(t, h, c):
        gates = pre0_ref[t] + jnp.dot(h.astype(jnp.bfloat16), whh0,
                                      preferred_element_type=jnp.float32)
        return gates_to_hc(gates, c)

    def cell1(h_in, h, c):
        hcat = jnp.concatenate([h_in, h], axis=-1).astype(jnp.bfloat16)
        gates = jnp.dot(hcat, w1, preferred_element_type=jnp.float32) + b1
        return gates_to_hc(gates, c)

    z = jnp.zeros((B, H), jnp.float32)

    # Skewed (wavefront) recurrence: iteration t computes layer 0 for input t
    # and layer 1 for the layer-0 output of t-1 -> the two matmuls in one
    # iteration are independent and can overlap in the MXU pipeline.
    h0, c0 = cell0(0, z, z)                       # prologue: layer 0 @ t=0

    def step(t, carry):
        h0, c0, h1, c1 = carry
        nh0, nc0 = cell0(t, h0, c0)               # layer 0 @ t
        nh1, nc1 = cell1(h0, h1, c1)              # layer 1 @ t-1 (previous h0)
        return (nh0, nc0, nh1, nc1)

    h0, c0, h1, c1 = lax.fori_loop(1, T, step, (h0, c0, z, z), unroll=True)
    h1, c1 = cell1(h0, h1, c1)                    # epilogue: layer 1 @ t=T-1

    # dropout(eval) == identity, then lane-dense fc
    out_ref[...] = (jnp.dot(h1.astype(jnp.bfloat16), fcw_ref[...],
                            preferred_element_type=jnp.float32)
                    + fcb_ref[...])


def init_params(key, input_size, hidden_size, num_classes):
    """Deterministic init matching nn.LSTM / nn.Linear shapes.

    Weights are stored pre-transposed: W_ih.T -> (I, 4H), W_hh.T -> (H, 4H),
    fc.weight.T -> (H, C).  Biases b_ih + b_hh fused into a single (1, 4H).
    Gate column order here is PyTorch's [i, f, g, o].
    """
    H, I, C = hidden_size, input_size, num_classes
    k = 1.0 / jnp.sqrt(jnp.float32(H))
    keys = jax.random.split(key, 11)
    u = lambda kk, shape: jax.random.uniform(kk, shape, jnp.float32, -k, k)
    return {
        "wih0": u(keys[0], (I, 4 * H)),
        "whh0": u(keys[1], (H, 4 * H)),
        "b0":   u(keys[2], (1, 4 * H)) + u(keys[3], (1, 4 * H)),
        "wih1": u(keys[4], (H, 4 * H)),
        "whh1": u(keys[5], (H, 4 * H)),
        "b1":   u(keys[6], (1, 4 * H)) + u(keys[7], (1, 4 * H)),
        "fcw":  u(keys[8], (H, C)),
        "fcb":  u(keys[9], (1, C)),
    }


def prepare_params(params, lane=128):
    """Kernel-side parameter prep: permute gate columns [i,f,g,o] -> [i,f,o,g],
    fuse layer-1 weights along K, cast matmul weights to bf16, lane-pad fc."""
    H = params["whh0"].shape[0]
    C = params["fcw"].shape[1]
    perm = jnp.concatenate([
        jnp.arange(0 * H, 2 * H),   # i, f
        jnp.arange(3 * H, 4 * H),   # o
        jnp.arange(2 * H, 3 * H),   # g
    ])
    p = lambda w: w[..., perm]

    Cp = max(lane, ((C + lane - 1) // lane) * lane)
    fcw_pad = jnp.zeros((H, Cp), jnp.float32).at[:, :C].set(params["fcw"])
    fcb_pad = jnp.zeros((1, Cp), jnp.float32).at[:, :C].set(params["fcb"])

    return {
        "wih0": p(params["wih0"]),                                    # (I, 4H) f32
        "b0":   p(params["b0"]),                                      # (1, 4H) f32
        "whh0": p(params["whh0"]).astype(jnp.bfloat16),               # (H, 4H) bf16
        "w1":   jnp.concatenate([p(params["wih1"]), p(params["whh1"])],
                                axis=0).astype(jnp.bfloat16),         # (2H, 4H) bf16
        "b1":   p(params["b1"]),                                      # (1, 4H) f32
        "fcw":  fcw_pad.astype(jnp.bfloat16),                         # (H, Cp) bf16
        "fcb":  fcb_pad,                                              # (1, Cp) f32
        "C":    int(C),
    }


def lstm_forward(x, prep):
    """x: (B, T, I) float32.  Returns logits (B, num_classes)."""
    B, T, I = x.shape
    H = prep["whh0"].shape[0]
    Cp = prep["fcw"].shape[1]

    # Precompute the layer-0 input contribution for all timesteps (the K=I
    # projection is trivial, so this is cheap XLA work outside the kernel).
    pre0 = jnp.einsum("bti,ig->btg", x, prep["wih0"]) + prep["b0"]   # (B, T, 4H)
    pre0 = jnp.transpose(pre0, (1, 0, 2))                            # (T, B, 4H)

    args = (pre0, prep["whh0"], prep["w1"], prep["b1"],
            prep["fcw"], prep["fcb"])
    full = lambda a: pl.BlockSpec(a.shape, lambda i, _n=a.ndim: (0,) * _n)

    out = pl.pallas_call(
        lstm_kernel,
        out_shape=jax.ShapeDtypeStruct((B, Cp), jnp.float32),
        grid=(1,),
        in_specs=[full(a) for a in args],
        out_specs=pl.BlockSpec((B, Cp), lambda i: (0, 0)),
        compiler_params=pltpu.CompilerParams(
            dimension_semantics=("arbitrary",)),
    )(*args)
    return out[:, :prep["C"]]


def lstm_reference(x, params):
    """Pure-JAX f32 reference (original PyTorch gate order) for validation."""
    B, T, I = x.shape
    H = params["whh0"].shape[0]

    def cell(x_t, h, c, wih, whh, b):
        g = x_t @ wih + h @ whh + b
        i = jax.nn.sigmoid(g[:, :H])
        f = jax.nn.sigmoid(g[:, H:2 * H])
        gg = jnp.tanh(g[:, 2 * H:3 * H])
        o = jax.nn.sigmoid(g[:, 3 * H:])
        c = f * c + i * gg
        return o * jnp.tanh(c), c

    h0 = c0 = h1 = c1 = jnp.zeros((B, H), jnp.float32)
    for t in range(T):
        h0, c0 = cell(x[:, t, :], h0, c0,
                      params["wih0"], params["whh0"], params["b0"])
        h1, c1 = cell(h0, h1, c1,
                      params["wih1"], params["whh1"], params["b1"])
    return h1 @ params["fcw"] + params["fcb"]


if __name__ == "__main__":
    # Module constants: input_size=1, hidden_size=128, num_layers=2.
    # num_classes in the original script is len(token_map)==0 (degenerate);
    # we use a small synthetic vocabulary of 32 classes.
    B, T, I, H, C = 8, 8, 1, 128, 32

    key = jax.random.PRNGKey(0)
    kx, kp = jax.random.split(key)
    x = jax.random.normal(kx, (B, T, I), jnp.float32)
    params = init_params(kp, I, H, C)
    prep = prepare_params(params)

    out = lstm_forward(x, prep)
    out = jax.block_until_ready(out)

    ref = lstm_reference(x, params)
    assert out.shape == (B, C)
    # bf16 matmul operands (f32 accumulation) -> loosened tolerance vs f32 ref.
    assert jnp.allclose(out, ref, atol=5e-2, rtol=5e-2), "mismatch vs reference"

    print("KERNEL_OK")
</pallas_src>

<mosaic_0001>
module attributes {stable_mosaic.version = 11 : i64} {
  func.func @lstm_kernel(%arg0: i32, %arg1: memref<8x8x512xf32, #tpu.memory_space<vmem>>, %arg2: memref<128x512xbf16, #tpu.memory_space<vmem>>, %arg3: memref<256x512xbf16, #tpu.memory_space<vmem>>, %arg4: memref<1x512xf32, #tpu.memory_space<vmem>>, %arg5: memref<128x128xbf16, #tpu.memory_space<vmem>>, %arg6: memref<1x128xf32, #tpu.memory_space<vmem>>, %arg7: memref<8x128xf32, #tpu.memory_space<vmem>>) attributes {dimension_semantics = [#tpu.dimension_semantics<arbitrary>], iteration_bounds = array<i64: 1>, scalar_prefetch = 0 : i64, scratch_operands = 0 : i64, tpu.core_type = #tpu.core_type<tc>, window_params = [{pipeline_mode = #tpu.pipeline_mode<synchronous>, transform_indices = @transform_0, window_bounds = array<i64: 8, 8, 512>}, {pipeline_mode = #tpu.pipeline_mode<synchronous>, transform_indices = @transform_1, window_bounds = array<i64: 128, 512>}, {pipeline_mode = #tpu.pipeline_mode<synchronous>, transform_indices = @transform_2, window_bounds = array<i64: 256, 512>}, {pipeline_mode = #tpu.pipeline_mode<synchronous>, transform_indices = @transform_3, window_bounds = array<i64: 1, 512>}, {pipeline_mode = #tpu.pipeline_mode<synchronous>, transform_indices = @transform_4, window_bounds = array<i64: 128, 128>}, {pipeline_mode = #tpu.pipeline_mode<synchronous>, transform_indices = @transform_5, window_bounds = array<i64: 1, 128>}, {pipeline_mode = #tpu.pipeline_mode<synchronous>, transform_indices = @transform_6, window_bounds = array<i64: 8, 128>}]} {
    %c0 = arith.constant 0 : index
    %c0_0 = arith.constant 0 : index
    %0 = vector.load %arg2[%c0, %c0_0] : memref<128x512xbf16, #tpu.memory_space<vmem>>, vector<128x512xbf16>
    %c0_1 = arith.constant 0 : index
    %c0_2 = arith.constant 0 : index
    %1 = vector.load %arg3[%c0_1, %c0_2] : memref<256x512xbf16, #tpu.memory_space<vmem>>, vector<256x512xbf16>
    %c0_3 = arith.constant 0 : index
    %c0_4 = arith.constant 0 : index
    %2 = vector.load %arg4[%c0_3, %c0_4] : memref<1x512xf32, #tpu.memory_space<vmem>>, vector<1x512xf32>
    %3 = vector.shape_cast %2 : vector<1x512xf32> to vector<1x512xf32>
    %4 = vector.broadcast %3 : vector<1x512xf32> to vector<8x512xf32>
    %cst = arith.constant 0.000000e+00 : f32
    %5 = vector.broadcast %cst : f32 to vector<8x128xf32>
    %c0_5 = arith.constant 0 : index
    %c0_6 = arith.constant 0 : index
    %c0_7 = arith.constant 0 : index
    %6 = vector.load %arg1[%c0_5, %c0_6, %c0_7] : memref<8x8x512xf32, #tpu.memory_space<vmem>>, vector<1x8x512xf32>
    %7 = vector.shape_cast %6 : vector<1x8x512xf32> to vector<8x512xf32>
    %8 = arith.truncf %5 : vector<8x128xf32> to vector<8x128xbf16>
    %cst_8 = arith.constant dense<0.000000e+00> : vector<8x512xf32>
    %9 = tpu.matmul %8, %0, %cst_8 {dimension_numbers = #tpu.dot_dimension_numbers<[1], [0], [0], [1], [0, 0, 1, 1], [], []>} : vector<8x128xbf16>, vector<128x512xbf16>, vector<8x512xf32> -> vector<8x512xf32>
    %10 = arith.addf %7, %9 : vector<8x512xf32>
    %11 = vector.extract_strided_slice %10 {offsets = [0, 0], sizes = [8, 384], strides = [1, 1]} : vector<8x512xf32> to vector<8x384xf32>
    %12 = arith.negf %11 : vector<8x384xf32>
    %13 = math.exp %12 : vector<8x384xf32>
    %cst_9 = arith.constant 1.000000e+00 : f32
    %14 = vector.broadcast %cst_9 : f32 to vector<8x384xf32>
    %15 = arith.addf %14, %13 : vector<8x384xf32>
    %16 = arith.divf %14, %15 : vector<8x384xf32>
    %17 = vector.extract_strided_slice %10 {offsets = [0, 384], sizes = [8, 128], strides = [1, 1]} : vector<8x512xf32> to vector<8x128xf32>
    %18 = math.tanh %17 : vector<8x128xf32>
    %19 = vector.extract_strided_slice %16 {offsets = [0, 0], sizes = [8, 128], strides = [1, 1]} : vector<8x384xf32> to vector<8x128xf32>
    %20 = vector.extract_strided_slice %16 {offsets = [0, 128], sizes = [8, 128], strides = [1, 1]} : vector<8x384xf32> to vector<8x128xf32>
    %21 = vector.extract_strided_slice %16 {offsets = [0, 256], sizes = [8, 128], strides = [1, 1]} : vector<8x384xf32> to vector<8x128xf32>
    %22 = arith.mulf %20, %5 : vector<8x128xf32>
    %23 = arith.mulf %19, %18 : vector<8x128xf32>
    %24 = arith.addf %22, %23 : vector<8x128xf32>
    %25 = math.tanh %24 : vector<8x128xf32>
    %26 = arith.mulf %21, %25 : vector<8x128xf32>
    %c1_i32 = arith.constant 1 : i32
    %27 = arith.index_cast %c1_i32 : i32 to index
    %c0_10 = arith.constant 0 : index
    %c0_11 = arith.constant 0 : index
    %28 = vector.load %arg1[%27, %c0_10, %c0_11] : memref<8x8x512xf32, #tpu.memory_space<vmem>>, vector<1x8x512xf32>
    %29 = vector.shape_cast %28 : vector<1x8x512xf32> to vector<8x512xf32>
    %30 = arith.truncf %26 : vector<8x128xf32> to vector<8x128xbf16>
    %cst_12 = arith.constant dense<0.000000e+00> : vector<8x512xf32>
    %31 = tpu.matmul %30, %0, %cst_12 {dimension_numbers = #tpu.dot_dimension_numbers<[1], [0], [0], [1], [0, 0, 1, 1], [], []>} : vector<8x128xbf16>, vector<128x512xbf16>, vector<8x512xf32> -> vector<8x512xf32>
    %32 = arith.addf %29, %31 : vector<8x512xf32>
    %33 = vector.extract_strided_slice %32 {offsets = [0, 0], sizes = [8, 384], strides = [1, 1]} : vector<8x512xf32> to vector<8x384xf32>
    %34 = arith.negf %33 : vector<8x384xf32>
    %35 = math.exp %34 : vector<8x384xf32>
    %cst_13 = arith.constant 1.000000e+00 : f32
    %36 = vector.broadcast %cst_13 : f32 to vector<8x384xf32>
    %37 = arith.addf %36, %35 : vector<8x384xf32>
    %38 = arith.divf %36, %37 : vector<8x384xf32>
    %39 = vector.extract_strided_slice %32 {offsets = [0, 384], sizes = [8, 128], strides = [1, 1]} : vector<8x512xf32> to vector<8x128xf32>
    %40 = math.tanh %39 : vector<8x128xf32>
    %41 = vector.extract_strided_slice %38 {offsets = [0, 0], sizes = [8, 128], strides = [1, 1]} : vector<8x384xf32> to vector<8x128xf32>
    %42 = vector.extract_strided_slice %38 {offsets = [0, 128], sizes = [8, 128], strides = [1, 1]} : vector<8x384xf32> to vector<8x128xf32>
    %43 = vector.extract_strided_slice %38 {offsets = [0, 256], sizes = [8, 128], strides = [1, 1]} : vector<8x384xf32> to vector<8x128xf32>
    %44 = arith.mulf %42, %24 : vector<8x128xf32>
    %45 = arith.mulf %41, %40 : vector<8x128xf32>
    %46 = arith.addf %44, %45 : vector<8x128xf32>
    %47 = math.tanh %46 : vector<8x128xf32>
    %48 = arith.mulf %43, %47 : vector<8x128xf32>
    %49 = tpu.concatenate %26, %5 in 1 : vector<8x128xf32>, vector<8x128xf32> -> vector<8x256xf32>
    %50 = arith.truncf %49 : vector<8x256xf32> to vector<8x256xbf16>
    %cst_14 = arith.constant dense<0.000000e+00> : vector<8x512xf32>
    %51 = tpu.matmul %50, %1, %cst_14 {dimension_numbers = #tpu.dot_dimension_numbers<[1], [0], [0], [1], [0, 0, 1, 1], [], []>} : vector<8x256xbf16>, vector<256x512xbf16>, vector<8x512xf32> -> vector<8x512xf32>
    %52 = arith.addf %51, %4 : vector<8x512xf32>
    %53 = vector.extract_strided_slice %52 {offsets = [0, 0], sizes = [8, 384], strides = [1, 1]} : vector<8x512xf32> to vector<8x384xf32>
    %54 = arith.negf %53 : vector<8x384xf32>
    %55 = math.exp %54 : vector<8x384xf32>
    %cst_15 = arith.constant 1.000000e+00 : f32
    %56 = vector.broadcast %cst_15 : f32 to vector<8x384xf32>
    %57 = arith.addf %56, %55 : vector<8x384xf32>
    %58 = arith.divf %56, %57 : vector<8x384xf32>
    %59 = vector.extract_strided_slice %52 {offsets = [0, 384], sizes = [8, 128], strides = [1, 1]} : vector<8x512xf32> to vector<8x128xf32>
    %60 = math.tanh %59 : vector<8x128xf32>
    %61 = vector.extract_strided_slice %58 {offsets = [0, 0], sizes = [8, 128], strides = [1, 1]} : vector<8x384xf32> to vector<8x128xf32>
    %62 = vector.extract_strided_slice %58 {offsets = [0, 128], sizes = [8, 128], strides = [1, 1]} : vector<8x384xf32> to vector<8x128xf32>
    %63 = vector.extract_strided_slice %58 {offsets = [0, 256], sizes = [8, 128], strides = [1, 1]} : vector<8x384xf32> to vector<8x128xf32>
    %64 = arith.mulf %62, %5 : vector<8x128xf32>
    %65 = arith.mulf %61, %60 : vector<8x128xf32>
    %66 = arith.addf %64, %65 : vector<8x128xf32>
    %67 = math.tanh %66 : vector<8x128xf32>
    %68 = arith.mulf %63, %67 : vector<8x128xf32>
    %c2_i32 = arith.constant 2 : i32
    %69 = arith.index_cast %c2_i32 : i32 to index
    %c0_16 = arith.constant 0 : index
    %c0_17 = arith.constant 0 : index
    %70 = vector.load %arg1[%69, %c0_16, %c0_17] : memref<8x8x512xf32, #tpu.memory_space<vmem>>, vector<1x8x512xf32>
    %71 = vector.shape_cast %70 : vector<1x8x512xf32> to vector<8x512xf32>
    %72 = arith.truncf %48 : vector<8x128xf32> to vector<8x128xbf16>
    %cst_18 = arith.constant dense<0.000000e+00> : vector<8x512xf32>
    %73 = tpu.matmul %72, %0, %cst_18 {dimension_numbers = #tpu.dot_dimension_numbers<[1], [0], [0], [1], [0, 0, 1, 1], [], []>} : vector<8x128xbf16>, vector<128x512xbf16>, vector<8x512xf32> -> vector<8x512xf32>
    %74 = arith.addf %71, %73 : vector<8x512xf32>
    %75 = vector.extract_strided_slice %74 {offsets = [0, 0], sizes = [8, 384], strides = [1, 1]} : vector<8x512xf32> to vector<8x384xf32>
    %76 = arith.negf %75 : vector<8x384xf32>
    %77 = math.exp %76 : vector<8x384xf32>
    %cst_19 = arith.constant 1.000000e+00 : f32
    %78 = vector.broadcast %cst_19 : f32 to vector<8x384xf32>
    %79 = arith.addf %78, %77 : vector<8x384xf32>
    %80 = arith.divf %78, %79 : vector<8x384xf32>
    %81 = vector.extract_strided_slice %74 {offsets = [0, 384], sizes = [8, 128], strides = [1, 1]} : vector<8x512xf32> to vector<8x128xf32>
    %82 = math.tanh %81 : vector<8x128xf32>
    %83 = vector.extract_strided_slice %80 {offsets = [0, 0], sizes = [8, 128], strides = [1, 1]} : vector<8x384xf32> to vector<8x128xf32>
    %84 = vector.extract_strided_slice %80 {offsets = [0, 128], sizes = [8, 128], strides = [1, 1]} : vector<8x384xf32> to vector<8x128xf32>
    %85 = vector.extract_strided_slice %80 {offsets = [0, 256], sizes = [8, 128], strides = [1, 1]} : vector<8x384xf32> to vector<8x128xf32>
    %86 = arith.mulf %84, %46 : vector<8x128xf32>
    %87 = arith.mulf %83, %82 : vector<8x128xf32>
    %88 = arith.addf %86, %87 : vector<8x128xf32>
    %89 = math.tanh %88 : vector<8x128xf32>
    %90 = arith.mulf %85, %89 : vector<8x128xf32>
    %91 = tpu.concatenate %48, %68 in 1 : vector<8x128xf32>, vector<8x128xf32> -> vector<8x256xf32>
    %92 = arith.truncf %91 : vector<8x256xf32> to vector<8x256xbf16>
    %cst_20 = arith.constant dense<0.000000e+00> : vector<8x512xf32>
    %93 = tpu.matmul %92, %1, %cst_20 {dimension_numbers = #tpu.dot_dimension_numbers<[1], [0], [0], [1], [0, 0, 1, 1], [], []>} : vector<8x256xbf16>, vector<256x512xbf16>, vector<8x512xf32> -> vector<8x512xf32>
    %94 = arith.addf %93, %4 : vector<8x512xf32>
    %95 = vector.extract_strided_slice %94 {offsets = [0, 0], sizes = [8, 384], strides = [1, 1]} : vector<8x512xf32> to vector<8x384xf32>
    %96 = arith.negf %95 : vector<8x384xf32>
    %97 = math.exp %96 : vector<8x384xf32>
    %cst_21 = arith.constant 1.000000e+00 : f32
    %98 = vector.broadcast %cst_21 : f32 to vector<8x384xf32>
    %99 = arith.addf %98, %97 : vector<8x384xf32>
    %100 = arith.divf %98, %99 : vector<8x384xf32>
    %101 = vector.extract_strided_slice %94 {offsets = [0, 384], sizes = [8, 128], strides = [1, 1]} : vector<8x512xf32> to vector<8x128xf32>
    %102 = math.tanh %101 : vector<8x128xf32>
    %103 = vector.extract_strided_slice %100 {offsets = [0, 0], sizes = [8, 128], strides = [1, 1]} : vector<8x384xf32> to vector<8x128xf32>
    %104 = vector.extract_strided_slice %100 {offsets = [0, 128], sizes = [8, 128], strides = [1, 1]} : vector<8x384xf32> to vector<8x128xf32>
    %105 = vector.extract_strided_slice %100 {offsets = [0, 256], sizes = [8, 128], strides = [1, 1]} : vector<8x384xf32> to vector<8x128xf32>
    %106 = arith.mulf %104, %66 : vector<8x128xf32>
    %107 = arith.mulf %103, %102 : vector<8x128xf32>
    %108 = arith.addf %106, %107 : vector<8x128xf32>
    %109 = math.tanh %108 : vector<8x128xf32>
    %110 = arith.mulf %105, %109 : vector<8x128xf32>
    %c3_i32 = arith.constant 3 : i32
    %111 = arith.index_cast %c3_i32 : i32 to index
    %c0_22 = arith.constant 0 : index
    %c0_23 = arith.constant 0 : index
    %112 = vector.load %arg1[%111, %c0_22, %c0_23] : memref<8x8x512xf32, #tpu.memory_space<vmem>>, vector<1x8x512xf32>
    %113 = vector.shape_cast %112 : vector<1x8x512xf32> to vector<8x512xf32>
    %114 = arith.truncf %90 : vector<8x128xf32> to vector<8x128xbf16>
    %cst_24 = arith.constant dense<0.000000e+00> : vector<8x512xf32>
    %115 = tpu.matmul %114, %0, %cst_24 {dimension_numbers = #tpu.dot_dimension_numbers<[1], [0], [0], [1], [0, 0, 1, 1], [], []>} : vector<8x128xbf16>, vector<128x512xbf16>, vector<8x512xf32> -> vector<8x512xf32>
    %116 = arith.addf %113, %115 : vector<8x512xf32>
    %117 = vector.extract_strided_slice %116 {offsets = [0, 0], sizes = [8, 384], strides = [1, 1]} : vector<8x512xf32> to vector<8x384xf32>
    %118 = arith.negf %117 : vector<8x384xf32>
    %119 = math.exp %118 : vector<8x384xf32>
    %cst_25 = arith.constant 1.000000e+00 : f32
    %120 = vector.broadcast %cst_25 : f32 to vector<8x384xf32>
    %121 = arith.addf %120, %119 : vector<8x384xf32>
    %122 = arith.divf %120, %121 : vector<8x384xf32>
    %123 = vector.extract_strided_slice %116 {offsets = [0, 384], sizes = [8, 128], strides = [1, 1]} : vector<8x512xf32> to vector<8x128xf32>
    %124 = math.tanh %123 : vector<8x128xf32>
    %125 = vector.extract_strided_slice %122 {offsets = [0, 0], sizes = [8, 128], strides = [1, 1]} : vector<8x384xf32> to vector<8x128xf32>
    %126 = vector.extract_strided_slice %122 {offsets = [0, 128], sizes = [8, 128], strides = [1, 1]} : vector<8x384xf32> to vector<8x128xf32>
    %127 = vector.extract_strided_slice %122 {offsets = [0, 256], sizes = [8, 128], strides = [1, 1]} : vector<8x384xf32> to vector<8x128xf32>
    %128 = arith.mulf %126, %88 : vector<8x128xf32>
    %129 = arith.mulf %125, %124 : vector<8x128xf32>
    %130 = arith.addf %128, %129 : vector<8x128xf32>
    %131 = math.tanh %130 : vector<8x128xf32>
    %132 = arith.mulf %127, %131 : vector<8x128xf32>
    %133 = tpu.concatenate %90, %110 in 1 : vector<8x128xf32>, vector<8x128xf32> -> vector<8x256xf32>
    %134 = arith.truncf %133 : vector<8x256xf32> to vector<8x256xbf16>
    %cst_26 = arith.constant dense<0.000000e+00> : vector<8x512xf32>
    %135 = tpu.matmul %134, %1, %cst_26 {dimension_numbers = #tpu.dot_dimension_numbers<[1], [0], [0], [1], [0, 0, 1, 1], [], []>} : vector<8x256xbf16>, vector<256x512xbf16>, vector<8x512xf32> -> vector<8x512xf32>
    %136 = arith.addf %135, %4 : vector<8x512xf32>
    %137 = vector.extract_strided_slice %136 {offsets = [0, 0], sizes = [8, 384], strides = [1, 1]} : vector<8x512xf32> to vector<8x384xf32>
    %138 = arith.negf %137 : vector<8x384xf32>
    %139 = math.exp %138 : vector<8x384xf32>
    %cst_27 = arith.constant 1.000000e+00 : f32
    %140 = vector.broadcast %cst_27 : f32 to vector<8x384xf32>
    %141 = arith.addf %140, %139 : vector<8x384xf32>
    %142 = arith.divf %140, %141 : vector<8x384xf32>
    %143 = vector.extract_strided_slice %136 {offsets = [0, 384], sizes = [8, 128], strides = [1, 1]} : vector<8x512xf32> to vector<8x128xf32>
    %144 = math.tanh %143 : vector<8x128xf32>
    %145 = vector.extract_strided_slice %142 {offsets = [0, 0], sizes = [8, 128], strides = [1, 1]} : vector<8x384xf32> to vector<8x128xf32>
    %146 = vector.extract_strided_slice %142 {offsets = [0, 128], sizes = [8, 128], strides = [1, 1]} : vector<8x384xf32> to vector<8x128xf32>
    %147 = vector.extract_strided_slice %142 {offsets = [0, 256], sizes = [8, 128], strides = [1, 1]} : vector<8x384xf32> to vector<8x128xf32>
    %148 = arith.mulf %146, %108 : vector<8x128xf32>
    %149 = arith.mulf %145, %144 : vector<8x128xf32>
    %150 = arith.addf %148, %149 : vector<8x128xf32>
    %151 = math.tanh %150 : vector<8x128xf32>
    %152 = arith.mulf %147, %151 : vector<8x128xf32>
    %c4_i32 = arith.constant 4 : i32
    %153 = arith.index_cast %c4_i32 : i32 to index
    %c0_28 = arith.constant 0 : index
    %c0_29 = arith.constant 0 : index
    %154 = vector.load %arg1[%153, %c0_28, %c0_29] : memref<8x8x512xf32, #tpu.memory_space<vmem>>, vector<1x8x512xf32>
    %155 = vector.shape_cast %154 : vector<1x8x512xf32> to vector<8x512xf32>
    %156 = arith.truncf %132 : vector<8x128xf32> to vector<8x128xbf16>
    %cst_30 = arith.constant dense<0.000000e+00> : vector<8x512xf32>
    %157 = tpu.matmul %156, %0, %cst_30 {dimension_numbers = #tpu.dot_dimension_numbers<[1], [0], [0], [1], [0, 0, 1, 1], [], []>} : vector<8x128xbf16>, vector<128x512xbf16>, vector<8x512xf32> -> vector<8x512xf32>
    %158 = arith.addf %155, %157 : vector<8x512xf32>
    %159 = vector.extract_strided_slice %158 {offsets = [0, 0], sizes = [8, 384], strides = [1, 1]} : vector<8x512xf32> to vector<8x384xf32>
    %160 = arith.negf %159 : vector<8x384xf32>
    %161 = math.exp %160 : vector<8x384xf32>
    %cst_31 = arith.constant 1.000000e+00 : f32
    %162 = vector.broadcast %cst_31 : f32 to vector<8x384xf32>
    %163 = arith.addf %162, %161 : vector<8x384xf32>
    %164 = arith.divf %162, %163 : vector<8x384xf32>
    %165 = vector.extract_strided_slice %158 {offsets = [0, 384], sizes = [8, 128], strides = [1, 1]} : vector<8x512xf32> to vector<8x128xf32>
    %166 = math.tanh %165 : vector<8x128xf32>
    %167 = vector.extract_strided_slice %164 {offsets = [0, 0], sizes = [8, 128], strides = [1, 1]} : vector<8x384xf32> to vector<8x128xf32>
    %168 = vector.extract_strided_slice %164 {offsets = [0, 128], sizes = [8, 128], strides = [1, 1]} : vector<8x384xf32> to vector<8x128xf32>
    %169 = vector.extract_strided_slice %164 {offsets = [0, 256], sizes = [8, 128], strides = [1, 1]} : vector<8x384xf32> to vector<8x128xf32>
    %170 = arith.mulf %168, %130 : vector<8x128xf32>
    %171 = arith.mulf %167, %166 : vector<8x128xf32>
    %172 = arith.addf %170, %171 : vector<8x128xf32>
    %173 = math.tanh %172 : vector<8x128xf32>
    %174 = arith.mulf %169, %173 : vector<8x128xf32>
    %175 = tpu.concatenate %132, %152 in 1 : vector<8x128xf32>, vector<8x128xf32> -> vector<8x256xf32>
    %176 = arith.truncf %175 : vector<8x256xf32> to vector<8x256xbf16>
    %cst_32 = arith.constant dense<0.000000e+00> : vector<8x512xf32>
    %177 = tpu.matmul %176, %1, %cst_32 {dimension_numbers = #tpu.dot_dimension_numbers<[1], [0], [0], [1], [0, 0, 1, 1], [], []>} : vector<8x256xbf16>, vector<256x512xbf16>, vector<8x512xf32> -> vector<8x512xf32>
    %178 = arith.addf %177, %4 : vector<8x512xf32>
    %179 = vector.extract_strided_slice %178 {offsets = [0, 0], sizes = [8, 384], strides = [1, 1]} : vector<8x512xf32> to vector<8x384xf32>
    %180 = arith.negf %179 : vector<8x384xf32>
    %181 = math.exp %180 : vector<8x384xf32>
    %cst_33 = arith.constant 1.000000e+00 : f32
    %182 = vector.broadcast %cst_33 : f32 to vector<8x384xf32>
    %183 = arith.addf %182, %181 : vector<8x384xf32>
    %184 = arith.divf %182, %183 : vector<8x384xf32>
    %185 = vector.extract_strided_slice %178 {offsets = [0, 384], sizes = [8, 128], strides = [1, 1]} : vector<8x512xf32> to vector<8x128xf32>
    %186 = math.tanh %185 : vector<8x128xf32>
    %187 = vector.extract_strided_slice %184 {offsets = [0, 0], sizes = [8, 128], strides = [1, 1]} : vector<8x384xf32> to vector<8x128xf32>
    %188 = vector.extract_strided_slice %184 {offsets = [0, 128], sizes = [8, 128], strides = [1, 1]} : vector<8x384xf32> to vector<8x128xf32>
    %189 = vector.extract_strided_slice %184 {offsets = [0, 256], sizes = [8, 128], strides = [1, 1]} : vector<8x384xf32> to vector<8x128xf32>
    %190 = arith.mulf %188, %150 : vector<8x128xf32>
    %191 = arith.mulf %187, %186 : vector<8x128xf32>
    %192 = arith.addf %190, %191 : vector<8x128xf32>
    %193 = math.tanh %192 : vector<8x128xf32>
    %194 = arith.mulf %189, %193 : vector<8x128xf32>
    %c5_i32 = arith.constant 5 : i32
    %195 = arith.index_cast %c5_i32 : i32 to index
    %c0_34 = arith.constant 0 : index
    %c0_35 = arith.constant 0 : index
    %196 = vector.load %arg1[%195, %c0_34, %c0_35] : memref<8x8x512xf32, #tpu.memory_space<vmem>>, vector<1x8x512xf32>
    %197 = vector.shape_cast %196 : vector<1x8x512xf32> to vector<8x512xf32>
    %198 = arith.truncf %174 : vector<8x128xf32> to vector<8x128xbf16>
    %cst_36 = arith.constant dense<0.000000e+00> : vector<8x512xf32>
    %199 = tpu.matmul %198, %0, %cst_36 {dimension_numbers = #tpu.dot_dimension_numbers<[1], [0], [0], [1], [0, 0, 1, 1], [], []>} : vector<8x128xbf16>, vector<128x512xbf16>, vector<8x512xf32> -> vector<8x512xf32>
    %200 = arith.addf %197, %199 : vector<8x512xf32>
    %201 = vector.extract_strided_slice %200 {offsets = [0, 0], sizes = [8, 384], strides = [1, 1]} : vector<8x512xf32> to vector<8x384xf32>
    %202 = arith.negf %201 : vector<8x384xf32>
    %203 = math.exp %202 : vector<8x384xf32>
    %cst_37 = arith.constant 1.000000e+00 : f32
    %204 = vector.broadcast %cst_37 : f32 to vector<8x384xf32>
    %205 = arith.addf %204, %203 : vector<8x384xf32>
    %206 = arith.divf %204, %205 : vector<8x384xf32>
    %207 = vector.extract_strided_slice %200 {offsets = [0, 384], sizes = [8, 128], strides = [1, 1]} : vector<8x512xf32> to vector<8x128xf32>
    %208 = math.tanh %207 : vector<8x128xf32>
    %209 = vector.extract_strided_slice %206 {offsets = [0, 0], sizes = [8, 128], strides = [1, 1]} : vector<8x384xf32> to vector<8x128xf32>
    %210 = vector.extract_strided_slice %206 {offsets = [0, 128], sizes = [8, 128], strides = [1, 1]} : vector<8x384xf32> to vector<8x128xf32>
    %211 = vector.extract_strided_slice %206 {offsets = [0, 256], sizes = [8, 128], strides = [1, 1]} : vector<8x384xf32> to vector<8x128xf32>
    %212 = arith.mulf %210, %172 : vector<8x128xf32>
    %213 = arith.mulf %209, %208 : vector<8x128xf32>
    %214 = arith.addf %212, %213 : vector<8x128xf32>
    %215 = math.tanh %214 : vector<8x128xf32>
    %216 = arith.mulf %211, %215 : vector<8x128xf32>
    %217 = tpu.concatenate %174, %194 in 1 : vector<8x128xf32>, vector<8x128xf32> -> vector<8x256xf32>
    %218 = arith.truncf %217 : vector<8x256xf32> to vector<8x256xbf16>
    %cst_38 = arith.constant dense<0.000000e+00> : vector<8x512xf32>
    %219 = tpu.matmul %218, %1, %cst_38 {dimension_numbers = #tpu.dot_dimension_numbers<[1], [0], [0], [1], [0, 0, 1, 1], [], []>} : vector<8x256xbf16>, vector<256x512xbf16>, vector<8x512xf32> -> vector<8x512xf32>
    %220 = arith.addf %219, %4 : vector<8x512xf32>
    %221 = vector.extract_strided_slice %220 {offsets = [0, 0], sizes = [8, 384], strides = [1, 1]} : vector<8x512xf32> to vector<8x384xf32>
    %222 = arith.negf %221 : vector<8x384xf32>
    %223 = math.exp %222 : vector<8x384xf32>
    %cst_39 = arith.constant 1.000000e+00 : f32
    %224 = vector.broadcast %cst_39 : f32 to vector<8x384xf32>
    %225 = arith.addf %224, %223 : vector<8x384xf32>
    %226 = arith.divf %224, %225 : vector<8x384xf32>
    %227 = vector.extract_strided_slice %220 {offsets = [0, 384], sizes = [8, 128], strides = [1, 1]} : vector<8x512xf32> to vector<8x128xf32>
    %228 = math.tanh %227 : vector<8x128xf32>
    %229 = vector.extract_strided_slice %226 {offsets = [0, 0], sizes = [8, 128], strides = [1, 1]} : vector<8x384xf32> to vector<8x128xf32>
    %230 = vector.extract_strided_slice %226 {offsets = [0, 128], sizes = [8, 128], strides = [1, 1]} : vector<8x384xf32> to vector<8x128xf32>
    %231 = vector.extract_strided_slice %226 {offsets = [0, 256], sizes = [8, 128], strides = [1, 1]} : vector<8x384xf32> to vector<8x128xf32>
    %232 = arith.mulf %230, %192 : vector<8x128xf32>
    %233 = arith.mulf %229, %228 : vector<8x128xf32>
    %234 = arith.addf %232, %233 : vector<8x128xf32>
    %235 = math.tanh %234 : vector<8x128xf32>
    %236 = arith.mulf %231, %235 : vector<8x128xf32>
    %c6_i32 = arith.constant 6 : i32
    %237 = arith.index_cast %c6_i32 : i32 to index
    %c0_40 = arith.constant 0 : index
    %c0_41 = arith.constant 0 : index
    %238 = vector.load %arg1[%237, %c0_40, %c0_41] : memref<8x8x512xf32, #tpu.memory_space<vmem>>, vector<1x8x512xf32>
    %239 = vector.shape_cast %238 : vector<1x8x512xf32> to vector<8x512xf32>
    %240 = arith.truncf %216 : vector<8x128xf32> to vector<8x128xbf16>
    %cst_42 = arith.constant dense<0.000000e+00> : vector<8x512xf32>
    %241 = tpu.matmul %240, %0, %cst_42 {dimension_numbers = #tpu.dot_dimension_numbers<[1], [0], [0], [1], [0, 0, 1, 1], [], []>} : vector<8x128xbf16>, vector<128x512xbf16>, vector<8x512xf32> -> vector<8x512xf32>
    %242 = arith.addf %239, %241 : vector<8x512xf32>
    %243 = vector.extract_strided_slice %242 {offsets = [0, 0], sizes = [8, 384], strides = [1, 1]} : vector<8x512xf32> to vector<8x384xf32>
    %244 = arith.negf %243 : vector<8x384xf32>
    %245 = math.exp %244 : vector<8x384xf32>
    %cst_43 = arith.constant 1.000000e+00 : f32
    %246 = vector.broadcast %cst_43 : f32 to vector<8x384xf32>
    %247 = arith.addf %246, %245 : vector<8x384xf32>
    %248 = arith.divf %246, %247 : vector<8x384xf32>
    %249 = vector.extract_strided_slice %242 {offsets = [0, 384], sizes = [8, 128], strides = [1, 1]} : vector<8x512xf32> to vector<8x128xf32>
    %250 = math.tanh %249 : vector<8x128xf32>
    %251 = vector.extract_strided_slice %248 {offsets = [0, 0], sizes = [8, 128], strides = [1, 1]} : vector<8x384xf32> to vector<8x128xf32>
    %252 = vector.extract_strided_slice %248 {offsets = [0, 128], sizes = [8, 128], strides = [1, 1]} : vector<8x384xf32> to vector<8x128xf32>
    %253 = vector.extract_strided_slice %248 {offsets = [0, 256], sizes = [8, 128], strides = [1, 1]} : vector<8x384xf32> to vector<8x128xf32>
    %254 = arith.mulf %252, %214 : vector<8x128xf32>
    %255 = arith.mulf %251, %250 : vector<8x128xf32>
    %256 = arith.addf %254, %255 : vector<8x128xf32>
    %257 = math.tanh %256 : vector<8x128xf32>
    %258 = arith.mulf %253, %257 : vector<8x128xf32>
    %259 = tpu.concatenate %216, %236 in 1 : vector<8x128xf32>, vector<8x128xf32> -> vector<8x256xf32>
    %260 = arith.truncf %259 : vector<8x256xf32> to vector<8x256xbf16>
    %cst_44 = arith.constant dense<0.000000e+00> : vector<8x512xf32>
    %261 = tpu.matmul %260, %1, %cst_44 {dimension_numbers = #tpu.dot_dimension_numbers<[1], [0], [0], [1], [0, 0, 1, 1], [], []>} : vector<8x256xbf16>, vector<256x512xbf16>, vector<8x512xf32> -> vector<8x512xf32>
    %262 = arith.addf %261, %4 : vector<8x512xf32>
    %263 = vector.extract_strided_slice %262 {offsets = [0, 0], sizes = [8, 384], strides = [1, 1]} : vector<8x512xf32> to vector<8x384xf32>
    %264 = arith.negf %263 : vector<8x384xf32>
    %265 = math.exp %264 : vector<8x384xf32>
    %cst_45 = arith.constant 1.000000e+00 : f32
    %266 = vector.broadcast %cst_45 : f32 to vector<8x384xf32>
    %267 = arith.addf %266, %265 : vector<8x384xf32>
    %268 = arith.divf %266, %267 : vector<8x384xf32>
    %269 = vector.extract_strided_slice %262 {offsets = [0, 384], sizes = [8, 128], strides = [1, 1]} : vector<8x512xf32> to vector<8x128xf32>
    %270 = math.tanh %269 : vector<8x128xf32>
    %271 = vector.extract_strided_slice %268 {offsets = [0, 0], sizes = [8, 128], strides = [1, 1]} : vector<8x384xf32> to vector<8x128xf32>
    %272 = vector.extract_strided_slice %268 {offsets = [0, 128], sizes = [8, 128], strides = [1, 1]} : vector<8x384xf32> to vector<8x128xf32>
    %273 = vector.extract_strided_slice %268 {offsets = [0, 256], sizes = [8, 128], strides = [1, 1]} : vector<8x384xf32> to vector<8x128xf32>
    %274 = arith.mulf %272, %234 : vector<8x128xf32>
    %275 = arith.mulf %271, %270 : vector<8x128xf32>
    %276 = arith.addf %274, %275 : vector<8x128xf32>
    %277 = math.tanh %276 : vector<8x128xf32>
    %278 = arith.mulf %273, %277 : vector<8x128xf32>
    %c7_i32 = arith.constant 7 : i32
    %279 = arith.index_cast %c7_i32 : i32 to index
    %c0_46 = arith.constant 0 : index
    %c0_47 = arith.constant 0 : index
    %280 = vector.load %arg1[%279, %c0_46, %c0_47] : memref<8x8x512xf32, #tpu.memory_space<vmem>>, vector<1x8x512xf32>
    %281 = vector.shape_cast %280 : vector<1x8x512xf32> to vector<8x512xf32>
    %282 = arith.truncf %258 : vector<8x128xf32> to vector<8x128xbf16>
    %cst_48 = arith.constant dense<0.000000e+00> : vector<8x512xf32>
    %283 = tpu.matmul %282, %0, %cst_48 {dimension_numbers = #tpu.dot_dimension_numbers<[1], [0], [0], [1], [0, 0, 1, 1], [], []>} : vector<8x128xbf16>, vector<128x512xbf16>, vector<8x512xf32> -> vector<8x512xf32>
    %284 = arith.addf %281, %283 : vector<8x512xf32>
    %285 = vector.extract_strided_slice %284 {offsets = [0, 0], sizes = [8, 384], strides = [1, 1]} : vector<8x512xf32> to vector<8x384xf32>
    %286 = arith.negf %285 : vector<8x384xf32>
    %287 = math.exp %286 : vector<8x384xf32>
    %cst_49 = arith.constant 1.000000e+00 : f32
    %288 = vector.broadcast %cst_49 : f32 to vector<8x384xf32>
    %289 = arith.addf %288, %287 : vector<8x384xf32>
    %290 = arith.divf %288, %289 : vector<8x384xf32>
    %291 = vector.extract_strided_slice %284 {offsets = [0, 384], sizes = [8, 128], strides = [1, 1]} : vector<8x512xf32> to vector<8x128xf32>
    %292 = math.tanh %291 : vector<8x128xf32>
    %293 = vector.extract_strided_slice %290 {offsets = [0, 0], sizes = [8, 128], strides = [1, 1]} : vector<8x384xf32> to vector<8x128xf32>
    %294 = vector.extract_strided_slice %290 {offsets = [0, 128], sizes = [8, 128], strides = [1, 1]} : vector<8x384xf32> to vector<8x128xf32>
    %295 = vector.extract_strided_slice %290 {offsets = [0, 256], sizes = [8, 128], strides = [1, 1]} : vector<8x384xf32> to vector<8x128xf32>
    %296 = arith.mulf %294, %256 : vector<8x128xf32>
    %297 = arith.mulf %293, %292 : vector<8x128xf32>
    %298 = arith.addf %296, %297 : vector<8x128xf32>
    %299 = math.tanh %298 : vector<8x128xf32>
    %300 = arith.mulf %295, %299 : vector<8x128xf32>
    %301 = tpu.concatenate %258, %278 in 1 : vector<8x128xf32>, vector<8x128xf32> -> vector<8x256xf32>
    %302 = arith.truncf %301 : vector<8x256xf32> to vector<8x256xbf16>
    %cst_50 = arith.constant dense<0.000000e+00> : vector<8x512xf32>
    %303 = tpu.matmul %302, %1, %cst_50 {dimension_numbers = #tpu.dot_dimension_numbers<[1], [0], [0], [1], [0, 0, 1, 1], [], []>} : vector<8x256xbf16>, vector<256x512xbf16>, vector<8x512xf32> -> vector<8x512xf32>
    %304 = arith.addf %303, %4 : vector<8x512xf32>
    %305 = vector.extract_strided_slice %304 {offsets = [0, 0], sizes = [8, 384], strides = [1, 1]} : vector<8x512xf32> to vector<8x384xf32>
    %306 = arith.negf %305 : vector<8x384xf32>
    %307 = math.exp %306 : vector<8x384xf32>
    %cst_51 = arith.constant 1.000000e+00 : f32
    %308 = vector.broadcast %cst_51 : f32 to vector<8x384xf32>
    %309 = arith.addf %308, %307 : vector<8x384xf32>
    %310 = arith.divf %308, %309 : vector<8x384xf32>
    %311 = vector.extract_strided_slice %304 {offsets = [0, 384], sizes = [8, 128], strides = [1, 1]} : vector<8x512xf32> to vector<8x128xf32>
    %312 = math.tanh %311 : vector<8x128xf32>
    %313 = vector.extract_strided_slice %310 {offsets = [0, 0], sizes = [8, 128], strides = [1, 1]} : vector<8x384xf32> to vector<8x128xf32>
    %314 = vector.extract_strided_slice %310 {offsets = [0, 128], sizes = [8, 128], strides = [1, 1]} : vector<8x384xf32> to vector<8x128xf32>
    %315 = vector.extract_strided_slice %310 {offsets = [0, 256], sizes = [8, 128], strides = [1, 1]} : vector<8x384xf32> to vector<8x128xf32>
    %316 = arith.mulf %314, %276 : vector<8x128xf32>
    %317 = arith.mulf %313, %312 : vector<8x128xf32>
    %318 = arith.addf %316, %317 : vector<8x128xf32>
    %319 = math.tanh %318 : vector<8x128xf32>
    %320 = arith.mulf %315, %319 : vector<8x128xf32>
    %c7_i32_52 = arith.constant 7 : i32
    %321 = tpu.concatenate %300, %320 in 1 : vector<8x128xf32>, vector<8x128xf32> -> vector<8x256xf32>
    %322 = arith.truncf %321 : vector<8x256xf32> to vector<8x256xbf16>
    %cst_53 = arith.constant dense<0.000000e+00> : vector<8x512xf32>
    %323 = tpu.matmul %322, %1, %cst_53 {dimension_numbers = #tpu.dot_dimension_numbers<[1], [0], [0], [1], [0, 0, 1, 1], [], []>} : vector<8x256xbf16>, vector<256x512xbf16>, vector<8x512xf32> -> vector<8x512xf32>
    %324 = arith.addf %323, %4 : vector<8x512xf32>
    %325 = vector.extract_strided_slice %324 {offsets = [0, 0], sizes = [8, 384], strides = [1, 1]} : vector<8x512xf32> to vector<8x384xf32>
    %326 = arith.negf %325 : vector<8x384xf32>
    %327 = math.exp %326 : vector<8x384xf32>
    %cst_54 = arith.constant 1.000000e+00 : f32
    %328 = vector.broadcast %cst_54 : f32 to vector<8x384xf32>
    %329 = arith.addf %328, %327 : vector<8x384xf32>
    %330 = arith.divf %328, %329 : vector<8x384xf32>
    %331 = vector.extract_strided_slice %324 {offsets = [0, 384], sizes = [8, 128], strides = [1, 1]} : vector<8x512xf32> to vector<8x128xf32>
    %332 = math.tanh %331 : vector<8x128xf32>
    %333 = vector.extract_strided_slice %330 {offsets = [0, 0], sizes = [8, 128], strides = [1, 1]} : vector<8x384xf32> to vector<8x128xf32>
    %334 = vector.extract_strided_slice %330 {offsets = [0, 128], sizes = [8, 128], strides = [1, 1]} : vector<8x384xf32> to vector<8x128xf32>
    %335 = vector.extract_strided_slice %330 {offsets = [0, 256], sizes = [8, 128], strides = [1, 1]} : vector<8x384xf32> to vector<8x128xf32>
    %336 = arith.mulf %334, %318 : vector<8x128xf32>
    %337 = arith.mulf %333, %332 : vector<8x128xf32>
    %338 = arith.addf %336, %337 : vector<8x128xf32>
    %339 = math.tanh %338 : vector<8x128xf32>
    %340 = arith.mulf %335, %339 : vector<8x128xf32>
    %341 = arith.truncf %340 : vector<8x128xf32> to vector<8x128xbf16>
    %c0_55 = arith.constant 0 : index
    %c0_56 = arith.constant 0 : index
    %342 = vector.load %arg5[%c0_55, %c0_56] : memref<128x128xbf16, #tpu.memory_space<vmem>>, vector<128x128xbf16>
    %cst_57 = arith.constant dense<0.000000e+00> : vector<8x128xf32>
    %343 = tpu.matmul %341, %342, %cst_57 {dimension_numbers = #tpu.dot_dimension_numbers<[1], [0], [0], [1], [0, 0, 1, 1], [], []>} : vector<8x128xbf16>, vector<128x128xbf16>, vector<8x128xf32> -> vector<8x128xf32>
    %c0_58 = arith.constant 0 : index
    %c0_59 = arith.constant 0 : index
    %344 = vector.load %arg6[%c0_58, %c0_59] : memref<1x128xf32, #tpu.memory_space<vmem>>, vector<1x128xf32>
    %345 = vector.broadcast %344 : vector<1x128xf32> to vector<8x128xf32>
    %346 = arith.addf %343, %345 : vector<8x128xf32>
    %c0_60 = arith.constant 0 : index
    %c0_61 = arith.constant 0 : index
    %347 = vector.load %arg7[%c0_60, %c0_61] : memref<8x128xf32, #tpu.memory_space<vmem>>, vector<8x128xf32>
    tpu.vector_store %arg7[%c0_60, %c0_61], %346 {strides = array<i32>} : memref<8x128xf32, #tpu.memory_space<vmem>>, vector<8x128xf32>,
    return
  }
  func.func @transform_0(%arg0: i32) -> (i32, i32, i32) {
    %c0_i32 = arith.constant 0 : i32
    %c0_i32_0 = arith.constant 0 : i32
    %c0_i32_1 = arith.constant 0 : i32
    %c0_i32_2 = arith.constant 0 : i32
    return %c0_i32, %c0_i32_0, %c0_i32_1 : i32, i32, i32
  }
  func.func @transform_1(%arg0: i32) -> (i32, i32) {
    %c0_i32 = arith.constant 0 : i32
    %c0_i32_0 = arith.constant 0 : i32
    %c0_i32_1 = arith.constant 0 : i32
    return %c0_i32, %c0_i32_0 : i32, i32
  }
  func.func @transform_2(%arg0: i32) -> (i32, i32) {
    %c0_i32 = arith.constant 0 : i32
    %c0_i32_0 = arith.constant 0 : i32
    %c0_i32_1 = arith.constant 0 : i32
    return %c0_i32, %c0_i32_0 : i32, i32
  }
  func.func @transform_3(%arg0: i32) -> (i32, i32) {
    %c0_i32 = arith.constant 0 : i32
    %c0_i32_0 = arith.constant 0 : i32
    %c0_i32_1 = arith.constant 0 : i32
    return %c0_i32, %c0_i32_0 : i32, i32
  }
  func.func @transform_4(%arg0: i32) -> (i32, i32) {
    %c0_i32 = arith.constant 0 : i32
    %c0_i32_0 = arith.constant 0 : i32
    %c0_i32_1 = arith.constant 0 : i32
    return %c0_i32, %c0_i32_0 : i32, i32
  }
  func.func @transform_5(%arg0: i32) -> (i32, i32) {
    %c0_i32 = arith.constant 0 : i32
    %c0_i32_0 = arith.constant 0 : i32
    %c0_i32_1 = arith.constant 0 : i32
    return %c0_i32, %c0_i32_0 : i32, i32
  }
  func.func @transform_6(%arg0: i32) -> (i32, i32) {
    %c0_i32 = arith.constant 0 : i32
    %c0_i32_0 = arith.constant 0 : i32
    %c0_i32_1 = arith.constant 0 : i32
    return %c0_i32, %c0_i32_0 : i32, i32
  }
}

</mosaic_0001>

<llo_original>
// kernel: tpu_custom_call.1
$region0: #{tpu_custom_call.1}
  #allocation0 [shape = 'u32[]', space=smem, size = 0x4, offset = 0x4, fixed_abs, tag = 'smem constant byte address 0x4 - core index']
  #allocation1 [shape = 'u32[144,128]{1,0:T(1,128)}', space=vmem, size = 0x12000, scoped, tag = 'internal scratch']
  %s0 = inlined_call_operand.hbm [shape: f32[8,8,512], index: 0, kind: input, shape index: {}]
  %s1 = inlined_call_operand.hbm [shape: bf16[128,512], index: 1, kind: input, shape index: {}]
  %s2 = inlined_call_operand.hbm [shape: bf16[256,512], index: 2, kind: input, shape index: {}]
  %s3 = inlined_call_operand.vmem [shape: f32[1,512], index: 3, kind: input, shape index: {}]
  %s4 = inlined_call_operand.hbm [shape: bf16[128,128], index: 4, kind: input, shape index: {}]
  %s5 = inlined_call_operand.vmem [shape: f32[1,128], index: 5, kind: input, shape index: {}]
  %s6 = inlined_call_operand.hbm [shape: f32[8,128], index: 6, kind: output, shape index: {}]
  %s7 = sld [smem:[#allocation0]]
  $region50: #{tpu_custom_call.1} parent=0
    _
  %s9 = ssub.s32 1, %s7
  %s10 = scalar_select 0, %s9, %s7
  $region1: #{tpu_custom_call.1} parent=0
    #allocation2 [shape = 'u8[131072]{0}', space=vmem, size = 0x20000, scoped, tag = 'input window, operand 0, single buffered']
    #allocation3 [shape = 's32[1]{0}', space=sflag, size = 0x4, scoped, tag = 'scoped memory for tpu_custom_call.1']
    #allocation4 [shape = 's32[1]{0}', space=sflag, size = 0x4, scoped, tag = 'scoped memory for tpu_custom_call.1']
    #allocation5 [shape = 'u8[131072]{0}', space=vmem, size = 0x20000, scoped, tag = 'input window, operand 1, single buffered']
    #allocation6 [shape = 's32[1]{0}', space=sflag, size = 0x4, scoped, tag = 'scoped memory for tpu_custom_call.1']
    #allocation7 [shape = 'u8[262144]{0}', space=vmem, size = 0x40000, scoped, tag = 'input window, operand 2, single buffered']
    #allocation8 [shape = 'u8[32768]{0}', space=vmem, size = 0x8000, scoped, tag = 'input window, operand 4, single buffered']
    #allocation9 [shape = 's32[1]{0}', space=sflag, size = 0x4, scoped, tag = 'scoped memory for tpu_custom_call.1']
    #allocation10 [shape = 'u8[4096]{0}', space=vmem, size = 0x1000, scoped, tag = 'output window, operand 0, single buffered']
    %11 = vsyncpa [#allocation3], 0
    %12 = vsyncpa [#allocation6], 0
    %13 = vsyncpa [#allocation9], 0
    %14 = vsyncpa [#allocation4], 0
    // Predicated region
    $region2: #{tpu_custom_call.1} parent=1 // pred_check
      _
    $region3: #{tpu_custom_call.1} parent=1 // pred_check_branch
      %16 = sbr.rel (0) target = $region5
    $region4: #{tpu_custom_call.1} parent=1 // pred_region
      %s18 = ssub.s32 4096, 4096
      %19 = vsyncadd [#allocation3], %s18
      %s20 = sshll.u32 [#allocation2], 4
      %s21 = int_to_ptr.vmem [resolvable:$true] %s20
      %26 = dma.hbm_to_vmem [thread:$0]  %s0, 4096, %s21, [#allocation3], 512, 512, 32
    $region5: #{tpu_custom_call.1} parent=1 // pred_fallthru
      _
    // Predicated region
    $region6: #{tpu_custom_call.1} parent=1 // pred_check
      _
    $region7: #{tpu_custom_call.1} parent=1 // pred_check_branch
      %28 = sbr.rel (0) target = $region9
    $region8: #{tpu_custom_call.1} parent=1 // pred_region
      %s30 = ssub.s32 4096, 4096
      %31 = vsyncadd [#allocation6], %s30
      %s32 = sshll.u32 [#allocation5], 4
      %s33 = int_to_ptr.vmem [resolvable:$true] %s32
      %38 = dma.hbm_to_vmem [thread:$0]  %s1, 4096, %s33, [#allocation6], 256, 256, 16
    $region9: #{tpu_custom_call.1} parent=1 // pred_fallthru
      _
    // Predicated region
    $region10: #{tpu_custom_call.1} parent=1 // pred_check
      _
    $region11: #{tpu_custom_call.1} parent=1 // pred_check_branch
      %40 = sbr.rel (0) target = $region13
    $region12: #{tpu_custom_call.1} parent=1 // pred_region
      %s42 = ssub.s32 8192, 8192
      %43 = vsyncadd [#allocation6], %s42
      %s44 = sshll.u32 [#allocation7], 4
      %s45 = int_to_ptr.vmem [resolvable:$true] %s44
      %50 = dma.hbm_to_vmem [thread:$0]  %s2, 8192, %s45, [#allocation6], 256, 256, 16
    $region13: #{tpu_custom_call.1} parent=1 // pred_fallthru
      _
    // Predicated region
    $region14: #{tpu_custom_call.1} parent=1 // pred_check
      _
    $region15: #{tpu_custom_call.1} parent=1 // pred_check_branch
      %52 = sbr.rel (0) target = $region17
    $region16: #{tpu_custom_call.1} parent=1 // pred_region
      _
    $region17: #{tpu_custom_call.1} parent=1 // pred_fallthru
      _
    // Predicated region
    $region18: #{tpu_custom_call.1} parent=1 // pred_check
      _
    $region19: #{tpu_custom_call.1} parent=1 // pred_check_branch
      %54 = sbr.rel (0) target = $region21
    $region20: #{tpu_custom_call.1} parent=1 // pred_region
      %s56 = ssub.s32 1024, 1024
      %57 = vsyncadd [#allocation9], %s56
      %s58 = sshll.u32 [#allocation8], 4
      %s59 = int_to_ptr.vmem [resolvable:$true] %s58
      %64 = dma.hbm_to_vmem [thread:$0]  %s4, 1024, %s59, [#allocation9], 64, 64, 4
    $region21: #{tpu_custom_call.1} parent=1 // pred_fallthru
      _
    // Predicated region
    $region22: #{tpu_custom_call.1} parent=1 // pred_check
      _
    $region23: #{tpu_custom_call.1} parent=1 // pred_check_branch
      %66 = sbr.rel (0) target = $region25
    $region24: #{tpu_custom_call.1} parent=1 // pred_region
      _
    $region25: #{tpu_custom_call.1} parent=1 // pred_fallthru
      _
    // Predicated region
    $region26: #{tpu_custom_call.1} parent=1 // pred_check
      _
    $region27: #{tpu_custom_call.1} parent=1 // pred_check_branch
      %68 = sbr.rel (0) target = $region29
    $region28: #{tpu_custom_call.1} parent=1 // pred_region
      %69 = dma.done [#allocation3], 4096
    $region29: #{tpu_custom_call.1} parent=1 // pred_fallthru
      _
    // Predicated region
    $region30: #{tpu_custom_call.1} parent=1 // pred_check
      _
    $region31: #{tpu_custom_call.1} parent=1 // pred_check_branch
      %71 = sbr.rel (0) target = $region33
    $region32: #{tpu_custom_call.1} parent=1 // pred_region
      %72 = dma.done [#allocation6], 4096
    $region33: #{tpu_custom_call.1} parent=1 // pred_fallthru
      _
    // Predicated region
    $region34: #{tpu_custom_call.1} parent=1 // pred_check
      _
    $region35: #{tpu_custom_call.1} parent=1 // pred_check_branch
      %74 = sbr.rel (0) target = $region37
    $region36: #{tpu_custom_call.1} parent=1 // pred_region
      %75 = dma.done [#allocation6], 8192
    $region37: #{tpu_custom_call.1} parent=1 // pred_fallthru
      _
    // Predicated region
    $region38: #{tpu_custom_call.1} parent=1 // pred_check
      _
    $region39: #{tpu_custom_call.1} parent=1 // pred_check_branch
      %77 = sbr.rel (0) target = $region41
    $region40: #{tpu_custom_call.1} parent=1 // pred_region
      %78 = dma.done [#allocation9], 1024
    $region41: #{tpu_custom_call.1} parent=1 // pred_fallthru
      _
    %v80 = vld [vmem:[#allocation5] sm:$0xff]
    %v81 = vld [vmem:[#allocation5 + $0x8] sm:$0xff]
    %v82 = vld [vmem:[#allocation5 + $0x10] sm:$0xff]
    %v83 = vld [vmem:[#allocation5 + $0x18] sm:$0xff]
    %v84 = vld [vmem:[#allocation5 + $0x20] sm:$0xff]
    %v85 = vld [vmem:[#allocation5 + $0x28] sm:$0xff]
    %v86 = vld [vmem:[#allocation5 + $0x30] sm:$0xff]
    %v87 = vld [vmem:[#allocation5 + $0x38] sm:$0xff]
    %v88 = vld [vmem:[#allocation5 + $0x40] sm:$0xff]
    %v89 = vld [vmem:[#allocation5 + $0x48] sm:$0xff]
    %v90 = vld [vmem:[#allocation5 + $0x50] sm:$0xff]
    %v91 = vld [vmem:[#allocation5 + $0x58] sm:$0xff]
    %v92 = vld [vmem:[#allocation5 + $0x60] sm:$0xff]
    %v93 = vld [vmem:[#allocation5 + $0x68] sm:$0xff]
    %v94 = vld [vmem:[#allocation5 + $0x70] sm:$0xff]
    %v95 = vld [vmem:[#allocation5 + $0x78] sm:$0xff]
    %v96 = vld [vmem:[#allocation5 + $0x80] sm:$0xff]
    %v97 = vld [vmem:[#allocation5 + $0x88] sm:$0xff]
    %v98 = vld [vmem:[#allocation5 + $0x90] sm:$0xff]
    %v99 = vld [vmem:[#allocation5 + $0x98] sm:$0xff]
    %v100 = vld [vmem:[#allocation5 + $0xa0] sm:$0xff]
    %v101 = vld [vmem:[#allocation5 + $0xa8] sm:$0xff]
    %v102 = vld [vmem:[#allocation5 + $0xb0] sm:$0xff]
    %v103 = vld [vmem:[#allocation5 + $0xb8] sm:$0xff]
    %v104 = vld [vmem:[#allocation5 + $0xc0] sm:$0xff]
    %v105 = vld [vmem:[#allocation5 + $0xc8] sm:$0xff]
    %v106 = vld [vmem:[#allocation5 + $0xd0] sm:$0xff]
    %v107 = vld [vmem:[#allocation5 + $0xd8] sm:$0xff]
    %v108 = vld [vmem:[#allocation5 + $0xe0] sm:$0xff]
    %v109 = vld [vmem:[#allocation5 + $0xe8] sm:$0xff]
    %v110 = vld [vmem:[#allocation5 + $0xf0] sm:$0xff]
    %v111 = vld [vmem:[#allocation5 + $0xf8] sm:$0xff]
    %v112 = vld [vmem:[#allocation7] sm:$0xff]
    %v113 = vld [vmem:[#allocation7 + $0x8] sm:$0xff]
    %v114 = vld [vmem:[#allocation7 + $0x10] sm:$0xff]
    %v115 = vld [vmem:[#allocation7 + $0x18] sm:$0xff]
    %v116 = vld [vmem:[#allocation7 + $0x20] sm:$0xff]
    %v117 = vld [vmem:[#allocation7 + $0x28] sm:$0xff]
    %v118 = vld [vmem:[#allocation7 + $0x30] sm:$0xff]
    %v119 = vld [vmem:[#allocation7 + $0x38] sm:$0xff]
    %v120 = vld [vmem:[#allocation7 + $0x40] sm:$0xff]
    %v121 = vld [vmem:[#allocation7 + $0x48] sm:$0xff]
    %v122 = vld [vmem:[#allocation7 + $0x50] sm:$0xff]
    %v123 = vld [vmem:[#allocation7 + $0x58] sm:$0xff]
    %v124 = vld [vmem:[#allocation7 + $0x60] sm:$0xff]
    %v125 = vld [vmem:[#allocation7 + $0x68] sm:$0xff]
    %v126 = vld [vmem:[#allocation7 + $0x70] sm:$0xff]
    %v127 = vld [vmem:[#allocation7 + $0x78] sm:$0xff]
    %v128 = vld [vmem:[#allocation7 + $0x80] sm:$0xff]
    %v129 = vld [vmem:[#allocation7 + $0x88] sm:$0xff]
    %v130 = vld [vmem:[#allocation7 + $0x90] sm:$0xff]
    %v131 = vld [vmem:[#allocation7 + $0x98] sm:$0xff]
    %v132 = vld [vmem:[#allocation7 + $0xa0] sm:$0xff]
    %v133 = vld [vmem:[#allocation7 + $0xa8] sm:$0xff]
    %v134 = vld [vmem:[#allocation7 + $0xb0] sm:$0xff]
    %v135 = vld [vmem:[#allocation7 + $0xb8] sm:$0xff]
    %v136 = vld [vmem:[#allocation7 + $0xc0] sm:$0xff]
    %v137 = vld [vmem:[#allocation7 + $0xc8] sm:$0xff]
    %v138 = vld [vmem:[#allocation7 + $0xd0] sm:$0xff]
    %v139 = vld [vmem:[#allocation7 + $0xd8] sm:$0xff]
    %v140 = vld [vmem:[#allocation7 + $0xe0] sm:$0xff]
    %v141 = vld [vmem:[#allocation7 + $0xe8] sm:$0xff]
    %v142 = vld [vmem:[#allocation7 + $0xf0] sm:$0xff]
    %v143 = vld [vmem:[#allocation7 + $0xf8] sm:$0xff]
    %v144 = vld [vmem:[#allocation7 + $0x100] sm:$0xff]
    %v145 = vld [vmem:[#allocation7 + $0x108] sm:$0xff]
    %v146 = vld [vmem:[#allocation7 + $0x110] sm:$0xff]
    %v147 = vld [vmem:[#allocation7 + $0x118] sm:$0xff]
    %v148 = vld [vmem:[#allocation7 + $0x120] sm:$0xff]
    %v149 = vld [vmem:[#allocation7 + $0x128] sm:$0xff]
    %v150 = vld [vmem:[#allocation7 + $0x130] sm:$0xff]
    %v151 = vld [vmem:[#allocation7 + $0x138] sm:$0xff]
    %v152 = vld [vmem:[#allocation7 + $0x140] sm:$0xff]
    %v153 = vld [vmem:[#allocation7 + $0x148] sm:$0xff]
    %v154 = vld [vmem:[#allocation7 + $0x150] sm:$0xff]
    %v155 = vld [vmem:[#allocation7 + $0x158] sm:$0xff]
    %v156 = vld [vmem:[#allocation7 + $0x160] sm:$0xff]
    %v157 = vld [vmem:[#allocation7 + $0x168] sm:$0xff]
    %v158 = vld [vmem:[#allocation7 + $0x170] sm:$0xff]
    %v159 = vld [vmem:[#allocation7 + $0x178] sm:$0xff]
    %v160 = vld [vmem:[#allocation7 + $0x180] sm:$0xff]
    %v161 = vld [vmem:[#allocation7 + $0x188] sm:$0xff]
    %v162 = vld [vmem:[#allocation7 + $0x190] sm:$0xff]
    %v163 = vld [vmem:[#allocation7 + $0x198] sm:$0xff]
    %v164 = vld [vmem:[#allocation7 + $0x1a0] sm:$0xff]
    %v165 = vld [vmem:[#allocation7 + $0x1a8] sm:$0xff]
    %v166 = vld [vmem:[#allocation7 + $0x1b0] sm:$0xff]
    %v167 = vld [vmem:[#allocation7 + $0x1b8] sm:$0xff]
    %v168 = vld [vmem:[#allocation7 + $0x1c0] sm:$0xff]
    %v169 = vld [vmem:[#allocation7 + $0x1c8] sm:$0xff]
    %v170 = vld [vmem:[#allocation7 + $0x1d0] sm:$0xff]
    %v171 = vld [vmem:[#allocation7 + $0x1d8] sm:$0xff]
    %v172 = vld [vmem:[#allocation7 + $0x1e0] sm:$0xff]
    %v173 = vld [vmem:[#allocation7 + $0x1e8] sm:$0xff]
    %v174 = vld [vmem:[#allocation7 + $0x1f0] sm:$0xff]
    %v175 = vld [vmem:[#allocation7 + $0x1f8] sm:$0xff]
    %v176 = vld [vmem:[%s3] sm:$0xf]
    %v178 = vlaneseq
    %v179 = vshrl.u32 %v178, 7
    %v180 = vsub.s32 0, %v179
    %v181 = vrot.slane %v176, %v180
    %v182 = vlaneseq
    %v183 = vshrl.u32 %v182, 7
    %v184 = vsub.s32 1, %v183
    %v185 = vrot.slane %v176, %v184
    %v186 = vlaneseq
    %v187 = vshrl.u32 %v186, 7
    %v188 = vsub.s32 2, %v187
    %v189 = vrot.slane %v176, %v188
    %v190 = vlaneseq
    %v191 = vshrl.u32 %v190, 7
    %v192 = vsub.s32 3, %v191
    %v193 = vrot.slane %v176, %v192
    %v198 = vld [vmem:[#allocation2] sm:$0xff]
    %v199 = vld [vmem:[#allocation2 + $0x8] sm:$0xff]
    %v200 = vld [vmem:[#allocation2 + $0x10] sm:$0xff]
    %v201 = vld [vmem:[#allocation2 + $0x18] sm:$0xff]
    %v234 = vunpack.c.l.b16 %v80
    %v235 = vunpack.c.h.b16 %v80
    %v236 = vunpack.c.l.b16 %v81
    %v237 = vunpack.c.h.b16 %v81
    %v238 = vunpack.c.l.b16 %v82
    %v239 = vunpack.c.h.b16 %v82
    %v240 = vunpack.c.l.b16 %v83
    %v241 = vunpack.c.h.b16 %v83
    %v242 = vunpack.c.l.b16 %v84
    %v243 = vunpack.c.h.b16 %v84
    %v244 = vunpack.c.l.b16 %v85
    %v245 = vunpack.c.h.b16 %v85
    %v246 = vunpack.c.l.b16 %v86
    %v247 = vunpack.c.h.b16 %v86
    %v248 = vunpack.c.l.b16 %v87
    %v249 = vunpack.c.h.b16 %v87
    %v250 = vunpack.c.l.b16 %v88
    %v251 = vunpack.c.h.b16 %v88
    %v252 = vunpack.c.l.b16 %v89
    %v253 = vunpack.c.h.b16 %v89
    %v254 = vunpack.c.l.b16 %v90
    %v255 = vunpack.c.h.b16 %v90
    %v256 = vunpack.c.l.b16 %v91
    %v257 = vunpack.c.h.b16 %v91
    %v258 = vunpack.c.l.b16 %v92
    %v259 = vunpack.c.h.b16 %v92
    %v260 = vunpack.c.l.b16 %v93
    %v261 = vunpack.c.h.b16 %v93
    %v262 = vunpack.c.l.b16 %v94
    %v263 = vunpack.c.h.b16 %v94
    %v264 = vunpack.c.l.b16 %v95
    %v265 = vunpack.c.h.b16 %v95
    %v266 = vunpack.c.l.b16 %v96
    %v267 = vunpack.c.h.b16 %v96
    %v268 = vunpack.c.l.b16 %v97
    %v269 = vunpack.c.h.b16 %v97
    %v270 = vunpack.c.l.b16 %v98
    %v271 = vunpack.c.h.b16 %v98
    %v272 = vunpack.c.l.b16 %v99
    %v273 = vunpack.c.h.b16 %v99
    %v274 = vunpack.c.l.b16 %v100
    %v275 = vunpack.c.h.b16 %v100
    %v276 = vunpack.c.l.b16 %v101
    %v277 = vunpack.c.h.b16 %v101
    %v278 = vunpack.c.l.b16 %v102
    %v279 = vunpack.c.h.b16 %v102
    %v280 = vunpack.c.l.b16 %v103
    %v281 = vunpack.c.h.b16 %v103
    %v282 = vunpack.c.l.b16 %v104
    %v283 = vunpack.c.h.b16 %v104
    %v284 = vunpack.c.l.b16 %v105
    %v285 = vunpack.c.h.b16 %v105
    %v286 = vunpack.c.l.b16 %v106
    %v287 = vunpack.c.h.b16 %v106
    %v288 = vunpack.c.l.b16 %v107
    %v289 = vunpack.c.h.b16 %v107
    %v290 = vunpack.c.l.b16 %v108
    %v291 = vunpack.c.h.b16 %v108
    %v292 = vunpack.c.l.b16 %v109
    %v293 = vunpack.c.h.b16 %v109
    %v294 = vunpack.c.l.b16 %v110
    %v295 = vunpack.c.h.b16 %v110
    %v296 = vunpack.c.l.b16 %v111
    %v297 = vunpack.c.h.b16 %v111
    %v298 = vpack.c.b16 %v238, %v234
    %v299 = vpack.c.b16 %v239, %v235
    %v300 = vpack.c.b16 %v240, %v236
    %v301 = vpack.c.b16 %v241, %v237
    %v302 = vpack.c.b16 %v246, %v242
    %v303 = vpack.c.b16 %v247, %v243
    %v304 = vpack.c.b16 %v248, %v244
    %v305 = vpack.c.b16 %v249, %v245
    %v306 = vpack.c.b16 %v254, %v250
    %v307 = vpack.c.b16 %v255, %v251
    %v308 = vpack.c.b16 %v256, %v252
    %v309 = vpack.c.b16 %v257, %v253
    %v310 = vpack.c.b16 %v262, %v258
    %v311 = vpack.c.b16 %v263, %v259
    %v312 = vpack.c.b16 %v264, %v260
    %v313 = vpack.c.b16 %v265, %v261
    %v314 = vpack.c.b16 %v270, %v266
    %v315 = vpack.c.b16 %v271, %v267
    %v316 = vpack.c.b16 %v272, %v268
    %v317 = vpack.c.b16 %v273, %v269
    %v318 = vpack.c.b16 %v278, %v274
    %v319 = vpack.c.b16 %v279, %v275
    %v320 = vpack.c.b16 %v280, %v276
    %v321 = vpack.c.b16 %v281, %v277
    %v322 = vpack.c.b16 %v286, %v282
    %v323 = vpack.c.b16 %v287, %v283
    %v324 = vpack.c.b16 %v288, %v284
    %v325 = vpack.c.b16 %v289, %v285
    %v326 = vpack.c.b16 %v294, %v290
    %v327 = vpack.c.b16 %v295, %v291
    %v328 = vpack.c.b16 %v296, %v292
    %v329 = vpack.c.b16 %v297, %v293
    %362 = vmatprep.subr.bf16.mxu0 %v299
    %363 = vmatpush1.bf16.msra.mxu0 %v298
    %364 = vmatprep.subr.bf16.mxu0 %v303
    %365 = vmatpush1.bf16.msra.mxu0 %v302
    %366 = vmatprep.subr.bf16.mxu0 %v307
    %367 = vmatpush1.bf16.msra.mxu0 %v306
    %368 = vmatprep.subr.bf16.mxu0 %v311
    %369 = vmatpush1.bf16.msra.mxu0 %v310
    %370 = vmatprep.subr.bf16.mxu0 %v315
    %371 = vmatpush1.bf16.msra.mxu0 %v314
    %372 = vmatprep.subr.bf16.mxu0 %v319
    %373 = vmatpush1.bf16.msra.mxu0 %v318
    %374 = vmatprep.subr.bf16.mxu0 %v323
    %375 = vmatpush1.bf16.msra.mxu0 %v322
    %376 = vmatprep.subr.bf16.mxu0 %v327
    %377 = vmatpush1.bf16.msra.mxu0 %v326
    %378 = vmatprep.subr.bf16.mxu0 0
    %379 = vmatpush1.bf16.msra.mxu0 0
    %380 = vmatprep.subr.bf16.mxu0 0
    %381 = vmatpush1.bf16.msra.mxu0 0
    %382 = vmatprep.subr.bf16.mxu0 0
    %383 = vmatpush1.bf16.msra.mxu0 0
    %384 = vmatprep.subr.bf16.mxu0 0
    %385 = vmatpush1.bf16.msra.mxu0 0
    %386 = vmatprep.subr.bf16.mxu0 0
    %387 = vmatpush1.bf16.msra.mxu0 0
    %388 = vmatprep.subr.bf16.mxu0 0
    %389 = vmatpush1.bf16.msra.mxu0 0
    %390 = vmatprep.subr.bf16.mxu0 0
    %391 = vmatpush1.bf16.msra.mxu0 0
    %392 = vmatprep.subr.bf16.mxu0 0
    %393 = vmatpush1.bf16.msra.mxu0 0
    %394 = vmatprep.mubr.bf16.mxu0 0
    %395 = vmatmul.mubr.bf16.gmra.mrb[0].mxu0 0
    %v396 = vpop.f32.mrb[0].mxu0
    %v397 = vadd.f32 0.0, %v396
    %v398 = vpop.f32.mrb[0].mxu0
    %v399 = vadd.f32 0.0, %v398
    %v400 = vpop.f32.mrb[0].mxu0
    %v401 = vpop.f32.mrb[0].mxu0
    %402 = vdwg.mxu0
    %403 = vmatprep.subr.bf16.mxu0 %v301
    %404 = vmatpush1.bf16.msra.mxu0 %v300
    %405 = vmatprep.subr.bf16.mxu0 %v305
    %406 = vmatpush1.bf16.msra.mxu0 %v304
    %407 = vmatprep.subr.bf16.mxu0 %v309
    %408 = vmatpush1.bf16.msra.mxu0 %v308
    %409 = vmatprep.subr.bf16.mxu0 %v313
    %410 = vmatpush1.bf16.msra.mxu0 %v312
    %411 = vmatprep.subr.bf16.mxu0 %v317
    %412 = vmatpush1.bf16.msra.mxu0 %v316
    %413 = vmatprep.subr.bf16.mxu0 %v321
    %414 = vmatpush1.bf16.msra.mxu0 %v320
    %415 = vmatprep.subr.bf16.mxu0 %v325
    %416 = vmatpush1.bf16.msra.mxu0 %v324
    %417 = vmatprep.subr.bf16.mxu0 %v329
    %418 = vmatpush1.bf16.msra.mxu0 %v328
    %419 = vmatprep.subr.bf16.mxu0 0
    %420 = vmatpush1.bf16.msra.mxu0 0
    %421 = vmatprep.subr.bf16.mxu0 0
    %422 = vmatpush1.bf16.msra.mxu0 0
    %423 = vmatprep.subr.bf16.mxu0 0
    %424 = vmatpush1.bf16.msra.mxu0 0
    %425 = vmatprep.subr.bf16.mxu0 0
    %426 = vmatpush1.bf16.msra.mxu0 0
    %427 = vmatprep.subr.bf16.mxu0 0
    %428 = vmatpush1.bf16.msra.mxu0 0
    %429 = vmatprep.subr.bf16.mxu0 0
    %430 = vmatpush1.bf16.msra.mxu0 0
    %431 = vmatprep.subr.bf16.mxu0 0
    %432 = vmatpush1.bf16.msra.mxu0 0
    %433 = vmatprep.subr.bf16.mxu0 0
    %434 = vmatpush1.bf16.msra.mxu0 0
    %435 = vmatprep.mubr.bf16.mxu0 0
    %436 = vmatmul.mubr.bf16.gmra.mrb[0].mxu0 0
    %v437 = vpop.f32.mrb[0].mxu0
    %v438 = vadd.f32 0.0, %v437
    %v439 = vpop.f32.mrb[0].mxu0
    %v440 = vadd.f32 0.0, %v439
    %v441 = vpop.f32.mrb[0].mxu0
    %v442 = vpop.f32.mrb[0].mxu0
    %443 = vdwg.mxu0
    %v444 = vadd.f32 %v198, %v397
    %v445 = vadd.f32 %v199, %v399
    %v446 = vadd.f32 %v200, %v438
    %v447 = vadd.f32 %v201, %v440
    %v448 = vxor.u32 %v444, 2147483648
    %v449 = vxor.u32 %v445, 2147483648
    %v450 = vxor.u32 %v446, 2147483648
    %v451 = vmul.f32 %v448, 1.442695
    %v452 = vpow.pop %v451
    %v453 = vmul.f32 %v449, 1.442695
    %v454 = vpow.pop %v453
    %v455 = vmul.f32 %v450, 1.442695
    %v456 = vpow.pop %v455
    %v457 = vadd.f32 %v452, 1.0
    %v458 = vadd.f32 %v454, 1.0
    %v459 = vadd.f32 %v456, 1.0
    %v460 = vrcp.pop %v457
    %v461 = vmul.f32 1.0, %v460
    %v462 = vrcp.pop %v458
    %v463 = vmul.f32 1.0, %v462
    %v464 = vrcp.pop %v459
    %v465 = vmul.f32 1.0, %v464
    %v466 = vtanh.pop %v447
    %v467 = vmul.f32 %v463, 0.0
    %v468 = vmul.f32 %v461, %v466
    %v469 = vadd.f32 %v467, %v468
    %v470 = vtanh.pop %v469
    %v471 = vmul.f32 %v465, %v470
    %s472 = scalar_lea.vmem [#allocation2], 32
    %v473 = vld [vmem:[%s472] sm:$0xff]
    %v474 = vld [vmem:[%s472 + $0x8] sm:$0xff]
    %v475 = vld [vmem:[%s472 + $0x10] sm:$0xff]
    %v476 = vld [vmem:[%s472 + $0x18] sm:$0xff]
    %v477 = vpack.c.bf16 %v471, %v471
    %478 = vmatprep.subr.bf16.mxu0 %v299
    %479 = vmatpush1.bf16.msra.mxu0 %v298
    %480 = vmatprep.subr.bf16.mxu0 %v303
    %481 = vmatpush1.bf16.msra.mxu0 %v302
    %482 = vmatprep.subr.bf16.mxu0 %v307
    %483 = vmatpush1.bf16.msra.mxu0 %v306
    %484 = vmatprep.subr.bf16.mxu0 %v311
    %485 = vmatpush1.bf16.msra.mxu0 %v310
    %486 = vmatprep.subr.bf16.mxu0 %v315
    %487 = vmatpush1.bf16.msra.mxu0 %v314
    %488 = vmatprep.subr.bf16.mxu0 %v319
    %489 = vmatpush1.bf16.msra.mxu0 %v318
    %490 = vmatprep.subr.bf16.mxu0 %v323
    %491 = vmatpush1.bf16.msra.mxu0 %v322
    %492 = vmatprep.subr.bf16.mxu0 %v327
    %493 = vmatpush1.bf16.msra.mxu0 %v326
    %494 = vmatprep.subr.bf16.mxu0 0
    %495 = vmatpush1.bf16.msra.mxu0 0
    %496 = vmatprep.subr.bf16.mxu0 0
    %497 = vmatpush1.bf16.msra.mxu0 0
    %498 = vmatprep.subr.bf16.mxu0 0
    %499 = vmatpush1.bf16.msra.mxu0 0
    %500 = vmatprep.subr.bf16.mxu0 0
    %501 = vmatpush1.bf16.msra.mxu0 0
    %502 = vmatprep.subr.bf16.mxu0 0
    %503 = vmatpush1.bf16.msra.mxu0 0
    %504 = vmatprep.subr.bf16.mxu0 0
    %505 = vmatpush1.bf16.msra.mxu0 0
    %506 = vmatprep.subr.bf16.mxu0 0
    %507 = vmatpush1.bf16.msra.mxu0 0
    %508 = vmatprep.subr.bf16.mxu0 0
    %509 = vmatpush1.bf16.msra.mxu0 0
    %510 = vmatprep.mubr.bf16.mxu0 0
    %511 = vmatmul.mubr.bf16.gmra.mrb[0].mxu0 %v477
    %v512 = vpop.f32.mrb[0].mxu0
    %v513 = vadd.f32 0.0, %v512
    %v514 = vpop.f32.mrb[0].mxu0
    %v515 = vadd.f32 0.0, %v514
    %v516 = vpop.f32.mrb[0].mxu0
    %v517 = vpop.f32.mrb[0].mxu0
    %518 = vdwg.mxu0
    %519 = vmatprep.subr.bf16.mxu0 %v301
    %520 = vmatpush1.bf16.msra.mxu0 %v300
    %521 = vmatprep.subr.bf16.mxu0 %v305
    %522 = vmatpush1.bf16.msra.mxu0 %v304
    %523 = vmatprep.subr.bf16.mxu0 %v309
    %524 = vmatpush1.bf16.msra.mxu0 %v308
    %525 = vmatprep.subr.bf16.mxu0 %v313
    %526 = vmatpush1.bf16.msra.mxu0 %v312
    %527 = vmatprep.subr.bf16.mxu0 %v317
    %528 = vmatpush1.bf16.msra.mxu0 %v316
    %529 = vmatprep.subr.bf16.mxu0 %v321
    %530 = vmatpush1.bf16.msra.mxu0 %v320
    %531 = vmatprep.subr.bf16.mxu0 %v325
    %532 = vmatpush1.bf16.msra.mxu0 %v324
    %533 = vmatprep.subr.bf16.mxu0 %v329
    %534 = vmatpush1.bf16.msra.mxu0 %v328
    %535 = vmatprep.subr.bf16.mxu0 0
    %536 = vmatpush1.bf16.msra.mxu0 0
    %537 = vmatprep.subr.bf16.mxu0 0
    %538 = vmatpush1.bf16.msra.mxu0 0
    %539 = vmatprep.subr.bf16.mxu0 0
    %540 = vmatpush1.bf16.msra.mxu0 0
    %541 = vmatprep.subr.bf16.mxu0 0
    %542 = vmatpush1.bf16.msra.mxu0 0
    %543 = vmatprep.subr.bf16.mxu0 0
    %544 = vmatpush1.bf16.msra.mxu0 0
    %545 = vmatprep.subr.bf16.mxu0 0
    %546 = vmatpush1.bf16.msra.mxu0 0
    %547 = vmatprep.subr.bf16.mxu0 0
    %548 = vmatpush1.bf16.msra.mxu0 0
    %549 = vmatprep.subr.bf16.mxu0 0
    %550 = vmatpush1.bf16.msra.mxu0 0
    %551 = vmatprep.mubr.bf16.mxu0 0
    %552 = vmatmul.mubr.bf16.gmra.mrb[0].mxu0 %v477
    %v553 = vpop.f32.mrb[0].mxu0
    %v554 = vadd.f32 0.0, %v553
    %v555 = vpop.f32.mrb[0].mxu0
    %v556 = vadd.f32 0.0, %v555
    %v557 = vpop.f32.mrb[0].mxu0
    %v558 = vpop.f32.mrb[0].mxu0
    %559 = vdwg.mxu0
    %v560 = vadd.f32 %v473, %v513
    %v561 = vadd.f32 %v474, %v515
    %v562 = vadd.f32 %v475, %v554
    %v563 = vadd.f32 %v476, %v556
    %v564 = vxor.u32 %v560, 2147483648
    %v565 = vxor.u32 %v561, 2147483648
    %v566 = vxor.u32 %v562, 2147483648
    %v567 = vmul.f32 %v564, 1.442695
    %v568 = vpow.pop %v567
    %v569 = vmul.f32 %v565, 1.442695
    %v570 = vpow.pop %v569
    %v571 = vmul.f32 %v566, 1.442695
    %v572 = vpow.pop %v571
    %v573 = vadd.f32 %v568, 1.0
    %v574 = vadd.f32 %v570, 1.0
    %v575 = vadd.f32 %v572, 1.0
    %v576 = vrcp.pop %v573
    %v577 = vmul.f32 1.0, %v576
    %v578 = vrcp.pop %v574
    %v579 = vmul.f32 1.0, %v578
    %v580 = vrcp.pop %v575
    %v581 = vmul.f32 1.0, %v580
    %v582 = vtanh.pop %v563
    %v583 = vmul.f32 %v579, %v469
    %v584 = vmul.f32 %v577, %v582
    %v585 = vadd.f32 %v583, %v584
    %v586 = vtanh.pop %v585
    %v587 = vmul.f32 %v581, %v586
    %v588 = vpack.c.bf16 0.0, 0.0
    %v653 = vunpack.c.l.b16 %v112
    %v654 = vunpack.c.h.b16 %v112
    %v655 = vunpack.c.l.b16 %v113
    %v656 = vunpack.c.h.b16 %v113
    %v657 = vunpack.c.l.b16 %v114
    %v658 = vunpack.c.h.b16 %v114
    %v659 = vunpack.c.l.b16 %v115
    %v660 = vunpack.c.h.b16 %v115
    %v661 = vunpack.c.l.b16 %v116
    %v662 = vunpack.c.h.b16 %v116
    %v663 = vunpack.c.l.b16 %v117
    %v664 = vunpack.c.h.b16 %v117
    %v665 = vunpack.c.l.b16 %v118
    %v666 = vunpack.c.h.b16 %v118
    %v667 = vunpack.c.l.b16 %v119
    %v668 = vunpack.c.h.b16 %v119
    %v669 = vunpack.c.l.b16 %v120
    %v670 = vunpack.c.h.b16 %v120
    %v671 = vunpack.c.l.b16 %v121
    %v672 = vunpack.c.h.b16 %v121
    %v673 = vunpack.c.l.b16 %v122
    %v674 = vunpack.c.h.b16 %v122
    %v675 = vunpack.c.l.b16 %v123
    %v676 = vunpack.c.h.b16 %v123
    %v677 = vunpack.c.l.b16 %v124
    %v678 = vunpack.c.h.b16 %v124
    %v679 = vunpack.c.l.b16 %v125
    %v680 = vunpack.c.h.b16 %v125
    %v681 = vunpack.c.l.b16 %v126
    %v682 = vunpack.c.h.b16 %v126
    %v683 = vunpack.c.l.b16 %v127
    %v684 = vunpack.c.h.b16 %v127
    %v685 = vunpack.c.l.b16 %v128
    %v686 = vunpack.c.h.b16 %v128
    %v687 = vunpack.c.l.b16 %v129
    %v688 = vunpack.c.h.b16 %v129
    %v689 = vunpack.c.l.b16 %v130
    %v690 = vunpack.c.h.b16 %v130
    %v691 = vunpack.c.l.b16 %v131
    %v692 = vunpack.c.h.b16 %v131
    %v693 = vunpack.c.l.b16 %v132
    %v694 = vunpack.c.h.b16 %v132
    %v695 = vunpack.c.l.b16 %v133
    %v696 = vunpack.c.h.b16 %v133
    %v697 = vunpack.c.l.b16 %v134
    %v698 = vunpack.c.h.b16 %v134
    %v699 = vunpack.c.l.b16 %v135
    %v700 = vunpack.c.h.b16 %v135
    %v701 = vunpack.c.l.b16 %v136
    %v702 = vunpack.c.h.b16 %v136
    %v703 = vunpack.c.l.b16 %v137
    %v704 = vunpack.c.h.b16 %v137
    %v705 = vunpack.c.l.b16 %v138
    %v706 = vunpack.c.h.b16 %v138
    %v707 = vunpack.c.l.b16 %v139
    %v708 = vunpack.c.h.b16 %v139
    %v709 = vunpack.c.l.b16 %v140
    %v710 = vunpack.c.h.b16 %v140
    %v711 = vunpack.c.l.b16 %v141
    %v712 = vunpack.c.h.b16 %v141
    %v713 = vunpack.c.l.b16 %v142
    %v714 = vunpack.c.h.b16 %v142
    %v715 = vunpack.c.l.b16 %v143
    %v716 = vunpack.c.h.b16 %v143
    %v717 = vunpack.c.l.b16 %v144
    %v718 = vunpack.c.h.b16 %v144
    %v719 = vunpack.c.l.b16 %v145
    %v720 = vunpack.c.h.b16 %v145
    %v721 = vunpack.c.l.b16 %v146
    %v722 = vunpack.c.h.b16 %v146
    %v723 = vunpack.c.l.b16 %v147
    %v724 = vunpack.c.h.b16 %v147
    %v725 = vunpack.c.l.b16 %v148
    %v726 = vunpack.c.h.b16 %v148
    %v727 = vunpack.c.l.b16 %v149
    %v728 = vunpack.c.h.b16 %v149
    %v729 = vunpack.c.l.b16 %v150
    %v730 = vunpack.c.h.b16 %v150
    %v731 = vunpack.c.l.b16 %v151
    %v732 = vunpack.c.h.b16 %v151
    %v733 = vunpack.c.l.b16 %v152
    %v734 = vunpack.c.h.b16 %v152
    %v735 = vunpack.c.l.b16 %v153
    %v736 = vunpack.c.h.b16 %v153
    %v737 = vunpack.c.l.b16 %v154
    %v738 = vunpack.c.h.b16 %v154
    %v739 = vunpack.c.l.b16 %v155
    %v740 = vunpack.c.h.b16 %v155
    %v741 = vunpack.c.l.b16 %v156
    %v742 = vunpack.c.h.b16 %v156
    %v743 = vunpack.c.l.b16 %v157
    %v744 = vunpack.c.h.b16 %v157
    %v745 = vunpack.c.l.b16 %v158
    %v746 = vunpack.c.h.b16 %v158
    %v747 = vunpack.c.l.b16 %v159
    %v748 = vunpack.c.h.b16 %v159
    %v749 = vunpack.c.l.b16 %v160
    %v750 = vunpack.c.h.b16 %v160
    %v751 = vunpack.c.l.b16 %v161
    %v752 = vunpack.c.h.b16 %v161
    %v753 = vunpack.c.l.b16 %v162
    %v754 = vunpack.c.h.b16 %v162
    %v755 = vunpack.c.l.b16 %v163
    %v756 = vunpack.c.h.b16 %v163
    %v757 = vunpack.c.l.b16 %v164
    %v758 = vunpack.c.h.b16 %v164
    %v759 = vunpack.c.l.b16 %v165
    %v760 = vunpack.c.h.b16 %v165
    %v761 = vunpack.c.l.b16 %v166
    %v762 = vunpack.c.h.b16 %v166
    %v763 = vunpack.c.l.b16 %v167
    %v764 = vunpack.c.h.b16 %v167
    %v765 = vunpack.c.l.b16 %v168
    %v766 = vunpack.c.h.b16 %v168
    %v767 = vunpack.c.l.b16 %v169
    %v768 = vunpack.c.h.b16 %v169
    %v769 = vunpack.c.l.b16 %v170
    %v770 = vunpack.c.h.b16 %v170
    %v771 = vunpack.c.l.b16 %v171
    %v772 = vunpack.c.h.b16 %v171
    %v773 = vunpack.c.l.b16 %v172
    %v774 = vunpack.c.h.b16 %v172
    %v775 = vunpack.c.l.b16 %v173
    %v776 = vunpack.c.h.b16 %v173
    %v777 = vunpack.c.l.b16 %v174
    %v778 = vunpack.c.h.b16 %v174
    %v779 = vunpack.c.l.b16 %v175
    %v780 = vunpack.c.h.b16 %v175
    %v781 = vpack.c.b16 %v657, %v653
    %v782 = vpack.c.b16 %v658, %v654
    %v783 = vpack.c.b16 %v659, %v655
    %v784 = vpack.c.b16 %v660, %v656
    %v785 = vpack.c.b16 %v665, %v661
    %v786 = vpack.c.b16 %v666, %v662
    %v787 = vpack.c.b16 %v667, %v663
    %v788 = vpack.c.b16 %v668, %v664
    %v789 = vpack.c.b16 %v673, %v669
    %v790 = vpack.c.b16 %v674, %v670
    %v791 = vpack.c.b16 %v675, %v671
    %v792 = vpack.c.b16 %v676, %v672
    %v793 = vpack.c.b16 %v681, %v677
    %v794 = vpack.c.b16 %v682, %v678
    %v795 = vpack.c.b16 %v683, %v679
    %v796 = vpack.c.b16 %v684, %v680
    %v797 = vpack.c.b16 %v689, %v685
    %v798 = vpack.c.b16 %v690, %v686
    %v799 = vpack.c.b16 %v691, %v687
    %v800 = vpack.c.b16 %v692, %v688
    %v801 = vpack.c.b16 %v697, %v693
    %v802 = vpack.c.b16 %v698, %v694
    %v803 = vpack.c.b16 %v699, %v695
    %v804 = vpack.c.b16 %v700, %v696
    %v805 = vpack.c.b16 %v705, %v701
    %v806 = vpack.c.b16 %v706, %v702
    %v807 = vpack.c.b16 %v707, %v703
    %v808 = vpack.c.b16 %v708, %v704
    %v809 = vpack.c.b16 %v713, %v709
    %v810 = vpack.c.b16 %v714, %v710
    %v811 = vpack.c.b16 %v715, %v711
    %v812 = vpack.c.b16 %v716, %v712
    %v813 = vpack.c.b16 %v721, %v717
    %v814 = vpack.c.b16 %v722, %v718
    %v815 = vpack.c.b16 %v723, %v719
    %v816 = vpack.c.b16 %v724, %v720
    %v817 = vpack.c.b16 %v729, %v725
    %v818 = vpack.c.b16 %v730, %v726
    %v819 = vpack.c.b16 %v731, %v727
    %v820 = vpack.c.b16 %v732, %v728
    %v821 = vpack.c.b16 %v737, %v733
    %v822 = vpack.c.b16 %v738, %v734
    %v823 = vpack.c.b16 %v739, %v735
    %v824 = vpack.c.b16 %v740, %v736
    %v825 = vpack.c.b16 %v745, %v741
    %v826 = vpack.c.b16 %v746, %v742
    %v827 = vpack.c.b16 %v747, %v743
    %v828 = vpack.c.b16 %v748, %v744
    %v829 = vpack.c.b16 %v753, %v749
    %v830 = vpack.c.b16 %v754, %v750
    %v831 = vpack.c.b16 %v755, %v751
    %v832 = vpack.c.b16 %v756, %v752
    %v833 = vpack.c.b16 %v761, %v757
    %v834 = vpack.c.b16 %v762, %v758
    %v835 = vpack.c.b16 %v763, %v759
    %v836 = vpack.c.b16 %v764, %v760
    %v837 = vpack.c.b16 %v769, %v765
    %v838 = vpack.c.b16 %v770, %v766
    %v839 = vpack.c.b16 %v771, %v767
    %v840 = vpack.c.b16 %v772, %v768
    %v841 = vpack.c.b16 %v777, %v773
    %v842 = vpack.c.b16 %v778, %v774
    %v843 = vpack.c.b16 %v779, %v775
    %v844 = vpack.c.b16 %v780, %v776
    %909 = vmatprep.subr.bf16.mxu0 %v782
    %910 = vmatpush1.bf16.msra.mxu0 %v781
    %911 = vmatprep.subr.bf16.mxu0 %v786
    %912 = vmatpush1.bf16.msra.mxu0 %v785
    %913 = vmatprep.subr.bf16.mxu0 %v790
    %914 = vmatpush1.bf16.msra.mxu0 %v789
    %915 = vmatprep.subr.bf16.mxu0 %v794
    %916 = vmatpush1.bf16.msra.mxu0 %v793
    %917 = vmatprep.subr.bf16.mxu0 %v798
    %918 = vmatpush1.bf16.msra.mxu0 %v797
    %919 = vmatprep.subr.bf16.mxu0 %v802
    %920 = vmatpush1.bf16.msra.mxu0 %v801
    %921 = vmatprep.subr.bf16.mxu0 %v806
    %922 = vmatpush1.bf16.msra.mxu0 %v805
    %923 = vmatprep.subr.bf16.mxu0 %v810
    %924 = vmatpush1.bf16.msra.mxu0 %v809
    %925 = vmatprep.subr.bf16.mxu0 %v814
    %926 = vmatpush1.bf16.msra.mxu0 %v813
    %927 = vmatprep.subr.bf16.mxu0 %v818
    %928 = vmatpush1.bf16.msra.mxu0 %v817
    %929 = vmatprep.subr.bf16.mxu0 %v822
    %930 = vmatpush1.bf16.msra.mxu0 %v821
    %931 = vmatprep.subr.bf16.mxu0 %v826
    %932 = vmatpush1.bf16.msra.mxu0 %v825
    %933 = vmatprep.subr.bf16.mxu0 %v830
    %934 = vmatpush1.bf16.msra.mxu0 %v829
    %935 = vmatprep.subr.bf16.mxu0 %v834
    %936 = vmatpush1.bf16.msra.mxu0 %v833
    %937 = vmatprep.subr.bf16.mxu0 %v838
    %938 = vmatpush1.bf16.msra.mxu0 %v837
    %939 = vmatprep.subr.bf16.mxu0 %v842
    %940 = vmatpush1.bf16.msra.mxu0 %v841
    %941 = vmatprep.mubr.bf16.mxu0 %v588
    %942 = vmatmul.mubr.bf16.gmra.mrb[0].mxu0 %v477
    %v943 = vpop.f32.mrb[0].mxu0
    %v944 = vadd.f32 %v181, %v943
    %v945 = vpop.f32.mrb[0].mxu0
    %v946 = vadd.f32 %v185, %v945
    %v947 = vpop.f32.mrb[0].mxu0
    %v948 = vpop.f32.mrb[0].mxu0
    %949 = vdwg.mxu0
    %950 = vmatprep.subr.bf16.mxu0 %v784
    %951 = vmatpush1.bf16.msra.mxu0 %v783
    %952 = vmatprep.subr.bf16.mxu0 %v788
    %953 = vmatpush1.bf16.msra.mxu0 %v787
    %954 = vmatprep.subr.bf16.mxu0 %v792
    %955 = vmatpush1.bf16.msra.mxu0 %v791
    %956 = vmatprep.subr.bf16.mxu0 %v796
    %957 = vmatpush1.bf16.msra.mxu0 %v795
    %958 = vmatprep.subr.bf16.mxu0 %v800
    %959 = vmatpush1.bf16.msra.mxu0 %v799
    %960 = vmatprep.subr.bf16.mxu0 %v804
    %961 = vmatpush1.bf16.msra.mxu0 %v803
    %962 = vmatprep.subr.bf16.mxu0 %v808
    %963 = vmatpush1.bf16.msra.mxu0 %v807
    %964 = vmatprep.subr.bf16.mxu0 %v812
    %965 = vmatpush1.bf16.msra.mxu0 %v811
    %966 = vmatprep.subr.bf16.mxu0 %v816
    %967 = vmatpush1.bf16.msra.mxu0 %v815
    %968 = vmatprep.subr.bf16.mxu0 %v820
    %969 = vmatpush1.bf16.msra.mxu0 %v819
    %970 = vmatprep.subr.bf16.mxu0 %v824
    %971 = vmatpush1.bf16.msra.mxu0 %v823
    %972 = vmatprep.subr.bf16.mxu0 %v828
    %973 = vmatpush1.bf16.msra.mxu0 %v827
    %974 = vmatprep.subr.bf16.mxu0 %v832
    %975 = vmatpush1.bf16.msra.mxu0 %v831
    %976 = vmatprep.subr.bf16.mxu0 %v836
    %977 = vmatpush1.bf16.msra.mxu0 %v835
    %978 = vmatprep.subr.bf16.mxu0 %v840
    %979 = vmatpush1.bf16.msra.mxu0 %v839
    %980 = vmatprep.subr.bf16.mxu0 %v844
    %981 = vmatpush1.bf16.msra.mxu0 %v843
    %982 = vmatprep.mubr.bf16.mxu0 %v588
    %983 = vmatmul.mubr.bf16.gmra.mrb[0].mxu0 %v477
    %v984 = vpop.f32.mrb[0].mxu0
    %v985 = vadd.f32 %v189, %v984
    %v986 = vpop.f32.mrb[0].mxu0
    %v987 = vadd.f32 %v193, %v986
    %v988 = vpop.f32.mrb[0].mxu0
    %v989 = vpop.f32.mrb[0].mxu0
    %990 = vdwg.mxu0
    %v991 = vxor.u32 %v944, 2147483648
    %v992 = vxor.u32 %v946, 2147483648
    %v993 = vxor.u32 %v985, 2147483648
    %v994 = vmul.f32 %v991, 1.442695
    %v995 = vpow.pop %v994
    %v996 = vmul.f32 %v992, 1.442695
    %v997 = vpow.pop %v996
    %v998 = vmul.f32 %v993, 1.442695
    %v999 = vpow.pop %v998
    %v1000 = vadd.f32 %v995, 1.0
    %v1001 = vadd.f32 %v997, 1.0
    %v1002 = vadd.f32 %v999, 1.0
    %v1003 = vrcp.pop %v1000
    %v1004 = vmul.f32 1.0, %v1003
    %v1005 = vrcp.pop %v1001
    %v1006 = vmul.f32 1.0, %v1005
    %v1007 = vrcp.pop %v1002
    %v1008 = vmul.f32 1.0, %v1007
    %v1009 = vtanh.pop %v987
    %v1010 = vmul.f32 %v1006, 0.0
    %v1011 = vmul.f32 %v1004, %v1009
    %v1012 = vadd.f32 %v1010, %v1011
    %v1013 = vtanh.pop %v1012
    %v1014 = vmul.f32 %v1008, %v1013
    %s1015 = scalar_lea.vmem [#allocation2], 64
    %v1016 = vld [vmem:[%s1015] sm:$0xff]
    %v1017 = vld [vmem:[%s1015 + $0x8] sm:$0xff]
    %v1018 = vld [vmem:[%s1015 + $0x10] sm:$0xff]
    %v1019 = vld [vmem:[%s1015 + $0x18] sm:$0xff]
    %v1020 = vpack.c.bf16 %v587, %v587
    %1021 = vmatprep.subr.bf16.mxu0 %v299
    %1022 = vmatpush1.bf16.msra.mxu0 %v298
    %1023 = vmatprep.subr.bf16.mxu0 %v303
    %1024 = vmatpush1.bf16.msra.mxu0 %v302
    %1025 = vmatprep.subr.bf16.mxu0 %v307
    %1026 = vmatpush1.bf16.msra.mxu0 %v306
    %1027 = vmatprep.subr.bf16.mxu0 %v311
    %1028 = vmatpush1.bf16.msra.mxu0 %v310
    %1029 = vmatprep.subr.bf16.mxu0 %v315
    %1030 = vmatpush1.bf16.msra.mxu0 %v314
    %1031 = vmatprep.subr.bf16.mxu0 %v319
    %1032 = vmatpush1.bf16.msra.mxu0 %v318
    %1033 = vmatprep.subr.bf16.mxu0 %v323
    %1034 = vmatpush1.bf16.msra.mxu0 %v322
    %1035 = vmatprep.subr.bf16.mxu0 %v327
    %1036 = vmatpush1.bf16.msra.mxu0 %v326
    %1037 = vmatprep.subr.bf16.mxu0 0
    %1038 = vmatpush1.bf16.msra.mxu0 0
    %1039 = vmatprep.subr.bf16.mxu0 0
    %1040 = vmatpush1.bf16.msra.mxu0 0
    %1041 = vmatprep.subr.bf16.mxu0 0
    %1042 = vmatpush1.bf16.msra.mxu0 0
    %1043 = vmatprep.subr.bf16.mxu0 0
    %1044 = vmatpush1.bf16.msra.mxu0 0
    %1045 = vmatprep.subr.bf16.mxu0 0
    %1046 = vmatpush1.bf16.msra.mxu0 0
    %1047 = vmatprep.subr.bf16.mxu0 0
    %1048 = vmatpush1.bf16.msra.mxu0 0
    %1049 = vmatprep.subr.bf16.mxu0 0
    %1050 = vmatpush1.bf16.msra.mxu0 0
    %1051 = vmatprep.subr.bf16.mxu0 0
    %1052 = vmatpush1.bf16.msra.mxu0 0
    %1053 = vmatprep.mubr.bf16.mxu0 0
    %1054 = vmatmul.mubr.bf16.gmra.mrb[0].mxu0 %v1020
    %v1055 = vpop.f32.mrb[0].mxu0
    %v1056 = vadd.f32 0.0, %v1055
    %v1057 = vpop.f32.mrb[0].mxu0
    %v1058 = vadd.f32 0.0, %v1057
    %v1059 = vpop.f32.mrb[0].mxu0
    %v1060 = vpop.f32.mrb[0].mxu0
    %1061 = vdwg.mxu0
    %1062 = vmatprep.subr.bf16.mxu0 %v301
    %1063 = vmatpush1.bf16.msra.mxu0 %v300
    %1064 = vmatprep.subr.bf16.mxu0 %v305
    %1065 = vmatpush1.bf16.msra.mxu0 %v304
    %1066 = vmatprep.subr.bf16.mxu0 %v309
    %1067 = vmatpush1.bf16.msra.mxu0 %v308
    %1068 = vmatprep.subr.bf16.mxu0 %v313
    %1069 = vmatpush1.bf16.msra.mxu0 %v312
    %1070 = vmatprep.subr.bf16.mxu0 %v317
    %1071 = vmatpush1.bf16.msra.mxu0 %v316
    %1072 = vmatprep.subr.bf16.mxu0 %v321
    %1073 = vmatpush1.bf16.msra.mxu0 %v320
    %1074 = vmatprep.subr.bf16.mxu0 %v325
    %1075 = vmatpush1.bf16.msra.mxu0 %v324
    %1076 = vmatprep.subr.bf16.mxu0 %v329
    %1077 = vmatpush1.bf16.msra.mxu0 %v328
    %1078 = vmatprep.subr.bf16.mxu0 0
    %1079 = vmatpush1.bf16.msra.mxu0 0
    %1080 = vmatprep.subr.bf16.mxu0 0
    %1081 = vmatpush1.bf16.msra.mxu0 0
    %1082 = vmatprep.subr.bf16.mxu0 0
    %1083 = vmatpush1.bf16.msra.mxu0 0
    %1084 = vmatprep.subr.bf16.mxu0 0
    %1085 = vmatpush1.bf16.msra.mxu0 0
    %1086 = vmatprep.subr.bf16.mxu0 0
    %1087 = vmatpush1.bf16.msra.mxu0 0
    %1088 = vmatprep.subr.bf16.mxu0 0
    %1089 = vmatpush1.bf16.msra.mxu0 0
    %1090 = vmatprep.subr.bf16.mxu0 0
    %1091 = vmatpush1.bf16.msra.mxu0 0
    %1092 = vmatprep.subr.bf16.mxu0 0
    %1093 = vmatpush1.bf16.msra.mxu0 0
    %1094 = vmatprep.mubr.bf16.mxu0 0
    %1095 = vmatmul.mubr.bf16.gmra.mrb[0].mxu0 %v1020
    %v1096 = vpop.f32.mrb[0].mxu0
    %v1097 = vadd.f32 0.0, %v1096
    %v1098 = vpop.f32.mrb[0].mxu0
    %v1099 = vadd.f32 0.0, %v1098
    %v1100 = vpop.f32.mrb[0].mxu0
    %v1101 = vpop.f32.mrb[0].mxu0
    %1102 = vdwg.mxu0
    %v1103 = vadd.f32 %v1016, %v1056
    %v1104 = vadd.f32 %v1017, %v1058
    %v1105 = vadd.f32 %v1018, %v1097
    %v1106 = vadd.f32 %v1019, %v1099
    %v1107 = vxor.u32 %v1103, 2147483648
    %v1108 = vxor.u32 %v1104, 2147483648
    %v1109 = vxor.u32 %v1105, 2147483648
    %v1110 = vmul.f32 %v1107, 1.442695
    %v1111 = vpow.pop %v1110
    %v1112 = vmul.f32 %v1108, 1.442695
    %v1113 = vpow.pop %v1112
    %v1114 = vmul.f32 %v1109, 1.442695
    %v1115 = vpow.pop %v1114
    %v1116 = vadd.f32 %v1111, 1.0
    %v1117 = vadd.f32 %v1113, 1.0
    %v1118 = vadd.f32 %v1115, 1.0
    %v1119 = vrcp.pop %v1116
    %v1120 = vmul.f32 1.0, %v1119
    %v1121 = vrcp.pop %v1117
    %v1122 = vmul.f32 1.0, %v1121
    %v1123 = vrcp.pop %v1118
    %v1124 = vmul.f32 1.0, %v1123
    %v1125 = vtanh.pop %v1106
    %v1126 = vmul.f32 %v1122, %v585
    %v1127 = vmul.f32 %v1120, %v1125
    %v1128 = vadd.f32 %v1126, %v1127
    %v1129 = vtanh.pop %v1128
    %v1130 = vmul.f32 %v1124, %v1129
    %v1131 = vpack.c.bf16 %v1014, %v1014
    %1132 = vmatprep.subr.bf16.mxu0 %v782
    %1133 = vmatpush1.bf16.msra.mxu0 %v781
    %1134 = vmatprep.subr.bf16.mxu0 %v786
    %1135 = vmatpush1.bf16.msra.mxu0 %v785
    %1136 = vmatprep.subr.bf16.mxu0 %v790
    %1137 = vmatpush1.bf16.msra.mxu0 %v789
    %1138 = vmatprep.subr.bf16.mxu0 %v794
    %1139 = vmatpush1.bf16.msra.mxu0 %v793
    %1140 = vmatprep.subr.bf16.mxu0 %v798
    %1141 = vmatpush1.bf16.msra.mxu0 %v797
    %1142 = vmatprep.subr.bf16.mxu0 %v802
    %1143 = vmatpush1.bf16.msra.mxu0 %v801
    %1144 = vmatprep.subr.bf16.mxu0 %v806
    %1145 = vmatpush1.bf16.msra.mxu0 %v805
    %1146 = vmatprep.subr.bf16.mxu0 %v810
    %1147 = vmatpush1.bf16.msra.mxu0 %v809
    %1148 = vmatprep.subr.bf16.mxu0 %v814
    %1149 = vmatpush1.bf16.msra.mxu0 %v813
    %1150 = vmatprep.subr.bf16.mxu0 %v818
    %1151 = vmatpush1.bf16.msra.mxu0 %v817
    %1152 = vmatprep.subr.bf16.mxu0 %v822
    %1153 = vmatpush1.bf16.msra.mxu0 %v821
    %1154 = vmatprep.subr.bf16.mxu0 %v826
    %1155 = vmatpush1.bf16.msra.mxu0 %v825
    %1156 = vmatprep.subr.bf16.mxu0 %v830
    %1157 = vmatpush1.bf16.msra.mxu0 %v829
    %1158 = vmatprep.subr.bf16.mxu0 %v834
    %1159 = vmatpush1.bf16.msra.mxu0 %v833
    %1160 = vmatprep.subr.bf16.mxu0 %v838
    %1161 = vmatpush1.bf16.msra.mxu0 %v837
    %1162 = vmatprep.subr.bf16.mxu0 %v842
    %1163 = vmatpush1.bf16.msra.mxu0 %v841
    %1164 = vmatprep.mubr.bf16.mxu0 %v1131
    %1165 = vmatmul.mubr.bf16.gmra.mrb[0].mxu0 %v1020
    %v1166 = vpop.f32.mrb[0].mxu0
    %v1167 = vadd.f32 %v181, %v1166
    %v1168 = vpop.f32.mrb[0].mxu0
    %v1169 = vadd.f32 %v185, %v1168
    %v1170 = vpop.f32.mrb[0].mxu0
    %v1171 = vpop.f32.mrb[0].mxu0
    %1172 = vdwg.mxu0
    %1173 = vmatprep.subr.bf16.mxu0 %v784
    %1174 = vmatpush1.bf16.msra.mxu0 %v783
    %1175 = vmatprep.subr.bf16.mxu0 %v788
    %1176 = vmatpush1.bf16.msra.mxu0 %v787
    %1177 = vmatprep.subr.bf16.mxu0 %v792
    %1178 = vmatpush1.bf16.msra.mxu0 %v791
    %1179 = vmatprep.subr.bf16.mxu0 %v796
    %1180 = vmatpush1.bf16.msra.mxu0 %v795
    %1181 = vmatprep.subr.bf16.mxu0 %v800
    %1182 = vmatpush1.bf16.msra.mxu0 %v799
    %1183 = vmatprep.subr.bf16.mxu0 %v804
    %1184 = vmatpush1.bf16.msra.mxu0 %v803
    %1185 = vmatprep.subr.bf16.mxu0 %v808
    %1186 = vmatpush1.bf16.msra.mxu0 %v807
    %1187 = vmatprep.subr.bf16.mxu0 %v812
    %1188 = vmatpush1.bf16.msra.mxu0 %v811
    %1189 = vmatprep.subr.bf16.mxu0 %v816
    %1190 = vmatpush1.bf16.msra.mxu0 %v815
    %1191 = vmatprep.subr.bf16.mxu0 %v820
    %1192 = vmatpush1.bf16.msra.mxu0 %v819
    %1193 = vmatprep.subr.bf16.mxu0 %v824
    %1194 = vmatpush1.bf16.msra.mxu0 %v823
    %1195 = vmatprep.subr.bf16.mxu0 %v828
    %1196 = vmatpush1.bf16.msra.mxu0 %v827
    %1197 = vmatprep.subr.bf16.mxu0 %v832
    %1198 = vmatpush1.bf16.msra.mxu0 %v831
    %1199 = vmatprep.subr.bf16.mxu0 %v836
    %1200 = vmatpush1.bf16.msra.mxu0 %v835
    %1201 = vmatprep.subr.bf16.mxu0 %v840
    %1202 = vmatpush1.bf16.msra.mxu0 %v839
    %1203 = vmatprep.subr.bf16.mxu0 %v844
    %1204 = vmatpush1.bf16.msra.mxu0 %v843
    %1205 = vmatprep.mubr.bf16.mxu0 %v1131
    %1206 = vmatmul.mubr.bf16.gmra.mrb[0].mxu0 %v1020
    %v1207 = vpop.f32.mrb[0].mxu0
    %v1208 = vadd.f32 %v189, %v1207
    %v1209 = vpop.f32.mrb[0].mxu0
    %v1210 = vadd.f32 %v193, %v1209
    %v1211 = vpop.f32.mrb[0].mxu0
    %v1212 = vpop.f32.mrb[0].mxu0
    %1213 = vdwg.mxu0
    %v1214 = vxor.u32 %v1167, 2147483648
    %v1215 = vxor.u32 %v1169, 2147483648
    %v1216 = vxor.u32 %v1208, 2147483648
    %v1217 = vmul.f32 %v1214, 1.442695
    %v1218 = vpow.pop %v1217
    %v1219 = vmul.f32 %v1215, 1.442695
    %v1220 = vpow.pop %v1219
    %v1221 = vmul.f32 %v1216, 1.442695
    %v1222 = vpow.pop %v1221
    %v1223 = vadd.f32 %v1218, 1.0
    %v1224 = vadd.f32 %v1220, 1.0
    %v1225 = vadd.f32 %v1222, 1.0
    %v1226 = vrcp.pop %v1223
    %v1227 = vmul.f32 1.0, %v1226
    %v1228 = vrcp.pop %v1224
    %v1229 = vmul.f32 1.0, %v1228
    %v1230 = vrcp.pop %v1225
    %v1231 = vmul.f32 1.0, %v1230
    %v1232 = vtanh.pop %v1210
    %v1233 = vmul.f32 %v1229, %v1012
    %v1234 = vmul.f32 %v1227, %v1232
    %v1235 = vadd.f32 %v1233, %v1234
    %v1236 = vtanh.pop %v1235
    %v1237 = vmul.f32 %v1231, %v1236
    %s1238 = scalar_lea.vmem [#allocation2], 96
    %v1239 = vld [vmem:[%s1238] sm:$0xff]
    %v1240 = vld [vmem:[%s1238 + $0x8] sm:$0xff]
    %v1241 = vld [vmem:[%s1238 + $0x10] sm:$0xff]
    %v1242 = vld [vmem:[%s1238 + $0x18] sm:$0xff]
    %v1243 = vpack.c.bf16 %v1130, %v1130
    %1244 = vmatprep.subr.bf16.mxu0 %v299
    %1245 = vmatpush1.bf16.msra.mxu0 %v298
    %1246 = vmatprep.subr.bf16.mxu0 %v303
    %1247 = vmatpush1.bf16.msra.mxu0 %v302
    %1248 = vmatprep.subr.bf16.mxu0 %v307
    %1249 = vmatpush1.bf16.msra.mxu0 %v306
    %1250 = vmatprep.subr.bf16.mxu0 %v311
    %1251 = vmatpush1.bf16.msra.mxu0 %v310
    %1252 = vmatprep.subr.bf16.mxu0 %v315
    %1253 = vmatpush1.bf16.msra.mxu0 %v314
    %1254 = vmatprep.subr.bf16.mxu0 %v319
    %1255 = vmatpush1.bf16.msra.mxu0 %v318
    %1256 = vmatprep.subr.bf16.mxu0 %v323
    %1257 = vmatpush1.bf16.msra.mxu0 %v322
    %1258 = vmatprep.subr.bf16.mxu0 %v327
    %1259 = vmatpush1.bf16.msra.mxu0 %v326
    %1260 = vmatprep.subr.bf16.mxu0 0
    %1261 = vmatpush1.bf16.msra.mxu0 0
    %1262 = vmatprep.subr.bf16.mxu0 0
    %1263 = vmatpush1.bf16.msra.mxu0 0
    %1264 = vmatprep.subr.bf16.mxu0 0
    %1265 = vmatpush1.bf16.msra.mxu0 0
    %1266 = vmatprep.subr.bf16.mxu0 0
    %1267 = vmatpush1.bf16.msra.mxu0 0
    %1268 = vmatprep.subr.bf16.mxu0 0
    %1269 = vmatpush1.bf16.msra.mxu0 0
    %1270 = vmatprep.subr.bf16.mxu0 0
    %1271 = vmatpush1.bf16.msra.mxu0 0
    %1272 = vmatprep.subr.bf16.mxu0 0
    %1273 = vmatpush1.bf16.msra.mxu0 0
    %1274 = vmatprep.subr.bf16.mxu0 0
    %1275 = vmatpush1.bf16.msra.mxu0 0
    %1276 = vmatprep.mubr.bf16.mxu0 0
    %1277 = vmatmul.mubr.bf16.gmra.mrb[0].mxu0 %v1243
    %v1278 = vpop.f32.mrb[0].mxu0
    %v1279 = vadd.f32 0.0, %v1278
    %v1280 = vpop.f32.mrb[0].mxu0
    %v1281 = vadd.f32 0.0, %v1280
    %v1282 = vpop.f32.mrb[0].mxu0
    %v1283 = vpop.f32.mrb[0].mxu0
    %1284 = vdwg.mxu0
    %1285 = vmatprep.subr.bf16.mxu0 %v301
    %1286 = vmatpush1.bf16.msra.mxu0 %v300
    %1287 = vmatprep.subr.bf16.mxu0 %v305
    %1288 = vmatpush1.bf16.msra.mxu0 %v304
    %1289 = vmatprep.subr.bf16.mxu0 %v309
    %1290 = vmatpush1.bf16.msra.mxu0 %v308
    %1291 = vmatprep.subr.bf16.mxu0 %v313
    %1292 = vmatpush1.bf16.msra.mxu0 %v312
    %1293 = vmatprep.subr.bf16.mxu0 %v317
    %1294 = vmatpush1.bf16.msra.mxu0 %v316
    %1295 = vmatprep.subr.bf16.mxu0 %v321
    %1296 = vmatpush1.bf16.msra.mxu0 %v320
    %1297 = vmatprep.subr.bf16.mxu0 %v325
    %1298 = vmatpush1.bf16.msra.mxu0 %v324
    %1299 = vmatprep.subr.bf16.mxu0 %v329
    %1300 = vmatpush1.bf16.msra.mxu0 %v328
    %1301 = vmatprep.subr.bf16.mxu0 0
    %1302 = vmatpush1.bf16.msra.mxu0 0
    %1303 = vmatprep.subr.bf16.mxu0 0
    %1304 = vmatpush1.bf16.msra.mxu0 0
    %1305 = vmatprep.subr.bf16.mxu0 0
    %1306 = vmatpush1.bf16.msra.mxu0 0
    %1307 = vmatprep.subr.bf16.mxu0 0
    %1308 = vmatpush1.bf16.msra.mxu0 0
    %1309 = vmatprep.subr.bf16.mxu0 0
    %1310 = vmatpush1.bf16.msra.mxu0 0
    %1311 = vmatprep.subr.bf16.mxu0 0
    %1312 = vmatpush1.bf16.msra.mxu0 0
    %1313 = vmatprep.subr.bf16.mxu0 0
    %1314 = vmatpush1.bf16.msra.mxu0 0
    %1315 = vmatprep.subr.bf16.mxu0 0
    %1316 = vmatpush1.bf16.msra.mxu0 0
    %1317 = vmatprep.mubr.bf16.mxu0 0
    %1318 = vmatmul.mubr.bf16.gmra.mrb[0].mxu0 %v1243
    %v1319 = vpop.f32.mrb[0].mxu0
    %v1320 = vadd.f32 0.0, %v1319
    %v1321 = vpop.f32.mrb[0].mxu0
    %v1322 = vadd.f32 0.0, %v1321
    %v1323 = vpop.f32.mrb[0].mxu0
    %v1324 = vpop.f32.mrb[0].mxu0
    %1325 = vdwg.mxu0
    %v1326 = vadd.f32 %v1239, %v1279
    %v1327 = vadd.f32 %v1240, %v1281
    %v1328 = vadd.f32 %v1241, %v1320
    %v1329 = vadd.f32 %v1242, %v1322
    %v1330 = vxor.u32 %v1326, 2147483648
    %v1331 = vxor.u32 %v1327, 2147483648
    %v1332 = vxor.u32 %v1328, 2147483648
    %v1333 = vmul.f32 %v1330, 1.442695
    %v1334 = vpow.pop %v1333
    %v1335 = vmul.f32 %v1331, 1.442695
    %v1336 = vpow.pop %v1335
    %v1337 = vmul.f32 %v1332, 1.442695
    %v1338 = vpow.pop %v1337
    %v1339 = vadd.f32 %v1334, 1.0
    %v1340 = vadd.f32 %v1336, 1.0
    %v1341 = vadd.f32 %v1338, 1.0
    %v1342 = vrcp.pop %v1339
    %v1343 = vmul.f32 1.0, %v1342
    %v1344 = vrcp.pop %v1340
    %v1345 = vmul.f32 1.0, %v1344
    %v1346 = vrcp.pop %v1341
    %v1347 = vmul.f32 1.0, %v1346
    %v1348 = vtanh.pop %v1329
    %v1349 = vmul.f32 %v1345, %v1128
    %v1350 = vmul.f32 %v1343, %v1348
    %v1351 = vadd.f32 %v1349, %v1350
    %v1352 = vtanh.pop %v1351
    %v1353 = vmul.f32 %v1347, %v1352
    %v1354 = vpack.c.bf16 %v1237, %v1237
    %1355 = vmatprep.subr.bf16.mxu0 %v782
    %1356 = vmatpush1.bf16.msra.mxu0 %v781
    %1357 = vmatprep.subr.bf16.mxu0 %v786
    %1358 = vmatpush1.bf16.msra.mxu0 %v785
    %1359 = vmatprep.subr.bf16.mxu0 %v790
    %1360 = vmatpush1.bf16.msra.mxu0 %v789
    %1361 = vmatprep.subr.bf16.mxu0 %v794
    %1362 = vmatpush1.bf16.msra.mxu0 %v793
    %1363 = vmatprep.subr.bf16.mxu0 %v798
    %1364 = vmatpush1.bf16.msra.mxu0 %v797
    %1365 = vmatprep.subr.bf16.mxu0 %v802
    %1366 = vmatpush1.bf16.msra.mxu0 %v801
    %1367 = vmatprep.subr.bf16.mxu0 %v806
    %1368 = vmatpush1.bf16.msra.mxu0 %v805
    %1369 = vmatprep.subr.bf16.mxu0 %v810
    %1370 = vmatpush1.bf16.msra.mxu0 %v809
    %1371 = vmatprep.subr.bf16.mxu0 %v814
    %1372 = vmatpush1.bf16.msra.mxu0 %v813
    %1373 = vmatprep.subr.bf16.mxu0 %v818
    %1374 = vmatpush1.bf16.msra.mxu0 %v817
    %1375 = vmatprep.subr.bf16.mxu0 %v822
    %1376 = vmatpush1.bf16.msra.mxu0 %v821
    %1377 = vmatprep.subr.bf16.mxu0 %v826
    %1378 = vmatpush1.bf16.msra.mxu0 %v825
    %1379 = vmatprep.subr.bf16.mxu0 %v830
    %1380 = vmatpush1.bf16.msra.mxu0 %v829
    %1381 = vmatprep.subr.bf16.mxu0 %v834
    %1382 = vmatpush1.bf16.msra.mxu0 %v833
    %1383 = vmatprep.subr.bf16.mxu0 %v838
    %1384 = vmatpush1.bf16.msra.mxu0 %v837
    %1385 = vmatprep.subr.bf16.mxu0 %v842
    %1386 = vmatpush1.bf16.msra.mxu0 %v841
    %1387 = vmatprep.mubr.bf16.mxu0 %v1354
    %1388 = vmatmul.mubr.bf16.gmra.mrb[0].mxu0 %v1243
    %v1389 = vpop.f32.mrb[0].mxu0
    %v1390 = vadd.f32 %v181, %v1389
    %v1391 = vpop.f32.mrb[0].mxu0
    %v1392 = vadd.f32 %v185, %v1391
    %v1393 = vpop.f32.mrb[0].mxu0
    %v1394 = vpop.f32.mrb[0].mxu0
    %1395 = vdwg.mxu0
    %1396 = vmatprep.subr.bf16.mxu0 %v784
    %1397 = vmatpush1.bf16.msra.mxu0 %v783
    %1398 = vmatprep.subr.bf16.mxu0 %v788
    %1399 = vmatpush1.bf16.msra.mxu0 %v787
    %1400 = vmatprep.subr.bf16.mxu0 %v792
    %1401 = vmatpush1.bf16.msra.mxu0 %v791
    %1402 = vmatprep.subr.bf16.mxu0 %v796
    %1403 = vmatpush1.bf16.msra.mxu0 %v795
    %1404 = vmatprep.subr.bf16.mxu0 %v800
    %1405 = vmatpush1.bf16.msra.mxu0 %v799
    %1406 = vmatprep.subr.bf16.mxu0 %v804
    %1407 = vmatpush1.bf16.msra.mxu0 %v803
    %1408 = vmatprep.subr.bf16.mxu0 %v808
    %1409 = vmatpush1.bf16.msra.mxu0 %v807
    %1410 = vmatprep.subr.bf16.mxu0 %v812
    %1411 = vmatpush1.bf16.msra.mxu0 %v811
    %1412 = vmatprep.subr.bf16.mxu0 %v816
    %1413 = vmatpush1.bf16.msra.mxu0 %v815
    %1414 = vmatprep.subr.bf16.mxu0 %v820
    %1415 = vmatpush1.bf16.msra.mxu0 %v819
    %1416 = vmatprep.subr.bf16.mxu0 %v824
    %1417 = vmatpush1.bf16.msra.mxu0 %v823
    %1418 = vmatprep.subr.bf16.mxu0 %v828
    %1419 = vmatpush1.bf16.msra.mxu0 %v827
    %1420 = vmatprep.subr.bf16.mxu0 %v832
    %1421 = vmatpush1.bf16.msra.mxu0 %v831
    %1422 = vmatprep.subr.bf16.mxu0 %v836
    %1423 = vmatpush1.bf16.msra.mxu0 %v835
    %1424 = vmatprep.subr.bf16.mxu0 %v840
    %1425 = vmatpush1.bf16.msra.mxu0 %v839
    %1426 = vmatprep.subr.bf16.mxu0 %v844
    %1427 = vmatpush1.bf16.msra.mxu0 %v843
    %1428 = vmatprep.mubr.bf16.mxu0 %v1354
    %1429 = vmatmul.mubr.bf16.gmra.mrb[0].mxu0 %v1243
    %v1430 = vpop.f32.mrb[0].mxu0
    %v1431 = vadd.f32 %v189, %v1430
    %v1432 = vpop.f32.mrb[0].mxu0
    %v1433 = vadd.f32 %v193, %v1432
    %v1434 = vpop.f32.mrb[0].mxu0
    %v1435 = vpop.f32.mrb[0].mxu0
    %1436 = vdwg.mxu0
    %v1437 = vxor.u32 %v1390, 2147483648
    %v1438 = vxor.u32 %v1392, 2147483648
    %v1439 = vxor.u32 %v1431, 2147483648
    %v1440 = vmul.f32 %v1437, 1.442695
    %v1441 = vpow.pop %v1440
    %v1442 = vmul.f32 %v1438, 1.442695
    %v1443 = vpow.pop %v1442
    %v1444 = vmul.f32 %v1439, 1.442695
    %v1445 = vpow.pop %v1444
    %v1446 = vadd.f32 %v1441, 1.0
    %v1447 = vadd.f32 %v1443, 1.0
    %v1448 = vadd.f32 %v1445, 1.0
    %v1449 = vrcp.pop %v1446
    %v1450 = vmul.f32 1.0, %v1449
    %v1451 = vrcp.pop %v1447
    %v1452 = vmul.f32 1.0, %v1451
    %v1453 = vrcp.pop %v1448
    %v1454 = vmul.f32 1.0, %v1453
    %v1455 = vtanh.pop %v1433
    %v1456 = vmul.f32 %v1452, %v1235
    %v1457 = vmul.f32 %v1450, %v1455
    %v1458 = vadd.f32 %v1456, %v1457
    %v1459 = vtanh.pop %v1458
    %v1460 = vmul.f32 %v1454, %v1459
    %s1461 = scalar_lea.vmem [#allocation2], 128
    %v1462 = vld [vmem:[%s1461] sm:$0xff]
    %v1463 = vld [vmem:[%s1461 + $0x8] sm:$0xff]
    %v1464 = vld [vmem:[%s1461 + $0x10] sm:$0xff]
    %v1465 = vld [vmem:[%s1461 + $0x18] sm:$0xff]
    %v1466 = vpack.c.bf16 %v1353, %v1353
    %1467 = vmatprep.subr.bf16.mxu0 %v299
    %1468 = vmatpush1.bf16.msra.mxu0 %v298
    %1469 = vmatprep.subr.bf16.mxu0 %v303
    %1470 = vmatpush1.bf16.msra.mxu0 %v302
    %1471 = vmatprep.subr.bf16.mxu0 %v307
    %1472 = vmatpush1.bf16.msra.mxu0 %v306
    %1473 = vmatprep.subr.bf16.mxu0 %v311
    %1474 = vmatpush1.bf16.msra.mxu0 %v310
    %1475 = vmatprep.subr.bf16.mxu0 %v315
    %1476 = vmatpush1.bf16.msra.mxu0 %v314
    %1477 = vmatprep.subr.bf16.mxu0 %v319
    %1478 = vmatpush1.bf16.msra.mxu0 %v318
    %1479 = vmatprep.subr.bf16.mxu0 %v323
    %1480 = vmatpush1.bf16.msra.mxu0 %v322
    %1481 = vmatprep.subr.bf16.mxu0 %v327
    %1482 = vmatpush1.bf16.msra.mxu0 %v326
    %1483 = vmatprep.subr.bf16.mxu0 0
    %1484 = vmatpush1.bf16.msra.mxu0 0
    %1485 = vmatprep.subr.bf16.mxu0 0
    %1486 = vmatpush1.bf16.msra.mxu0 0
    %1487 = vmatprep.subr.bf16.mxu0 0
    %1488 = vmatpush1.bf16.msra.mxu0 0
    %1489 = vmatprep.subr.bf16.mxu0 0
    %1490 = vmatpush1.bf16.msra.mxu0 0
    %1491 = vmatprep.subr.bf16.mxu0 0
    %1492 = vmatpush1.bf16.msra.mxu0 0
    %1493 = vmatprep.subr.bf16.mxu0 0
    %1494 = vmatpush1.bf16.msra.mxu0 0
    %1495 = vmatprep.subr.bf16.mxu0 0
    %1496 = vmatpush1.bf16.msra.mxu0 0
    %1497 = vmatprep.subr.bf16.mxu0 0
    %1498 = vmatpush1.bf16.msra.mxu0 0
    %1499 = vmatprep.mubr.bf16.mxu0 0
    %1500 = vmatmul.mubr.bf16.gmra.mrb[0].mxu0 %v1466
    %v1501 = vpop.f32.mrb[0].mxu0
    %v1502 = vadd.f32 0.0, %v1501
    %v1503 = vpop.f32.mrb[0].mxu0
    %v1504 = vadd.f32 0.0, %v1503
    %v1505 = vpop.f32.mrb[0].mxu0
    %v1506 = vpop.f32.mrb[0].mxu0
    %1507 = vdwg.mxu0
    %1508 = vmatprep.subr.bf16.mxu0 %v301
    %1509 = vmatpush1.bf16.msra.mxu0 %v300
    %1510 = vmatprep.subr.bf16.mxu0 %v305
    %1511 = vmatpush1.bf16.msra.mxu0 %v304
    %1512 = vmatprep.subr.bf16.mxu0 %v309
    %1513 = vmatpush1.bf16.msra.mxu0 %v308
    %1514 = vmatprep.subr.bf16.mxu0 %v313
    %1515 = vmatpush1.bf16.msra.mxu0 %v312
    %1516 = vmatprep.subr.bf16.mxu0 %v317
    %1517 = vmatpush1.bf16.msra.mxu0 %v316
    %1518 = vmatprep.subr.bf16.mxu0 %v321
    %1519 = vmatpush1.bf16.msra.mxu0 %v320
    %1520 = vmatprep.subr.bf16.mxu0 %v325
    %1521 = vmatpush1.bf16.msra.mxu0 %v324
    %1522 = vmatprep.subr.bf16.mxu0 %v329
    %1523 = vmatpush1.bf16.msra.mxu0 %v328
    %1524 = vmatprep.subr.bf16.mxu0 0
    %1525 = vmatpush1.bf16.msra.mxu0 0
    %1526 = vmatprep.subr.bf16.mxu0 0
    %1527 = vmatpush1.bf16.msra.mxu0 0
    %1528 = vmatprep.subr.bf16.mxu0 0
    %1529 = vmatpush1.bf16.msra.mxu0 0
    %1530 = vmatprep.subr.bf16.mxu0 0
    %1531 = vmatpush1.bf16.msra.mxu0 0
    %1532 = vmatprep.subr.bf16.mxu0 0
    %1533 = vmatpush1.bf16.msra.mxu0 0
    %1534 = vmatprep.subr.bf16.mxu0 0
    %1535 = vmatpush1.bf16.msra.mxu0 0
    %1536 = vmatprep.subr.bf16.mxu0 0
    %1537 = vmatpush1.bf16.msra.mxu0 0
    %1538 = vmatprep.subr.bf16.mxu0 0
    %1539 = vmatpush1.bf16.msra.mxu0 0
    %1540 = vmatprep.mubr.bf16.mxu0 0
    %1541 = vmatmul.mubr.bf16.gmra.mrb[0].mxu0 %v1466
    %v1542 = vpop.f32.mrb[0].mxu0
    %v1543 = vadd.f32 0.0, %v1542
    %v1544 = vpop.f32.mrb[0].mxu0
    %v1545 = vadd.f32 0.0, %v1544
    %v1546 = vpop.f32.mrb[0].mxu0
    %v1547 = vpop.f32.mrb[0].mxu0
    %1548 = vdwg.mxu0
    %v1549 = vadd.f32 %v1462, %v1502
    %v1550 = vadd.f32 %v1463, %v1504
    %v1551 = vadd.f32 %v1464, %v1543
    %v1552 = vadd.f32 %v1465, %v1545
    %v1553 = vxor.u32 %v1549, 2147483648
    %v1554 = vxor.u32 %v1550, 2147483648
    %v1555 = vxor.u32 %v1551, 2147483648
    %v1556 = vmul.f32 %v1553, 1.442695
    %v1557 = vpow.pop %v1556
    %v1558 = vmul.f32 %v1554, 1.442695
    %v1559 = vpow.pop %v1558
    %v1560 = vmul.f32 %v1555, 1.442695
    %v1561 = vpow.pop %v1560
    %v1562 = vadd.f32 %v1557, 1.0
    %v1563 = vadd.f32 %v1559, 1.0
    %v1564 = vadd.f32 %v1561, 1.0
    %v1565 = vrcp.pop %v1562
    %v1566 = vmul.f32 1.0, %v1565
    %v1567 = vrcp.pop %v1563
    %v1568 = vmul.f32 1.0, %v1567
    %v1569 = vrcp.pop %v1564
    %v1570 = vmul.f32 1.0, %v1569
    %v1571 = vtanh.pop %v1552
    %v1572 = vmul.f32 %v1568, %v1351
    %v1573 = vmul.f32 %v1566, %v1571
    %v1574 = vadd.f32 %v1572, %v1573
    %v1575 = vtanh.pop %v1574
    %v1576 = vmul.f32 %v1570, %v1575
    %v1577 = vpack.c.bf16 %v1460, %v1460
    %1578 = vmatprep.subr.bf16.mxu0 %v782
    %1579 = vmatpush1.bf16.msra.mxu0 %v781
    %1580 = vmatprep.subr.bf16.mxu0 %v786
    %1581 = vmatpush1.bf16.msra.mxu0 %v785
    %1582 = vmatprep.subr.bf16.mxu0 %v790
    %1583 = vmatpush1.bf16.msra.mxu0 %v789
    %1584 = vmatprep.subr.bf16.mxu0 %v794
    %1585 = vmatpush1.bf16.msra.mxu0 %v793
    %1586 = vmatprep.subr.bf16.mxu0 %v798
    %1587 = vmatpush1.bf16.msra.mxu0 %v797
    %1588 = vmatprep.subr.bf16.mxu0 %v802
    %1589 = vmatpush1.bf16.msra.mxu0 %v801
    %1590 = vmatprep.subr.bf16.mxu0 %v806
    %1591 = vmatpush1.bf16.msra.mxu0 %v805
    %1592 = vmatprep.subr.bf16.mxu0 %v810
    %1593 = vmatpush1.bf16.msra.mxu0 %v809
    %1594 = vmatprep.subr.bf16.mxu0 %v814
    %1595 = vmatpush1.bf16.msra.mxu0 %v813
    %1596 = vmatprep.subr.bf16.mxu0 %v818
    %1597 = vmatpush1.bf16.msra.mxu0 %v817
    %1598 = vmatprep.subr.bf16.mxu0 %v822
    %1599 = vmatpush1.bf16.msra.mxu0 %v821
    %1600 = vmatprep.subr.bf16.mxu0 %v826
    %1601 = vmatpush1.bf16.msra.mxu0 %v825
    %1602 = vmatprep.subr.bf16.mxu0 %v830
    %1603 = vmatpush1.bf16.msra.mxu0 %v829
    %1604 = vmatprep.subr.bf16.mxu0 %v834
    %1605 = vmatpush1.bf16.msra.mxu0 %v833
    %1606 = vmatprep.subr.bf16.mxu0 %v838
    %1607 = vmatpush1.bf16.msra.mxu0 %v837
    %1608 = vmatprep.subr.bf16.mxu0 %v842
    %1609 = vmatpush1.bf16.msra.mxu0 %v841
    %1610 = vmatprep.mubr.bf16.mxu0 %v1577
    %1611 = vmatmul.mubr.bf16.gmra.mrb[0].mxu0 %v1466
    %v1612 = vpop.f32.mrb[0].mxu0
    %v1613 = vadd.f32 %v181, %v1612
    %v1614 = vpop.f32.mrb[0].mxu0
    %v1615 = vadd.f32 %v185, %v1614
    %v1616 = vpop.f32.mrb[0].mxu0
    %v1617 = vpop.f32.mrb[0].mxu0
    %1618 = vdwg.mxu0
    %1619 = vmatprep.subr.bf16.mxu0 %v784
    %1620 = vmatpush1.bf16.msra.mxu0 %v783
    %1621 = vmatprep.subr.bf16.mxu0 %v788
    %1622 = vmatpush1.bf16.msra.mxu0 %v787
    %1623 = vmatprep.subr.bf16.mxu0 %v792
    %1624 = vmatpush1.bf16.msra.mxu0 %v791
    %1625 = vmatprep.subr.bf16.mxu0 %v796
    %1626 = vmatpush1.bf16.msra.mxu0 %v795
    %1627 = vmatprep.subr.bf16.mxu0 %v800
    %1628 = vmatpush1.bf16.msra.mxu0 %v799
    %1629 = vmatprep.subr.bf16.mxu0 %v804
    %1630 = vmatpush1.bf16.msra.mxu0 %v803
    %1631 = vmatprep.subr.bf16.mxu0 %v808
    %1632 = vmatpush1.bf16.msra.mxu0 %v807
    %1633 = vmatprep.subr.bf16.mxu0 %v812
    %1634 = vmatpush1.bf16.msra.mxu0 %v811
    %1635 = vmatprep.subr.bf16.mxu0 %v816
    %1636 = vmatpush1.bf16.msra.mxu0 %v815
    %1637 = vmatprep.subr.bf16.mxu0 %v820
    %1638 = vmatpush1.bf16.msra.mxu0 %v819
    %1639 = vmatprep.subr.bf16.mxu0 %v824
    %1640 = vmatpush1.bf16.msra.mxu0 %v823
    %1641 = vmatprep.subr.bf16.mxu0 %v828
    %1642 = vmatpush1.bf16.msra.mxu0 %v827
    %1643 = vmatprep.subr.bf16.mxu0 %v832
    %1644 = vmatpush1.bf16.msra.mxu0 %v831
    %1645 = vmatprep.subr.bf16.mxu0 %v836
    %1646 = vmatpush1.bf16.msra.mxu0 %v835
    %1647 = vmatprep.subr.bf16.mxu0 %v840
    %1648 = vmatpush1.bf16.msra.mxu0 %v839
    %1649 = vmatprep.subr.bf16.mxu0 %v844
    %1650 = vmatpush1.bf16.msra.mxu0 %v843
    %1651 = vmatprep.mubr.bf16.mxu0 %v1577
    %1652 = vmatmul.mubr.bf16.gmra.mrb[0].mxu0 %v1466
    %v1653 = vpop.f32.mrb[0].mxu0
    %v1654 = vadd.f32 %v189, %v1653
    %v1655 = vpop.f32.mrb[0].mxu0
    %v1656 = vadd.f32 %v193, %v1655
    %v1657 = vpop.f32.mrb[0].mxu0
    %v1658 = vpop.f32.mrb[0].mxu0
    %1659 = vdwg.mxu0
    %v1660 = vxor.u32 %v1613, 2147483648
    %v1661 = vxor.u32 %v1615, 2147483648
    %v1662 = vxor.u32 %v1654, 2147483648
    %v1663 = vmul.f32 %v1660, 1.442695
    %v1664 = vpow.pop %v1663
    %v1665 = vmul.f32 %v1661, 1.442695
    %v1666 = vpow.pop %v1665
    %v1667 = vmul.f32 %v1662, 1.442695
    %v1668 = vpow.pop %v1667
    %v1669 = vadd.f32 %v1664, 1.0
    %v1670 = vadd.f32 %v1666, 1.0
    %v1671 = vadd.f32 %v1668, 1.0
    %v1672 = vrcp.pop %v1669
    %v1673 = vmul.f32 1.0, %v1672
    %v1674 = vrcp.pop %v1670
    %v1675 = vmul.f32 1.0, %v1674
    %v1676 = vrcp.pop %v1671
    %v1677 = vmul.f32 1.0, %v1676
    %v1678 = vtanh.pop %v1656
    %v1679 = vmul.f32 %v1675, %v1458
    %v1680 = vmul.f32 %v1673, %v1678
    %v1681 = vadd.f32 %v1679, %v1680
    %v1682 = vtanh.pop %v1681
    %v1683 = vmul.f32 %v1677, %v1682
    %s1684 = scalar_lea.vmem [#allocation2], 160
    %v1685 = vld [vmem:[%s1684] sm:$0xff]
    %v1686 = vld [vmem:[%s1684 + $0x8] sm:$0xff]
    %v1687 = vld [vmem:[%s1684 + $0x10] sm:$0xff]
    %v1688 = vld [vmem:[%s1684 + $0x18] sm:$0xff]
    %v1689 = vpack.c.bf16 %v1576, %v1576
    %1690 = vmatprep.subr.bf16.mxu0 %v299
    %1691 = vmatpush1.bf16.msra.mxu0 %v298
    %1692 = vmatprep.subr.bf16.mxu0 %v303
    %1693 = vmatpush1.bf16.msra.mxu0 %v302
    %1694 = vmatprep.subr.bf16.mxu0 %v307
    %1695 = vmatpush1.bf16.msra.mxu0 %v306
    %1696 = vmatprep.subr.bf16.mxu0 %v311
    %1697 = vmatpush1.bf16.msra.mxu0 %v310
    %1698 = vmatprep.subr.bf16.mxu0 %v315
    %1699 = vmatpush1.bf16.msra.mxu0 %v314
    %1700 = vmatprep.subr.bf16.mxu0 %v319
    %1701 = vmatpush1.bf16.msra.mxu0 %v318
    %1702 = vmatprep.subr.bf16.mxu0 %v323
    %1703 = vmatpush1.bf16.msra.mxu0 %v322
    %1704 = vmatprep.subr.bf16.mxu0 %v327
    %1705 = vmatpush1.bf16.msra.mxu0 %v326
    %1706 = vmatprep.subr.bf16.mxu0 0
    %1707 = vmatpush1.bf16.msra.mxu0 0
    %1708 = vmatprep.subr.bf16.mxu0 0
    %1709 = vmatpush1.bf16.msra.mxu0 0
    %1710 = vmatprep.subr.bf16.mxu0 0
    %1711 = vmatpush1.bf16.msra.mxu0 0
    %1712 = vmatprep.subr.bf16.mxu0 0
    %1713 = vmatpush1.bf16.msra.mxu0 0
    %1714 = vmatprep.subr.bf16.mxu0 0
    %1715 = vmatpush1.bf16.msra.mxu0 0
    %1716 = vmatprep.subr.bf16.mxu0 0
    %1717 = vmatpush1.bf16.msra.mxu0 0
    %1718 = vmatprep.subr.bf16.mxu0 0
    %1719 = vmatpush1.bf16.msra.mxu0 0
    %1720 = vmatprep.subr.bf16.mxu0 0
    %1721 = vmatpush1.bf16.msra.mxu0 0
    %1722 = vmatprep.mubr.bf16.mxu0 0
    %1723 = vmatmul.mubr.bf16.gmra.mrb[0].mxu0 %v1689
    %v1724 = vpop.f32.mrb[0].mxu0
    %v1725 = vadd.f32 0.0, %v1724
    %v1726 = vpop.f32.mrb[0].mxu0
    %v1727 = vadd.f32 0.0, %v1726
    %v1728 = vpop.f32.mrb[0].mxu0
    %v1729 = vpop.f32.mrb[0].mxu0
    %1730 = vdwg.mxu0
    %1731 = vmatprep.subr.bf16.mxu0 %v301
    %1732 = vmatpush1.bf16.msra.mxu0 %v300
    %1733 = vmatprep.subr.bf16.mxu0 %v305
    %1734 = vmatpush1.bf16.msra.mxu0 %v304
    %1735 = vmatprep.subr.bf16.mxu0 %v309
    %1736 = vmatpush1.bf16.msra.mxu0 %v308
    %1737 = vmatprep.subr.bf16.mxu0 %v313
    %1738 = vmatpush1.bf16.msra.mxu0 %v312
    %1739 = vmatprep.subr.bf16.mxu0 %v317
    %1740 = vmatpush1.bf16.msra.mxu0 %v316
    %1741 = vmatprep.subr.bf16.mxu0 %v321
    %1742 = vmatpush1.bf16.msra.mxu0 %v320
    %1743 = vmatprep.subr.bf16.mxu0 %v325
    %1744 = vmatpush1.bf16.msra.mxu0 %v324
    %1745 = vmatprep.subr.bf16.mxu0 %v329
    %1746 = vmatpush1.bf16.msra.mxu0 %v328
    %1747 = vmatprep.subr.bf16.mxu0 0
    %1748 = vmatpush1.bf16.msra.mxu0 0
    %1749 = vmatprep.subr.bf16.mxu0 0
    %1750 = vmatpush1.bf16.msra.mxu0 0
    %1751 = vmatprep.subr.bf16.mxu0 0
    %1752 = vmatpush1.bf16.msra.mxu0 0
    %1753 = vmatprep.subr.bf16.mxu0 0
    %1754 = vmatpush1.bf16.msra.mxu0 0
    %1755 = vmatprep.subr.bf16.mxu0 0
    %1756 = vmatpush1.bf16.msra.mxu0 0
    %1757 = vmatprep.subr.bf16.mxu0 0
    %1758 = vmatpush1.bf16.msra.mxu0 0
    %1759 = vmatprep.subr.bf16.mxu0 0
    %1760 = vmatpush1.bf16.msra.mxu0 0
    %1761 = vmatprep.subr.bf16.mxu0 0
    %1762 = vmatpush1.bf16.msra.mxu0 0
    %1763 = vmatprep.mubr.bf16.mxu0 0
    %1764 = vmatmul.mubr.bf16.gmra.mrb[0].mxu0 %v1689
    %v1765 = vpop.f32.mrb[0].mxu0
    %v1766 = vadd.f32 0.0, %v1765
    %v1767 = vpop.f32.mrb[0].mxu0
    %v1768 = vadd.f32 0.0, %v1767
    %v1769 = vpop.f32.mrb[0].mxu0
    %v1770 = vpop.f32.mrb[0].mxu0
    %1771 = vdwg.mxu0
    %v1772 = vadd.f32 %v1685, %v1725
    %v1773 = vadd.f32 %v1686, %v1727
    %v1774 = vadd.f32 %v1687, %v1766
    %v1775 = vadd.f32 %v1688, %v1768
    %v1776 = vxor.u32 %v1772, 2147483648
    %v1777 = vxor.u32 %v1773, 2147483648
    %v1778 = vxor.u32 %v1774, 2147483648
    %v1779 = vmul.f32 %v1776, 1.442695
    %v1780 = vpow.pop %v1779
    %v1781 = vmul.f32 %v1777, 1.442695
    %v1782 = vpow.pop %v1781
    %v1783 = vmul.f32 %v1778, 1.442695
    %v1784 = vpow.pop %v1783
    %v1785 = vadd.f32 %v1780, 1.0
    %v1786 = vadd.f32 %v1782, 1.0
    %v1787 = vadd.f32 %v1784, 1.0
    %v1788 = vrcp.pop %v1785
    %v1789 = vmul.f32 1.0, %v1788
    %v1790 = vrcp.pop %v1786
    %v1791 = vmul.f32 1.0, %v1790
    %v1792 = vrcp.pop %v1787
    %v1793 = vmul.f32 1.0, %v1792
    %v1794 = vtanh.pop %v1775
    %v1795 = vmul.f32 %v1791, %v1574
    %v1796 = vmul.f32 %v1789, %v1794
    %v1797 = vadd.f32 %v1795, %v1796
    %v1798 = vtanh.pop %v1797
    %v1799 = vmul.f32 %v1793, %v1798
    %v1800 = vpack.c.bf16 %v1683, %v1683
    %1801 = vmatprep.subr.bf16.mxu0 %v782
    %1802 = vmatpush1.bf16.msra.mxu0 %v781
    %1803 = vmatprep.subr.bf16.mxu0 %v786
    %1804 = vmatpush1.bf16.msra.mxu0 %v785
    %1805 = vmatprep.subr.bf16.mxu0 %v790
    %1806 = vmatpush1.bf16.msra.mxu0 %v789
    %1807 = vmatprep.subr.bf16.mxu0 %v794
    %1808 = vmatpush1.bf16.msra.mxu0 %v793
    %1809 = vmatprep.subr.bf16.mxu0 %v798
    %1810 = vmatpush1.bf16.msra.mxu0 %v797
    %1811 = vmatprep.subr.bf16.mxu0 %v802
    %1812 = vmatpush1.bf16.msra.mxu0 %v801
    %1813 = vmatprep.subr.bf16.mxu0 %v806
    %1814 = vmatpush1.bf16.msra.mxu0 %v805
    %1815 = vmatprep.subr.bf16.mxu0 %v810
    %1816 = vmatpush1.bf16.msra.mxu0 %v809
    %1817 = vmatprep.subr.bf16.mxu0 %v814
    %1818 = vmatpush1.bf16.msra.mxu0 %v813
    %1819 = vmatprep.subr.bf16.mxu0 %v818
    %1820 = vmatpush1.bf16.msra.mxu0 %v817
    %1821 = vmatprep.subr.bf16.mxu0 %v822
    %1822 = vmatpush1.bf16.msra.mxu0 %v821
    %1823 = vmatprep.subr.bf16.mxu0 %v826
    %1824 = vmatpush1.bf16.msra.mxu0 %v825
    %1825 = vmatprep.subr.bf16.mxu0 %v830
    %1826 = vmatpush1.bf16.msra.mxu0 %v829
    %1827 = vmatprep.subr.bf16.mxu0 %v834
    %1828 = vmatpush1.bf16.msra.mxu0 %v833
    %1829 = vmatprep.subr.bf16.mxu0 %v838
    %1830 = vmatpush1.bf16.msra.mxu0 %v837
    %1831 = vmatprep.subr.bf16.mxu0 %v842
    %1832 = vmatpush1.bf16.msra.mxu0 %v841
    %1833 = vmatprep.mubr.bf16.mxu0 %v1800
    %1834 = vmatmul.mubr.bf16.gmra.mrb[0].mxu0 %v1689
    %v1835 = vpop.f32.mrb[0].mxu0
    %v1836 = vadd.f32 %v181, %v1835
    %v1837 = vpop.f32.mrb[0].mxu0
    %v1838 = vadd.f32 %v185, %v1837
    %v1839 = vpop.f32.mrb[0].mxu0
    %v1840 = vpop.f32.mrb[0].mxu0
    %1841 = vdwg.mxu0
    %1842 = vmatprep.subr.bf16.mxu0 %v784
    %1843 = vmatpush1.bf16.msra.mxu0 %v783
    %1844 = vmatprep.subr.bf16.mxu0 %v788
    %1845 = vmatpush1.bf16.msra.mxu0 %v787
    %1846 = vmatprep.subr.bf16.mxu0 %v792
    %1847 = vmatpush1.bf16.msra.mxu0 %v791
    %1848 = vmatprep.subr.bf16.mxu0 %v796
    %1849 = vmatpush1.bf16.msra.mxu0 %v795
    %1850 = vmatprep.subr.bf16.mxu0 %v800
    %1851 = vmatpush1.bf16.msra.mxu0 %v799
    %1852 = vmatprep.subr.bf16.mxu0 %v804
    %1853 = vmatpush1.bf16.msra.mxu0 %v803
    %1854 = vmatprep.subr.bf16.mxu0 %v808
    %1855 = vmatpush1.bf16.msra.mxu0 %v807
    %1856 = vmatprep.subr.bf16.mxu0 %v812
    %1857 = vmatpush1.bf16.msra.mxu0 %v811
    %1858 = vmatprep.subr.bf16.mxu0 %v816
    %1859 = vmatpush1.bf16.msra.mxu0 %v815
    %1860 = vmatprep.subr.bf16.mxu0 %v820
    %1861 = vmatpush1.bf16.msra.mxu0 %v819
    %1862 = vmatprep.subr.bf16.mxu0 %v824
    %1863 = vmatpush1.bf16.msra.mxu0 %v823
    %1864 = vmatprep.subr.bf16.mxu0 %v828
    %1865 = vmatpush1.bf16.msra.mxu0 %v827
    %1866 = vmatprep.subr.bf16.mxu0 %v832
    %1867 = vmatpush1.bf16.msra.mxu0 %v831
    %1868 = vmatprep.subr.bf16.mxu0 %v836
    %1869 = vmatpush1.bf16.msra.mxu0 %v835
    %1870 = vmatprep.subr.bf16.mxu0 %v840
    %1871 = vmatpush1.bf16.msra.mxu0 %v839
    %1872 = vmatprep.subr.bf16.mxu0 %v844
    %1873 = vmatpush1.bf16.msra.mxu0 %v843
    %1874 = vmatprep.mubr.bf16.mxu0 %v1800
    %1875 = vmatmul.mubr.bf16.gmra.mrb[0].mxu0 %v1689
    %v1876 = vpop.f32.mrb[0].mxu0
    %v1877 = vadd.f32 %v189, %v1876
    %v1878 = vpop.f32.mrb[0].mxu0
    %v1879 = vadd.f32 %v193, %v1878
    %v1880 = vpop.f32.mrb[0].mxu0
    %v1881 = vpop.f32.mrb[0].mxu0
    %1882 = vdwg.mxu0
    %v1883 = vxor.u32 %v1836, 2147483648
    %v1884 = vxor.u32 %v1838, 2147483648
    %v1885 = vxor.u32 %v1877, 2147483648
    %v1886 = vmul.f32 %v1883, 1.442695
    %v1887 = vpow.pop %v1886
    %v1888 = vmul.f32 %v1884, 1.442695
    %v1889 = vpow.pop %v1888
    %v1890 = vmul.f32 %v1885, 1.442695
    %v1891 = vpow.pop %v1890
    %v1892 = vadd.f32 %v1887, 1.0
    %v1893 = vadd.f32 %v1889, 1.0
    %v1894 = vadd.f32 %v1891, 1.0
    %v1895 = vrcp.pop %v1892
    %v1896 = vmul.f32 1.0, %v1895
    %v1897 = vrcp.pop %v1893
    %v1898 = vmul.f32 1.0, %v1897
    %v1899 = vrcp.pop %v1894
    %v1900 = vmul.f32 1.0, %v1899
    %v1901 = vtanh.pop %v1879
    %v1902 = vmul.f32 %v1898, %v1681
    %v1903 = vmul.f32 %v1896, %v1901
    %v1904 = vadd.f32 %v1902, %v1903
    %v1905 = vtanh.pop %v1904
    %v1906 = vmul.f32 %v1900, %v1905
    %s1907 = scalar_lea.vmem [#allocation2], 192
    %v1908 = vld [vmem:[%s1907] sm:$0xff]
    %v1909 = vld [vmem:[%s1907 + $0x8] sm:$0xff]
    %v1910 = vld [vmem:[%s1907 + $0x10] sm:$0xff]
    %v1911 = vld [vmem:[%s1907 + $0x18] sm:$0xff]
    %v1912 = vpack.c.bf16 %v1799, %v1799
    %1913 = vmatprep.subr.bf16.mxu0 %v299
    %1914 = vmatpush1.bf16.msra.mxu0 %v298
    %1915 = vmatprep.subr.bf16.mxu0 %v303
    %1916 = vmatpush1.bf16.msra.mxu0 %v302
    %1917 = vmatprep.subr.bf16.mxu0 %v307
    %1918 = vmatpush1.bf16.msra.mxu0 %v306
    %1919 = vmatprep.subr.bf16.mxu0 %v311
    %1920 = vmatpush1.bf16.msra.mxu0 %v310
    %1921 = vmatprep.subr.bf16.mxu0 %v315
    %1922 = vmatpush1.bf16.msra.mxu0 %v314
    %1923 = vmatprep.subr.bf16.mxu0 %v319
    %1924 = vmatpush1.bf16.msra.mxu0 %v318
    %1925 = vmatprep.subr.bf16.mxu0 %v323
    %1926 = vmatpush1.bf16.msra.mxu0 %v322
    %1927 = vmatprep.subr.bf16.mxu0 %v327
    %1928 = vmatpush1.bf16.msra.mxu0 %v326
    %1929 = vmatprep.subr.bf16.mxu0 0
    %1930 = vmatpush1.bf16.msra.mxu0 0
    %1931 = vmatprep.subr.bf16.mxu0 0
    %1932 = vmatpush1.bf16.msra.mxu0 0
    %1933 = vmatprep.subr.bf16.mxu0 0
    %1934 = vmatpush1.bf16.msra.mxu0 0
    %1935 = vmatprep.subr.bf16.mxu0 0
    %1936 = vmatpush1.bf16.msra.mxu0 0
    %1937 = vmatprep.subr.bf16.mxu0 0
    %1938 = vmatpush1.bf16.msra.mxu0 0
    %1939 = vmatprep.subr.bf16.mxu0 0
    %1940 = vmatpush1.bf16.msra.mxu0 0
    %1941 = vmatprep.subr.bf16.mxu0 0
    %1942 = vmatpush1.bf16.msra.mxu0 0
    %1943 = vmatprep.subr.bf16.mxu0 0
    %1944 = vmatpush1.bf16.msra.mxu0 0
    %1945 = vmatprep.mubr.bf16.mxu0 0
    %1946 = vmatmul.mubr.bf16.gmra.mrb[0].mxu0 %v1912
    %v1947 = vpop.f32.mrb[0].mxu0
    %v1948 = vadd.f32 0.0, %v1947
    %v1949 = vpop.f32.mrb[0].mxu0
    %v1950 = vadd.f32 0.0, %v1949
    %v1951 = vpop.f32.mrb[0].mxu0
    %v1952 = vpop.f32.mrb[0].mxu0
    %1953 = vdwg.mxu0
    %1954 = vmatprep.subr.bf16.mxu0 %v301
    %1955 = vmatpush1.bf16.msra.mxu0 %v300
    %1956 = vmatprep.subr.bf16.mxu0 %v305
    %1957 = vmatpush1.bf16.msra.mxu0 %v304
    %1958 = vmatprep.subr.bf16.mxu0 %v309
    %1959 = vmatpush1.bf16.msra.mxu0 %v308
    %1960 = vmatprep.subr.bf16.mxu0 %v313
    %1961 = vmatpush1.bf16.msra.mxu0 %v312
    %1962 = vmatprep.subr.bf16.mxu0 %v317
    %1963 = vmatpush1.bf16.msra.mxu0 %v316
    %1964 = vmatprep.subr.bf16.mxu0 %v321
    %1965 = vmatpush1.bf16.msra.mxu0 %v320
    %1966 = vmatprep.subr.bf16.mxu0 %v325
    %1967 = vmatpush1.bf16.msra.mxu0 %v324
    %1968 = vmatprep.subr.bf16.mxu0 %v329
    %1969 = vmatpush1.bf16.msra.mxu0 %v328
    %1970 = vmatprep.subr.bf16.mxu0 0
    %1971 = vmatpush1.bf16.msra.mxu0 0
    %1972 = vmatprep.subr.bf16.mxu0 0
    %1973 = vmatpush1.bf16.msra.mxu0 0
    %1974 = vmatprep.subr.bf16.mxu0 0
    %1975 = vmatpush1.bf16.msra.mxu0 0
    %1976 = vmatprep.subr.bf16.mxu0 0
    %1977 = vmatpush1.bf16.msra.mxu0 0
    %1978 = vmatprep.subr.bf16.mxu0 0
    %1979 = vmatpush1.bf16.msra.mxu0 0
    %1980 = vmatprep.subr.bf16.mxu0 0
    %1981 = vmatpush1.bf16.msra.mxu0 0
    %1982 = vmatprep.subr.bf16.mxu0 0
    %1983 = vmatpush1.bf16.msra.mxu0 0
    %1984 = vmatprep.subr.bf16.mxu0 0
    %1985 = vmatpush1.bf16.msra.mxu0 0
    %1986 = vmatprep.mubr.bf16.mxu0 0
    %1987 = vmatmul.mubr.bf16.gmra.mrb[0].mxu0 %v1912
    %v1988 = vpop.f32.mrb[0].mxu0
    %v1989 = vadd.f32 0.0, %v1988
    %v1990 = vpop.f32.mrb[0].mxu0
    %v1991 = vadd.f32 0.0, %v1990
    %v1992 = vpop.f32.mrb[0].mxu0
    %v1993 = vpop.f32.mrb[0].mxu0
    %1994 = vdwg.mxu0
    %v1995 = vadd.f32 %v1908, %v1948
    %v1996 = vadd.f32 %v1909, %v1950
    %v1997 = vadd.f32 %v1910, %v1989
    %v1998 = vadd.f32 %v1911, %v1991
    %v1999 = vxor.u32 %v1995, 2147483648
    %v2000 = vxor.u32 %v1996, 2147483648
    %v2001 = vxor.u32 %v1997, 2147483648
    %v2002 = vmul.f32 %v1999, 1.442695
    %v2003 = vpow.pop %v2002
    %v2004 = vmul.f32 %v2000, 1.442695
    %v2005 = vpow.pop %v2004
    %v2006 = vmul.f32 %v2001, 1.442695
    %v2007 = vpow.pop %v2006
    %v2008 = vadd.f32 %v2003, 1.0
    %v2009 = vadd.f32 %v2005, 1.0
    %v2010 = vadd.f32 %v2007, 1.0
    %v2011 = vrcp.pop %v2008
    %v2012 = vmul.f32 1.0, %v2011
    %v2013 = vrcp.pop %v2009
    %v2014 = vmul.f32 1.0, %v2013
    %v2015 = vrcp.pop %v2010
    %v2016 = vmul.f32 1.0, %v2015
    %v2017 = vtanh.pop %v1998
    %v2018 = vmul.f32 %v2014, %v1797
    %v2019 = vmul.f32 %v2012, %v2017
    %v2020 = vadd.f32 %v2018, %v2019
    %v2021 = vtanh.pop %v2020
    %v2022 = vmul.f32 %v2016, %v2021
    %v2023 = vpack.c.bf16 %v1906, %v1906
    %2024 = vmatprep.subr.bf16.mxu0 %v782
    %2025 = vmatpush1.bf16.msra.mxu0 %v781
    %2026 = vmatprep.subr.bf16.mxu0 %v786
    %2027 = vmatpush1.bf16.msra.mxu0 %v785
    %2028 = vmatprep.subr.bf16.mxu0 %v790
    %2029 = vmatpush1.bf16.msra.mxu0 %v789
    %2030 = vmatprep.subr.bf16.mxu0 %v794
    %2031 = vmatpush1.bf16.msra.mxu0 %v793
    %2032 = vmatprep.subr.bf16.mxu0 %v798
    %2033 = vmatpush1.bf16.msra.mxu0 %v797
    %2034 = vmatprep.subr.bf16.mxu0 %v802
    %2035 = vmatpush1.bf16.msra.mxu0 %v801
    %2036 = vmatprep.subr.bf16.mxu0 %v806
    %2037 = vmatpush1.bf16.msra.mxu0 %v805
    %2038 = vmatprep.subr.bf16.mxu0 %v810
    %2039 = vmatpush1.bf16.msra.mxu0 %v809
    %2040 = vmatprep.subr.bf16.mxu0 %v814
    %2041 = vmatpush1.bf16.msra.mxu0 %v813
    %2042 = vmatprep.subr.bf16.mxu0 %v818
    %2043 = vmatpush1.bf16.msra.mxu0 %v817
    %2044 = vmatprep.subr.bf16.mxu0 %v822
    %2045 = vmatpush1.bf16.msra.mxu0 %v821
    %2046 = vmatprep.subr.bf16.mxu0 %v826
    %2047 = vmatpush1.bf16.msra.mxu0 %v825
    %2048 = vmatprep.subr.bf16.mxu0 %v830
    %2049 = vmatpush1.bf16.msra.mxu0 %v829
    %2050 = vmatprep.subr.bf16.mxu0 %v834
    %2051 = vmatpush1.bf16.msra.mxu0 %v833
    %2052 = vmatprep.subr.bf16.mxu0 %v838
    %2053 = vmatpush1.bf16.msra.mxu0 %v837
    %2054 = vmatprep.subr.bf16.mxu0 %v842
    %2055 = vmatpush1.bf16.msra.mxu0 %v841
    %2056 = vmatprep.mubr.bf16.mxu0 %v2023
    %2057 = vmatmul.mubr.bf16.gmra.mrb[0].mxu0 %v1912
    %v2058 = vpop.f32.mrb[0].mxu0
    %v2059 = vadd.f32 %v181, %v2058
    %v2060 = vpop.f32.mrb[0].mxu0
    %v2061 = vadd.f32 %v185, %v2060
    %v2062 = vpop.f32.mrb[0].mxu0
    %v2063 = vpop.f32.mrb[0].mxu0
    %2064 = vdwg.mxu0
    %2065 = vmatprep.subr.bf16.mxu0 %v784
    %2066 = vmatpush1.bf16.msra.mxu0 %v783
    %2067 = vmatprep.subr.bf16.mxu0 %v788
    %2068 = vmatpush1.bf16.msra.mxu0 %v787
    %2069 = vmatprep.subr.bf16.mxu0 %v792
    %2070 = vmatpush1.bf16.msra.mxu0 %v791
    %2071 = vmatprep.subr.bf16.mxu0 %v796
    %2072 = vmatpush1.bf16.msra.mxu0 %v795
    %2073 = vmatprep.subr.bf16.mxu0 %v800
    %2074 = vmatpush1.bf16.msra.mxu0 %v799
    %2075 = vmatprep.subr.bf16.mxu0 %v804
    %2076 = vmatpush1.bf16.msra.mxu0 %v803
    %2077 = vmatprep.subr.bf16.mxu0 %v808
    %2078 = vmatpush1.bf16.msra.mxu0 %v807
    %2079 = vmatprep.subr.bf16.mxu0 %v812
    %2080 = vmatpush1.bf16.msra.mxu0 %v811
    %2081 = vmatprep.subr.bf16.mxu0 %v816
    %2082 = vmatpush1.bf16.msra.mxu0 %v815
    %2083 = vmatprep.subr.bf16.mxu0 %v820
    %2084 = vmatpush1.bf16.msra.mxu0 %v819
    %2085 = vmatprep.subr.bf16.mxu0 %v824
    %2086 = vmatpush1.bf16.msra.mxu0 %v823
    %2087 = vmatprep.subr.bf16.mxu0 %v828
    %2088 = vmatpush1.bf16.msra.mxu0 %v827
    %2089 = vmatprep.subr.bf16.mxu0 %v832
    %2090 = vmatpush1.bf16.msra.mxu0 %v831
    %2091 = vmatprep.subr.bf16.mxu0 %v836
    %2092 = vmatpush1.bf16.msra.mxu0 %v835
    %2093 = vmatprep.subr.bf16.mxu0 %v840
    %2094 = vmatpush1.bf16.msra.mxu0 %v839
    %2095 = vmatprep.subr.bf16.mxu0 %v844
    %2096 = vmatpush1.bf16.msra.mxu0 %v843
    %2097 = vmatprep.mubr.bf16.mxu0 %v2023
    %2098 = vmatmul.mubr.bf16.gmra.mrb[0].mxu0 %v1912
    %v2099 = vpop.f32.mrb[0].mxu0
    %v2100 = vadd.f32 %v189, %v2099
    %v2101 = vpop.f32.mrb[0].mxu0
    %v2102 = vadd.f32 %v193, %v2101
    %v2103 = vpop.f32.mrb[0].mxu0
    %v2104 = vpop.f32.mrb[0].mxu0
    %2105 = vdwg.mxu0
    %v2106 = vxor.u32 %v2059, 2147483648
    %v2107 = vxor.u32 %v2061, 2147483648
    %v2108 = vxor.u32 %v2100, 2147483648
    %v2109 = vmul.f32 %v2106, 1.442695
    %v2110 = vpow.pop %v2109
    %v2111 = vmul.f32 %v2107, 1.442695
    %v2112 = vpow.pop %v2111
    %v2113 = vmul.f32 %v2108, 1.442695
    %v2114 = vpow.pop %v2113
    %v2115 = vadd.f32 %v2110, 1.0
    %v2116 = vadd.f32 %v2112, 1.0
    %v2117 = vadd.f32 %v2114, 1.0
    %v2118 = vrcp.pop %v2115
    %v2119 = vmul.f32 1.0, %v2118
    %v2120 = vrcp.pop %v2116
    %v2121 = vmul.f32 1.0, %v2120
    %v2122 = vrcp.pop %v2117
    %v2123 = vmul.f32 1.0, %v2122
    %v2124 = vtanh.pop %v2102
    %v2125 = vmul.f32 %v2121, %v1904
    %v2126 = vmul.f32 %v2119, %v2124
    %v2127 = vadd.f32 %v2125, %v2126
    %v2128 = vtanh.pop %v2127
    %v2129 = vmul.f32 %v2123, %v2128
    %s2130 = scalar_lea.vmem [#allocation2], 224
    %v2131 = vld [vmem:[%s2130] sm:$0xff]
    %v2132 = vld [vmem:[%s2130 + $0x8] sm:$0xff]
    %v2133 = vld [vmem:[%s2130 + $0x10] sm:$0xff]
    %v2134 = vld [vmem:[%s2130 + $0x18] sm:$0xff]
    %v2135 = vpack.c.bf16 %v2022, %v2022
    %2136 = vmatprep.subr.bf16.mxu0 %v299
    %2137 = vmatpush1.bf16.msra.mxu0 %v298
    %2138 = vmatprep.subr.bf16.mxu0 %v303
    %2139 = vmatpush1.bf16.msra.mxu0 %v302
    %2140 = vmatprep.subr.bf16.mxu0 %v307
    %2141 = vmatpush1.bf16.msra.mxu0 %v306
    %2142 = vmatprep.subr.bf16.mxu0 %v311
    %2143 = vmatpush1.bf16.msra.mxu0 %v310
    %2144 = vmatprep.subr.bf16.mxu0 %v315
    %2145 = vmatpush1.bf16.msra.mxu0 %v314
    %2146 = vmatprep.subr.bf16.mxu0 %v319
    %2147 = vmatpush1.bf16.msra.mxu0 %v318
    %2148 = vmatprep.subr.bf16.mxu0 %v323
    %2149 = vmatpush1.bf16.msra.mxu0 %v322
    %2150 = vmatprep.subr.bf16.mxu0 %v327
    %2151 = vmatpush1.bf16.msra.mxu0 %v326
    %2152 = vmatprep.subr.bf16.mxu0 0
    %2153 = vmatpush1.bf16.msra.mxu0 0
    %2154 = vmatprep.subr.bf16.mxu0 0
    %2155 = vmatpush1.bf16.msra.mxu0 0
    %2156 = vmatprep.subr.bf16.mxu0 0
    %2157 = vmatpush1.bf16.msra.mxu0 0
    %2158 = vmatprep.subr.bf16.mxu0 0
    %2159 = vmatpush1.bf16.msra.mxu0 0
    %2160 = vmatprep.subr.bf16.mxu0 0
    %2161 = vmatpush1.bf16.msra.mxu0 0
    %2162 = vmatprep.subr.bf16.mxu0 0
    %2163 = vmatpush1.bf16.msra.mxu0 0
    %2164 = vmatprep.subr.bf16.mxu0 0
    %2165 = vmatpush1.bf16.msra.mxu0 0
    %2166 = vmatprep.subr.bf16.mxu0 0
    %2167 = vmatpush1.bf16.msra.mxu0 0
    %2168 = vmatprep.mubr.bf16.mxu0 0
    %2169 = vmatmul.mubr.bf16.gmra.mrb[0].mxu0 %v2135
    %v2170 = vpop.f32.mrb[0].mxu0
    %v2171 = vadd.f32 0.0, %v2170
    %v2172 = vpop.f32.mrb[0].mxu0
    %v2173 = vadd.f32 0.0, %v2172
    %v2174 = vpop.f32.mrb[0].mxu0
    %v2175 = vpop.f32.mrb[0].mxu0
    %2176 = vdwg.mxu0
    %2177 = vmatprep.subr.bf16.mxu0 %v301
    %2178 = vmatpush1.bf16.msra.mxu0 %v300
    %2179 = vmatprep.subr.bf16.mxu0 %v305
    %2180 = vmatpush1.bf16.msra.mxu0 %v304
    %2181 = vmatprep.subr.bf16.mxu0 %v309
    %2182 = vmatpush1.bf16.msra.mxu0 %v308
    %2183 = vmatprep.subr.bf16.mxu0 %v313
    %2184 = vmatpush1.bf16.msra.mxu0 %v312
    %2185 = vmatprep.subr.bf16.mxu0 %v317
    %2186 = vmatpush1.bf16.msra.mxu0 %v316
    %2187 = vmatprep.subr.bf16.mxu0 %v321
    %2188 = vmatpush1.bf16.msra.mxu0 %v320
    %2189 = vmatprep.subr.bf16.mxu0 %v325
    %2190 = vmatpush1.bf16.msra.mxu0 %v324
    %2191 = vmatprep.subr.bf16.mxu0 %v329
    %2192 = vmatpush1.bf16.msra.mxu0 %v328
    %2193 = vmatprep.subr.bf16.mxu0 0
    %2194 = vmatpush1.bf16.msra.mxu0 0
    %2195 = vmatprep.subr.bf16.mxu0 0
    %2196 = vmatpush1.bf16.msra.mxu0 0
    %2197 = vmatprep.subr.bf16.mxu0 0
    %2198 = vmatpush1.bf16.msra.mxu0 0
    %2199 = vmatprep.subr.bf16.mxu0 0
    %2200 = vmatpush1.bf16.msra.mxu0 0
    %2201 = vmatprep.subr.bf16.mxu0 0
    %2202 = vmatpush1.bf16.msra.mxu0 0
    %2203 = vmatprep.subr.bf16.mxu0 0
    %2204 = vmatpush1.bf16.msra.mxu0 0
    %2205 = vmatprep.subr.bf16.mxu0 0
    %2206 = vmatpush1.bf16.msra.mxu0 0
    %2207 = vmatprep.subr.bf16.mxu0 0
    %2208 = vmatpush1.bf16.msra.mxu0 0
    %2209 = vmatprep.mubr.bf16.mxu0 0
    %2210 = vmatmul.mubr.bf16.gmra.mrb[0].mxu0 %v2135
    %v2211 = vpop.f32.mrb[0].mxu0
    %v2212 = vadd.f32 0.0, %v2211
    %v2213 = vpop.f32.mrb[0].mxu0
    %v2214 = vadd.f32 0.0, %v2213
    %v2215 = vpop.f32.mrb[0].mxu0
    %v2216 = vpop.f32.mrb[0].mxu0
    %2217 = vdwg.mxu0
    %v2218 = vadd.f32 %v2131, %v2171
    %v2219 = vadd.f32 %v2132, %v2173
    %v2220 = vadd.f32 %v2133, %v2212
    %v2221 = vadd.f32 %v2134, %v2214
    %v2222 = vxor.u32 %v2218, 2147483648
    %v2223 = vxor.u32 %v2219, 2147483648
    %v2224 = vxor.u32 %v2220, 2147483648
    %v2225 = vmul.f32 %v2222, 1.442695
    %v2226 = vpow.pop %v2225
    %v2227 = vmul.f32 %v2223, 1.442695
    %v2228 = vpow.pop %v2227
    %v2229 = vmul.f32 %v2224, 1.442695
    %v2230 = vpow.pop %v2229
    %v2231 = vadd.f32 %v2226, 1.0
    %v2232 = vadd.f32 %v2228, 1.0
    %v2233 = vadd.f32 %v2230, 1.0
    %v2234 = vrcp.pop %v2231
    %v2235 = vmul.f32 1.0, %v2234
    %v2236 = vrcp.pop %v2232
    %v2237 = vmul.f32 1.0, %v2236
    %v2238 = vrcp.pop %v2233
    %v2239 = vmul.f32 1.0, %v2238
    %v2240 = vtanh.pop %v2221
    %v2241 = vmul.f32 %v2237, %v2020
    %v2242 = vmul.f32 %v2235, %v2240
    %v2243 = vadd.f32 %v2241, %v2242
    %v2244 = vtanh.pop %v2243
    %v2245 = vmul.f32 %v2239, %v2244
    %v2246 = vpack.c.bf16 %v2129, %v2129
    %2247 = vmatprep.subr.bf16.mxu0 %v782
    %2248 = vmatpush1.bf16.msra.mxu0 %v781
    %2249 = vmatprep.subr.bf16.mxu0 %v786
    %2250 = vmatpush1.bf16.msra.mxu0 %v785
    %2251 = vmatprep.subr.bf16.mxu0 %v790
    %2252 = vmatpush1.bf16.msra.mxu0 %v789
    %2253 = vmatprep.subr.bf16.mxu0 %v794
    %2254 = vmatpush1.bf16.msra.mxu0 %v793
    %2255 = vmatprep.subr.bf16.mxu0 %v798
    %2256 = vmatpush1.bf16.msra.mxu0 %v797
    %2257 = vmatprep.subr.bf16.mxu0 %v802
    %2258 = vmatpush1.bf16.msra.mxu0 %v801
    %2259 = vmatprep.subr.bf16.mxu0 %v806
    %2260 = vmatpush1.bf16.msra.mxu0 %v805
    %2261 = vmatprep.subr.bf16.mxu0 %v810
    %2262 = vmatpush1.bf16.msra.mxu0 %v809
    %2263 = vmatprep.subr.bf16.mxu0 %v814
    %2264 = vmatpush1.bf16.msra.mxu0 %v813
    %2265 = vmatprep.subr.bf16.mxu0 %v818
    %2266 = vmatpush1.bf16.msra.mxu0 %v817
    %2267 = vmatprep.subr.bf16.mxu0 %v822
    %2268 = vmatpush1.bf16.msra.mxu0 %v821
    %2269 = vmatprep.subr.bf16.mxu0 %v826
    %2270 = vmatpush1.bf16.msra.mxu0 %v825
    %2271 = vmatprep.subr.bf16.mxu0 %v830
    %2272 = vmatpush1.bf16.msra.mxu0 %v829
    %2273 = vmatprep.subr.bf16.mxu0 %v834
    %2274 = vmatpush1.bf16.msra.mxu0 %v833
    %2275 = vmatprep.subr.bf16.mxu0 %v838
    %2276 = vmatpush1.bf16.msra.mxu0 %v837
    %2277 = vmatprep.subr.bf16.mxu0 %v842
    %2278 = vmatpush1.bf16.msra.mxu0 %v841
    %2279 = vmatprep.mubr.bf16.mxu0 %v2246
    %2280 = vmatmul.mubr.bf16.gmra.mrb[0].mxu0 %v2135
    %v2281 = vpop.f32.mrb[0].mxu0
    %v2282 = vadd.f32 %v181, %v2281
    %v2283 = vpop.f32.mrb[0].mxu0
    %v2284 = vadd.f32 %v185, %v2283
    %v2285 = vpop.f32.mrb[0].mxu0
    %v2286 = vpop.f32.mrb[0].mxu0
    %2287 = vdwg.mxu0
    %2288 = vmatprep.subr.bf16.mxu0 %v784
    %2289 = vmatpush1.bf16.msra.mxu0 %v783
    %2290 = vmatprep.subr.bf16.mxu0 %v788
    %2291 = vmatpush1.bf16.msra.mxu0 %v787
    %2292 = vmatprep.subr.bf16.mxu0 %v792
    %2293 = vmatpush1.bf16.msra.mxu0 %v791
    %2294 = vmatprep.subr.bf16.mxu0 %v796
    %2295 = vmatpush1.bf16.msra.mxu0 %v795
    %2296 = vmatprep.subr.bf16.mxu0 %v800
    %2297 = vmatpush1.bf16.msra.mxu0 %v799
    %2298 = vmatprep.subr.bf16.mxu0 %v804
    %2299 = vmatpush1.bf16.msra.mxu0 %v803
    %2300 = vmatprep.subr.bf16.mxu0 %v808
    %2301 = vmatpush1.bf16.msra.mxu0 %v807
    %2302 = vmatprep.subr.bf16.mxu0 %v812
    %2303 = vmatpush1.bf16.msra.mxu0 %v811
    %2304 = vmatprep.subr.bf16.mxu0 %v816
    %2305 = vmatpush1.bf16.msra.mxu0 %v815
    %2306 = vmatprep.subr.bf16.mxu0 %v820
    %2307 = vmatpush1.bf16.msra.mxu0 %v819
    %2308 = vmatprep.subr.bf16.mxu0 %v824
    %2309 = vmatpush1.bf16.msra.mxu0 %v823
    %2310 = vmatprep.subr.bf16.mxu0 %v828
    %2311 = vmatpush1.bf16.msra.mxu0 %v827
    %2312 = vmatprep.subr.bf16.mxu0 %v832
    %2313 = vmatpush1.bf16.msra.mxu0 %v831
    %2314 = vmatprep.subr.bf16.mxu0 %v836
    %2315 = vmatpush1.bf16.msra.mxu0 %v835
    %2316 = vmatprep.subr.bf16.mxu0 %v840
    %2317 = vmatpush1.bf16.msra.mxu0 %v839
    %2318 = vmatprep.subr.bf16.mxu0 %v844
    %2319 = vmatpush1.bf16.msra.mxu0 %v843
    %2320 = vmatprep.mubr.bf16.mxu0 %v2246
    %2321 = vmatmul.mubr.bf16.gmra.mrb[0].mxu0 %v2135
    %v2322 = vpop.f32.mrb[0].mxu0
    %v2323 = vadd.f32 %v189, %v2322
    %v2324 = vpop.f32.mrb[0].mxu0
    %v2325 = vadd.f32 %v193, %v2324
    %v2326 = vpop.f32.mrb[0].mxu0
    %v2327 = vpop.f32.mrb[0].mxu0
    %2328 = vdwg.mxu0
    %v2329 = vxor.u32 %v2282, 2147483648
    %v2330 = vxor.u32 %v2284, 2147483648
    %v2331 = vxor.u32 %v2323, 2147483648
    %v2332 = vmul.f32 %v2329, 1.442695
    %v2333 = vpow.pop %v2332
    %v2334 = vmul.f32 %v2330, 1.442695
    %v2335 = vpow.pop %v2334
    %v2336 = vmul.f32 %v2331, 1.442695
    %v2337 = vpow.pop %v2336
    %v2338 = vadd.f32 %v2333, 1.0
    %v2339 = vadd.f32 %v2335, 1.0
    %v2340 = vadd.f32 %v2337, 1.0
    %v2341 = vrcp.pop %v2338
    %v2342 = vmul.f32 1.0, %v2341
    %v2343 = vrcp.pop %v2339
    %v2344 = vmul.f32 1.0, %v2343
    %v2345 = vrcp.pop %v2340
    %v2346 = vmul.f32 1.0, %v2345
    %v2347 = vtanh.pop %v2325
    %v2348 = vmul.f32 %v2344, %v2127
    %v2349 = vmul.f32 %v2342, %v2347
    %v2350 = vadd.f32 %v2348, %v2349
    %v2351 = vtanh.pop %v2350
    %v2352 = vmul.f32 %v2346, %v2351
    %v2353 = vpack.c.bf16 %v2245, %v2245
    %v2354 = vpack.c.bf16 %v2352, %v2352
    %2355 = vmatprep.subr.bf16.mxu0 %v782
    %2356 = vmatpush1.bf16.msra.mxu0 %v781
    %2357 = vmatprep.subr.bf16.mxu0 %v786
    %2358 = vmatpush1.bf16.msra.mxu0 %v785
    %2359 = vmatprep.subr.bf16.mxu0 %v790
    %2360 = vmatpush1.bf16.msra.mxu0 %v789
    %2361 = vmatprep.subr.bf16.mxu0 %v794
    %2362 = vmatpush1.bf16.msra.mxu0 %v793
    %2363 = vmatprep.subr.bf16.mxu0 %v798
    %2364 = vmatpush1.bf16.msra.mxu0 %v797
    %2365 = vmatprep.subr.bf16.mxu0 %v802
    %2366 = vmatpush1.bf16.msra.mxu0 %v801
    %2367 = vmatprep.subr.bf16.mxu0 %v806
    %2368 = vmatpush1.bf16.msra.mxu0 %v805
    %2369 = vmatprep.subr.bf16.mxu0 %v810
    %2370 = vmatpush1.bf16.msra.mxu0 %v809
    %2371 = vmatprep.subr.bf16.mxu0 %v814
    %2372 = vmatpush1.bf16.msra.mxu0 %v813
    %2373 = vmatprep.subr.bf16.mxu0 %v818
    %2374 = vmatpush1.bf16.msra.mxu0 %v817
    %2375 = vmatprep.subr.bf16.mxu0 %v822
    %2376 = vmatpush1.bf16.msra.mxu0 %v821
    %2377 = vmatprep.subr.bf16.mxu0 %v826
    %2378 = vmatpush1.bf16.msra.mxu0 %v825
    %2379 = vmatprep.subr.bf16.mxu0 %v830
    %2380 = vmatpush1.bf16.msra.mxu0 %v829
    %2381 = vmatprep.subr.bf16.mxu0 %v834
    %2382 = vmatpush1.bf16.msra.mxu0 %v833
    %2383 = vmatprep.subr.bf16.mxu0 %v838
    %2384 = vmatpush1.bf16.msra.mxu0 %v837
    %2385 = vmatprep.subr.bf16.mxu0 %v842
    %2386 = vmatpush1.bf16.msra.mxu0 %v841
    %2387 = vmatprep.mubr.bf16.mxu0 %v2354
    %2388 = vmatmul.mubr.bf16.gmra.mrb[0].mxu0 %v2353
    %v2389 = vpop.f32.mrb[0].mxu0
    %v2390 = vadd.f32 %v181, %v2389
    %v2391 = vpop.f32.mrb[0].mxu0
    %v2392 = vadd.f32 %v185, %v2391
    %v2393 = vpop.f32.mrb[0].mxu0
    %v2394 = vpop.f32.mrb[0].mxu0
    %2395 = vdwg.mxu0
    %2396 = vmatprep.subr.bf16.mxu0 %v784
    %2397 = vmatpush1.bf16.msra.mxu0 %v783
    %2398 = vmatprep.subr.bf16.mxu0 %v788
    %2399 = vmatpush1.bf16.msra.mxu0 %v787
    %2400 = vmatprep.subr.bf16.mxu0 %v792
    %2401 = vmatpush1.bf16.msra.mxu0 %v791
    %2402 = vmatprep.subr.bf16.mxu0 %v796
    %2403 = vmatpush1.bf16.msra.mxu0 %v795
    %2404 = vmatprep.subr.bf16.mxu0 %v800
    %2405 = vmatpush1.bf16.msra.mxu0 %v799
    %2406 = vmatprep.subr.bf16.mxu0 %v804
    %2407 = vmatpush1.bf16.msra.mxu0 %v803
    %2408 = vmatprep.subr.bf16.mxu0 %v808
    %2409 = vmatpush1.bf16.msra.mxu0 %v807
    %2410 = vmatprep.subr.bf16.mxu0 %v812
    %2411 = vmatpush1.bf16.msra.mxu0 %v811
    %2412 = vmatprep.subr.bf16.mxu0 %v816
    %2413 = vmatpush1.bf16.msra.mxu0 %v815
    %2414 = vmatprep.subr.bf16.mxu0 %v820
    %2415 = vmatpush1.bf16.msra.mxu0 %v819
    %2416 = vmatprep.subr.bf16.mxu0 %v824
    %2417 = vmatpush1.bf16.msra.mxu0 %v823
    %2418 = vmatprep.subr.bf16.mxu0 %v828
    %2419 = vmatpush1.bf16.msra.mxu0 %v827
    %2420 = vmatprep.subr.bf16.mxu0 %v832
    %2421 = vmatpush1.bf16.msra.mxu0 %v831
    %2422 = vmatprep.subr.bf16.mxu0 %v836
    %2423 = vmatpush1.bf16.msra.mxu0 %v835
    %2424 = vmatprep.subr.bf16.mxu0 %v840
    %2425 = vmatpush1.bf16.msra.mxu0 %v839
    %2426 = vmatprep.subr.bf16.mxu0 %v844
    %2427 = vmatpush1.bf16.msra.mxu0 %v843
    %2428 = vmatprep.mubr.bf16.mxu0 %v2354
    %2429 = vmatmul.mubr.bf16.gmra.mrb[0].mxu0 %v2353
    %v2430 = vpop.f32.mrb[0].mxu0
    %v2431 = vadd.f32 %v189, %v2430
    %v2432 = vpop.f32.mrb[0].mxu0
    %v2433 = vadd.f32 %v193, %v2432
    %v2434 = vpop.f32.mrb[0].mxu0
    %v2435 = vpop.f32.mrb[0].mxu0
    %2436 = vdwg.mxu0
    %v2437 = vxor.u32 %v2390, 2147483648
    %v2438 = vxor.u32 %v2392, 2147483648
    %v2439 = vxor.u32 %v2431, 2147483648
    %v2440 = vmul.f32 %v2437, 1.442695
    %v2441 = vpow.pop %v2440
    %v2442 = vmul.f32 %v2438, 1.442695
    %v2443 = vpow.pop %v2442
    %v2444 = vmul.f32 %v2439, 1.442695
    %v2445 = vpow.pop %v2444
    %v2446 = vadd.f32 %v2441, 1.0
    %v2447 = vadd.f32 %v2443, 1.0
    %v2448 = vadd.f32 %v2445, 1.0
    %v2449 = vrcp.pop %v2446
    %v2450 = vmul.f32 1.0, %v2449
    %v2451 = vrcp.pop %v2447
    %v2452 = vmul.f32 1.0, %v2451
    %v2453 = vrcp.pop %v2448
    %v2454 = vmul.f32 1.0, %v2453
    %v2455 = vtanh.pop %v2433
    %v2456 = vmul.f32 %v2452, %v2350
    %v2457 = vmul.f32 %v2450, %v2455
    %v2458 = vadd.f32 %v2456, %v2457
    %v2459 = vtanh.pop %v2458
    %v2460 = vmul.f32 %v2454, %v2459
    %v2461 = vpack.c.bf16 %v2460, %v2460
    %v2462 = vld [vmem:[#allocation8] sm:$0xf]
    %v2463 = vld [vmem:[#allocation8 + $0x4] sm:$0xf]
    %v2464 = vld [vmem:[#allocation8 + $0x8] sm:$0xf]
    %v2465 = vld [vmem:[#allocation8 + $0xc] sm:$0xf]
    %v2466 = vld [vmem:[#allocation8 + $0x10] sm:$0xf]
    %v2467 = vld [vmem:[#allocation8 + $0x14] sm:$0xf]
    %v2468 = vld [vmem:[#allocation8 + $0x18] sm:$0xf]
    %v2469 = vld [vmem:[#allocation8 + $0x1c] sm:$0xf]
    %v2470 = vld [vmem:[#allocation8 + $0x20] sm:$0xf]
    %v2471 = vld [vmem:[#allocation8 + $0x24] sm:$0xf]
    %v2472 = vld [vmem:[#allocation8 + $0x28] sm:$0xf]
    %v2473 = vld [vmem:[#allocation8 + $0x2c] sm:$0xf]
    %v2474 = vld [vmem:[#allocation8 + $0x30] sm:$0xf]
    %v2475 = vld [vmem:[#allocation8 + $0x34] sm:$0xf]
    %v2476 = vld [vmem:[#allocation8 + $0x38] sm:$0xf]
    %v2477 = vld [vmem:[#allocation8 + $0x3c] sm:$0xf]
    %v2478 = vld [vmem:[%s5] sm:$0x1]
    %v2480 = vlaneseq
    %v2481 = vshrl.u32 %v2480, 7
    %v2482 = vsub.s32 0, %v2481
    %v2483 = vrot.slane %v2478, %v2482
    %v2501 = vunpack.c.l.b16 %v2462
    %v2502 = vunpack.c.l.b16 %v2463
    %v2503 = vunpack.c.l.b16 %v2464
    %v2504 = vunpack.c.l.b16 %v2465
    %v2505 = vunpack.c.l.b16 %v2466
    %v2506 = vunpack.c.l.b16 %v2467
    %v2507 = vunpack.c.l.b16 %v2468
    %v2508 = vunpack.c.l.b16 %v2469
    %v2509 = vunpack.c.l.b16 %v2470
    %v2510 = vunpack.c.l.b16 %v2471
    %v2511 = vunpack.c.l.b16 %v2472
    %v2512 = vunpack.c.l.b16 %v2473
    %v2513 = vunpack.c.l.b16 %v2474
    %v2514 = vunpack.c.l.b16 %v2475
    %v2515 = vunpack.c.l.b16 %v2476
    %v2516 = vunpack.c.l.b16 %v2477
    %v2517 = vpack.c.b16 %v2502, %v2501
    %v2518 = vpack.c.b16 %v2504, %v2503
    %v2519 = vpack.c.b16 %v2506, %v2505
    %v2520 = vpack.c.b16 %v2508, %v2507
    %v2521 = vpack.c.b16 %v2510, %v2509
    %v2522 = vpack.c.b16 %v2512, %v2511
    %v2523 = vpack.c.b16 %v2514, %v2513
    %v2524 = vpack.c.b16 %v2516, %v2515
    %2533 = vmatprep.subr.bf16.mxu0 0
    %2534 = vmatpush1.bf16.msra.mxu0 %v2517
    %2535 = vmatprep.subr.bf16.mxu0 0
    %2536 = vmatpush1.bf16.msra.mxu0 %v2518
    %2537 = vmatprep.subr.bf16.mxu0 0
    %2538 = vmatpush1.bf16.msra.mxu0 %v2519
    %2539 = vmatprep.subr.bf16.mxu0 0
    %2540 = vmatpush1.bf16.msra.mxu0 %v2520
    %2541 = vmatprep.subr.bf16.mxu0 0
    %2542 = vmatpush1.bf16.msra.mxu0 %v2521
    %2543 = vmatprep.subr.bf16.mxu0 0
    %2544 = vmatpush1.bf16.msra.mxu0 %v2522
    %2545 = vmatprep.subr.bf16.mxu0 0
    %2546 = vmatpush1.bf16.msra.mxu0 %v2523
    %2547 = vmatprep.subr.bf16.mxu0 0
    %2548 = vmatpush1.bf16.msra.mxu0 %v2524
    %2549 = vmatprep.subr.bf16.mxu0 0
    %2550 = vmatpush1.bf16.msra.mxu0 0
    %2551 = vmatprep.subr.bf16.mxu0 0
    %2552 = vmatpush1.bf16.msra.mxu0 0
    %2553 = vmatprep.subr.bf16.mxu0 0
    %2554 = vmatpush1.bf16.msra.mxu0 0
    %2555 = vmatprep.subr.bf16.mxu0 0
    %2556 = vmatpush1.bf16.msra.mxu0 0
    %2557 = vmatprep.subr.bf16.mxu0 0
    %2558 = vmatpush1.bf16.msra.mxu0 0
    %2559 = vmatprep.subr.bf16.mxu0 0
    %2560 = vmatpush1.bf16.msra.mxu0 0
    %2561 = vmatprep.subr.bf16.mxu0 0
    %2562 = vmatpush1.bf16.msra.mxu0 0
    %2563 = vmatprep.subr.bf16.mxu0 0
    %2564 = vmatpush1.bf16.msra.mxu0 0
    %2565 = vmatprep.mubr.bf16.mxu0 0
    %2566 = vmatmul.mubr.bf16.gmra.mrb[0].mxu0 %v2461
    %v2567 = vpop.f32.mrb[0].mxu0
    %v2568 = vadd.f32 %v2483, %v2567
    %v2569 = vpop.f32.mrb[0].mxu0
    %v2570 = vpop.f32.mrb[0].mxu0
    %v2571 = vpop.f32.mrb[0].mxu0
    %2572 = vdwg.mxu0
    %2573 = vst [vmem:[#allocation10] sm:$0xff] %v2568
    // Predicated region
    $region42: #{tpu_custom_call.1} parent=1 // pred_check
      _
    $region43: #{tpu_custom_call.1} parent=1 // pred_check_branch
      %2575 = sbr.rel (0) target = $region45
    $region44: #{tpu_custom_call.1} parent=1 // pred_region
      %s2577 = ssub.s32 128, 128
      %2578 = vsyncadd [#allocation4], %s2577
      %s2580 = sshll.u32 [#allocation10], 4
      %s2581 = int_to_ptr.vmem [resolvable:$true] %s2580
      %2583 = dma.vmem_to_hbm [thread:$0]  %s2581, 128, %s6, [#allocation4]
    $region45: #{tpu_custom_call.1} parent=1 // pred_fallthru
      _
    // Predicated region
    $region46: #{tpu_custom_call.1} parent=1 // pred_check
      _
    $region47: #{tpu_custom_call.1} parent=1 // pred_check_branch
      %2585 = sbr.rel (0) target = $region49
    $region48: #{tpu_custom_call.1} parent=1 // pred_region
      %2586 = dma.done [#allocation4], 128
    $region49: #{tpu_custom_call.1} parent=1 // pred_fallthru
      _
    %2587 = vsyncpa [#allocation3], 1
    %2588 = vsyncpa [#allocation6], 1
    %2589 = vsyncpa [#allocation9], 1
    %2590 = vsyncpa [#allocation4], 1

</llo_original>
